<compile_context>
chip_gen: v7x
topology: tpu7x:2x2x1
jax: 0.10.0
libtpu: 0.0.40
codegen_flags: <defaults>
</compile_context>

<pallas_src>
import functools
import math

import jax
import jax.numpy as jnp
import numpy as np
from jax.experimental import pallas as pl
from jax.experimental.pallas import tpu as pltpu

LN_EPS = 1e-5                       # nn.LayerNorm default
VMEM_LIMIT = 48 * 1024 * 1024       # v7x-safe (64 MiB physical); raise on v5e/v6e


def _pick_tile(n, preferred):
    """Largest tile <= preferred that divides n (exact grids, no tail blocks)."""
    for t in (preferred, 1024, 512, 256, 128, 64, 32, 16, 8):
        if t <= n and n % t == 0:
            return t
    return n


# --------------------------- Linear (matmul + bias) ---------------------------
def _linear_kernel(x_ref, w_ref, b_ref, o_ref):
    # x cast to bf16 for the MXU; weights arrive pre-cast bf16; f32 accumulate.
    acc = jnp.dot(x_ref[...].astype(jnp.bfloat16), w_ref[...],
                  preferred_element_type=jnp.float32)
    o_ref[...] = (acc + b_ref[...].astype(jnp.float32)).astype(o_ref.dtype)


def linear(x2d, w, b, *, tile_rows=512):
    R, Cin = x2d.shape
    Cout = w.shape[1]
    tr = _pick_tile(R, tile_rows)
    return pl.pallas_call(
        _linear_kernel,
        out_shape=jax.ShapeDtypeStruct((R, Cout), x2d.dtype),
        grid_spec=pltpu.PrefetchScalarGridSpec(
            num_scalar_prefetch=0,
            grid=(R // tr,),
            in_specs=[
                pl.BlockSpec((tr, Cin), lambda i: (i, 0)),
                pl.BlockSpec((Cin, Cout), lambda i: (0, 0)),
                pl.BlockSpec((1, Cout), lambda i: (0, 0)),
            ],
            out_specs=pl.BlockSpec((tr, Cout), lambda i: (i, 0)),
        ),
        compiler_params=pltpu.CompilerParams(
            dimension_semantics=("parallel",), vmem_limit_bytes=VMEM_LIMIT,
        ),
    )(x2d, w, b.reshape(1, Cout))


# ---------- Fused: strided sr conv (in-kernel taps) -> LayerNorm -> kv --------
def _sr_ln_kv_kernel(x_ref, wsr_ref, bsr_ref, g_ref, bt_ref, wkv_ref, bkv_ref,
                     o_ref, *, sr_ratio, dim):
    r, C = sr_ratio, dim
    t_hr, Wr = x_ref.shape[1], x_ref.shape[3]
    rows = t_hr * Wr
    xb = x_ref[0]                                         # (t_hr, r, Wr, r*C) f32
    # strided sr conv == sum over the r*r taps of (rows, C) @ (C, C) matmuls
    acc = jnp.zeros((rows, C), jnp.float32)
    for ky in range(r):
        for kx in range(r):
            tap = xb[:, ky, :, kx * C:(kx + 1) * C].reshape(rows, C)
            w_tap = wsr_ref[(ky * r + kx) * C:(ky * r + kx + 1) * C, :]  # bf16
            acc = acc + jnp.dot(tap.astype(jnp.bfloat16), w_tap,
                                preferred_element_type=jnp.float32)
    xr = acc + bsr_ref[...].astype(jnp.float32)
    # LayerNorm as a register prologue of the kv matmul (no HBM round trip)
    mean = jnp.mean(xr, axis=-1, keepdims=True)
    var = jnp.mean(jnp.square(xr - mean), axis=-1, keepdims=True)
    xn = (xr - mean) * jax.lax.rsqrt(var + LN_EPS)
    xn = xn * g_ref[...].astype(jnp.float32) + bt_ref[...].astype(jnp.float32)
    kv = jnp.dot(xn.astype(jnp.bfloat16), wkv_ref[...],
                 preferred_element_type=jnp.float32)
    o_ref[0] = (kv + bkv_ref[...].astype(jnp.float32)).astype(o_ref.dtype)


def sr_ln_kv(x5, wsr, bsr, gamma, beta, wkv, bkv, *, sr_ratio):
    # x5: (B, Hr, r, Wr, r*C) -- a free (no-transpose) view of x
    B, Hr, r, Wr, rC = x5.shape
    C = rC // r
    C2 = wkv.shape[1]
    t_hr = _pick_tile(Hr, max(1, 256 // max(Wr, 1)))
    rows = t_hr * Wr
    Nk = Hr * Wr
    kernel = functools.partial(_sr_ln_kv_kernel, sr_ratio=sr_ratio, dim=C)
    return pl.pallas_call(
        kernel,
        out_shape=jax.ShapeDtypeStruct((B, Nk, C2), x5.dtype),
        grid_spec=pltpu.PrefetchScalarGridSpec(
            num_scalar_prefetch=0,
            grid=(B, Hr // t_hr),
            in_specs=[
                pl.BlockSpec((1, t_hr, r, Wr, rC), lambda b, h: (b, h, 0, 0, 0)),
                pl.BlockSpec((r * r * C, C), lambda b, h: (0, 0)),
                pl.BlockSpec((1, C), lambda b, h: (0, 0)),
                pl.BlockSpec((1, C), lambda b, h: (0, 0)),
                pl.BlockSpec((1, C), lambda b, h: (0, 0)),
                pl.BlockSpec((C, C2), lambda b, h: (0, 0)),
                pl.BlockSpec((1, C2), lambda b, h: (0, 0)),
            ],
            out_specs=pl.BlockSpec((1, rows, C2), lambda b, h: (b, h, 0)),
        ),
        compiler_params=pltpu.CompilerParams(
            dimension_semantics=("parallel", "parallel"),
            vmem_limit_bytes=VMEM_LIMIT,
        ),
    )(x5, wsr, bsr.reshape(1, C), gamma.reshape(1, C), beta.reshape(1, C),
      wkv, bkv.reshape(1, C2))


# ----------------- Attention core: lane-dense, heads in-kernel ----------------
def _attn_kernel(q_ref, k_ref, v_ref, o_ref, *, num_heads):
    C = q_ref.shape[-1]
    d = C // num_heads
    # scale is pre-folded into wq/bq, so q needs no in-kernel scaling
    q = q_ref[0].astype(jnp.bfloat16)             # (tq, C)
    k = k_ref[0].astype(jnp.bfloat16)             # (Nk, C)
    v = v_ref[0].astype(jnp.bfloat16)             # (Nk, C)
    ctx = []
    for h in range(num_heads):
        sl = slice(h * d, (h + 1) * d)
        qh, kh, vh = q[:, sl], k[:, sl], v[:, sl]
        s = jax.lax.dot_general(qh, kh, (((1,), (1,)), ((), ())),
                                preferred_element_type=jnp.float32)   # (tq, Nk)
        m = jnp.max(s, axis=-1, keepdims=True)
        p = jnp.exp(s - m)                                            # f32 (v5e-safe)
        l = jnp.sum(p, axis=-1, keepdims=True)
        pv = jnp.dot(p.astype(jnp.bfloat16), vh,
                     preferred_element_type=jnp.float32)              # (tq, d)
        ctx.append(pv * pl.reciprocal(l, approx=True))
    # single lane-dense (tq, C) store (no masked per-head stores)
    o_ref[0] = jnp.concatenate(ctx, axis=-1).astype(o_ref.dtype)


def fused_attention(q_src, kv_src, *, C, Nk, num_heads, q_col, k_col, v_col,
                    tile_q=128):
    B, Nq = q_src.shape[0], q_src.shape[1]
    tq = _pick_tile(Nq, tile_q)
    kernel = functools.partial(_attn_kernel, num_heads=num_heads)
    return pl.pallas_call(
        kernel,
        out_shape=jax.ShapeDtypeStruct((B, Nq, C), q_src.dtype),
        grid_spec=pltpu.PrefetchScalarGridSpec(
            num_scalar_prefetch=0,
            grid=(B, Nq // tq),
            in_specs=[
                pl.BlockSpec((1, tq, C), lambda b, i: (b, i, q_col)),
                pl.BlockSpec((1, Nk, C), lambda b, i: (b, 0, k_col)),
                pl.BlockSpec((1, Nk, C), lambda b, i: (b, 0, v_col)),
            ],
            out_specs=pl.BlockSpec((1, tq, C), lambda b, i: (b, i, 0)),
        ),
        compiler_params=pltpu.CompilerParams(
            dimension_semantics=("parallel", "parallel"),
            vmem_limit_bytes=VMEM_LIMIT,
        ),
    )(q_src, kv_src, kv_src)


# ------------------------ Parameter prep (outside jit) ------------------------
def prepare_params(params, *, num_heads, sr_ratio):
    """Fold softmax scale into q weights, pre-cast matmul weights to bf16 and
    hoist the qkv concat out of the jitted forward."""
    C = params["wq"].shape[0]
    scale = (C // num_heads) ** -0.5
    wq = (params["wq"] * scale).astype(jnp.bfloat16)
    bq = params["bq"] * scale
    wkv = params["wkv"].astype(jnp.bfloat16)
    dp = dict(wproj=params["wproj"].astype(jnp.bfloat16), bproj=params["bproj"])
    if sr_ratio > 1:
        dp.update(wq=wq, bq=bq, wkv=wkv, bkv=params["bkv"],
                  wsr=params["wsr"].astype(jnp.bfloat16), bsr=params["bsr"],
                  norm_g=params["norm_g"], norm_b=params["norm_b"])
    else:
        dp.update(wqkv=jnp.concatenate([wq, wkv], axis=1),       # (C, 3C) bf16
                  bqkv=jnp.concatenate([bq, params["bkv"]], axis=0))
    return dp


# ------------------------------ Attention forward -----------------------------
def attention_forward(dp, x, *, H, W, num_heads, sr_ratio):
    B, N, C = x.shape
    if sr_ratio > 1:
        r = sr_ratio
        Hr, Wr = H // r, W // r
        Nk = Hr * Wr
        q3 = linear(x.reshape(B * N, C), dp["wq"], dp["bq"]).reshape(B, N, C)
        x5 = x.reshape(B, Hr, r, Wr, r * C)         # free view, no HBM transpose
        kv3 = sr_ln_kv(x5, dp["wsr"], dp["bsr"], dp["norm_g"], dp["norm_b"],
                       dp["wkv"], dp["bkv"], sr_ratio=r)          # (B, Nk, 2C)
        ctx = fused_attention(q3, kv3, C=C, Nk=Nk, num_heads=num_heads,
                              q_col=0, k_col=0, v_col=1)
    else:
        # fused q+kv projection: one HBM pass, lane-dense 3C-wide output;
        # attention reads q/k/v directly from the (B, N, 3C) slab (no slicing).
        qkv = linear(x.reshape(B * N, C), dp["wqkv"], dp["bqkv"])
        qkv3 = qkv.reshape(B, N, 3 * C)
        ctx = fused_attention(qkv3, qkv3, C=C, Nk=N, num_heads=num_heads,
                              q_col=0, k_col=1, v_col=2)
    # output projection (proj_drop is identity, p=0)
    out = linear(ctx.reshape(B * N, C), dp["wproj"], dp["bproj"])
    return out.reshape(B, N, C)


# ------------------------------- Parameter init --------------------------------
def init_params(key, dim, *, num_heads, sr_ratio, qkv_bias=True):
    ks = jax.random.split(key, 8)

    def tn(k, shape, std=0.02):
        return std * jax.random.truncated_normal(k, -2.0, 2.0, shape, jnp.float32)

    zeros = lambda n: jnp.zeros((n,), jnp.float32)
    p = dict(
        # Linear weights stored as (in, out) == torch weight.T
        wq=tn(ks[0], (dim, dim)),
        bq=(0.02 * jax.random.normal(ks[1], (dim,), jnp.float32)) if qkv_bias else zeros(dim),
        wkv=tn(ks[2], (dim, 2 * dim)),
        bkv=(0.02 * jax.random.normal(ks[3], (2 * dim,), jnp.float32)) if qkv_bias else zeros(2 * dim),
        wproj=tn(ks[4], (dim, dim)),
        bproj=0.02 * jax.random.normal(ks[5], (dim,), jnp.float32),
    )
    if sr_ratio > 1:
        r = sr_ratio
        fan_out = r * r * dim  # torch Conv2d init: normal(0, sqrt(2/fan_out))
        p.update(
            # sr conv weight stored as (r*r*Cin, Cout), tap order (ky, kx, cin)
            wsr=math.sqrt(2.0 / fan_out)
            * jax.random.normal(ks[6], (r * r * dim, dim), jnp.float32),
            bsr=zeros(dim),
            norm_g=jnp.ones((dim,), jnp.float32),
            norm_b=zeros(dim),
        )
    return p


# ----------------------------- Pure-JAX reference ------------------------------
def reference_forward(params, x, H, W, *, num_heads, sr_ratio):
    B, N, C = x.shape
    d = C // num_heads
    scale = d ** -0.5
    q = x @ params["wq"] + params["bq"]
    if sr_ratio > 1:
        r = sr_ratio
        x4 = x.reshape(B, H, W, C)
        w = params["wsr"].reshape(r, r, C, C)  # HWIO
        xr = jax.lax.conv_general_dilated(
            x4, w, window_strides=(r, r), padding="VALID",
            dimension_numbers=("NHWC", "HWIO", "NHWC")) + params["bsr"]
        xr = xr.reshape(B, -1, C)
        m = jnp.mean(xr, -1, keepdims=True)
        v_ = jnp.mean(jnp.square(xr - m), -1, keepdims=True)
        kv_src = (xr - m) * jax.lax.rsqrt(v_ + LN_EPS) * params["norm_g"] + params["norm_b"]
    else:
        kv_src = x
    kv = kv_src @ params["wkv"] + params["bkv"]
    Nk = kv.shape[1]
    qh = q.reshape(B, N, num_heads, d).transpose(0, 2, 1, 3)
    kvh = kv.reshape(B, Nk, 2, num_heads, d).transpose(2, 0, 3, 1, 4)
    k, v = kvh[0], kvh[1]
    attn = jnp.einsum("bhqd,bhkd->bhqk", qh, k) * scale
    attn = jax.nn.softmax(attn, axis=-1)
    ctx = jnp.einsum("bhqk,bhkd->bhqd", attn, v)
    ctx = ctx.transpose(0, 2, 1, 3).reshape(B, N, C)
    return ctx @ params["wproj"] + params["bproj"]


# ------------------------------------- main -------------------------------------
if __name__ == "__main__":
    B, H, W = 2, 16, 16
    dim, num_heads = 128, 4
    N = H * W
    key = jax.random.PRNGKey(0)
    kx, kp = jax.random.split(key)
    x = jax.random.normal(kx, (B, N, dim), jnp.float32)

    # sr_ratio = 2 path (fused in-kernel sr conv + LN + kv)
    sr = 2
    params = init_params(kp, dim, num_heads=num_heads, sr_ratio=sr)
    dp = prepare_params(params, num_heads=num_heads, sr_ratio=sr)
    fwd = jax.jit(functools.partial(attention_forward, H=H, W=W,
                                    num_heads=num_heads, sr_ratio=sr))
    out = jax.block_until_ready(fwd(dp, x))
    ref = reference_forward(params, x, H, W, num_heads=num_heads, sr_ratio=sr)
    np.testing.assert_allclose(np.asarray(out), np.asarray(ref), rtol=2e-2, atol=2e-2)

    # sr_ratio = 1 path (fused q+kv projection, attention reads the qkv slab)
    params1 = init_params(jax.random.PRNGKey(1), dim, num_heads=num_heads, sr_ratio=1)
    dp1 = prepare_params(params1, num_heads=num_heads, sr_ratio=1)
    fwd1 = jax.jit(functools.partial(attention_forward, H=H, W=W,
                                     num_heads=num_heads, sr_ratio=1))
    out1 = jax.block_until_ready(fwd1(dp1, x))
    ref1 = reference_forward(params1, x, H, W, num_heads=num_heads, sr_ratio=1)
    np.testing.assert_allclose(np.asarray(out1), np.asarray(ref1), rtol=2e-2, atol=2e-2)

    print("KERNEL_OK")
</pallas_src>

<mosaic_0001>
module attributes {stable_mosaic.version = 11 : i64} {
  func.func @_sr_ln_kv_kernel(%arg0: i32, %arg1: i32, %arg2: memref<1x8x2x8x256xf32, #tpu.memory_space<vmem>>, %arg3: memref<512x128xbf16, #tpu.memory_space<vmem>>, %arg4: memref<1x128xf32, #tpu.memory_space<vmem>>, %arg5: memref<1x128xf32, #tpu.memory_space<vmem>>, %arg6: memref<1x128xf32, #tpu.memory_space<vmem>>, %arg7: memref<128x256xbf16, #tpu.memory_space<vmem>>, %arg8: memref<1x256xf32, #tpu.memory_space<vmem>>, %arg9: memref<1x64x256xf32, #tpu.memory_space<vmem>>) attributes {dimension_semantics = [#tpu.dimension_semantics<parallel>, #tpu.dimension_semantics<parallel>], iteration_bounds = array<i64: 2, 1>, scalar_prefetch = 0 : i64, scratch_operands = 0 : i64, tpu.core_type = #tpu.core_type<tc>, window_params = [{transform_indices = @transform_0, window_bounds = array<i64: 1, 8, 2, 8, 256>}, {pipeline_mode = #tpu.pipeline_mode<synchronous>, transform_indices = @transform_1, window_bounds = array<i64: 512, 128>}, {pipeline_mode = #tpu.pipeline_mode<synchronous>, transform_indices = @transform_2, window_bounds = array<i64: 1, 128>}, {pipeline_mode = #tpu.pipeline_mode<synchronous>, transform_indices = @transform_3, window_bounds = array<i64: 1, 128>}, {pipeline_mode = #tpu.pipeline_mode<synchronous>, transform_indices = @transform_4, window_bounds = array<i64: 1, 128>}, {pipeline_mode = #tpu.pipeline_mode<synchronous>, transform_indices = @transform_5, window_bounds = array<i64: 128, 256>}, {pipeline_mode = #tpu.pipeline_mode<synchronous>, transform_indices = @transform_6, window_bounds = array<i64: 1, 256>}, {transform_indices = @transform_7, window_bounds = array<i64: 1, 64, 256>}]} {
    %c0 = arith.constant 0 : index
    %c0_0 = arith.constant 0 : index
    %c0_1 = arith.constant 0 : index
    %c0_2 = arith.constant 0 : index
    %c0_3 = arith.constant 0 : index
    %0 = vector.load %arg2[%c0, %c0_0, %c0_1, %c0_2, %c0_3] : memref<1x8x2x8x256xf32, #tpu.memory_space<vmem>>, vector<1x8x2x8x256xf32>
    %1 = vector.shape_cast %0 : vector<1x8x2x8x256xf32> to vector<8x2x8x256xf32>
    %cst = arith.constant 0.000000e+00 : f32
    %2 = vector.broadcast %cst : f32 to vector<64x128xf32>
    %3 = vector.extract_strided_slice %1 {offsets = [0, 0, 0, 0], sizes = [8, 1, 8, 128], strides = [1, 1, 1, 1]} : vector<8x2x8x256xf32> to vector<8x1x8x128xf32>
    %4 = vector.shape_cast %3 : vector<8x1x8x128xf32> to vector<8x8x128xf32>
    %5 = vector.shape_cast %4 : vector<8x8x128xf32> to vector<64x128xf32>
    %c0_4 = arith.constant 0 : index
    %c0_5 = arith.constant 0 : index
    %6 = vector.load %arg3[%c0_4, %c0_5] : memref<512x128xbf16, #tpu.memory_space<vmem>>, vector<128x128xbf16>
    %7 = arith.truncf %5 : vector<64x128xf32> to vector<64x128xbf16>
    %cst_6 = arith.constant dense<0.000000e+00> : vector<64x128xf32>
    %8 = tpu.matmul %7, %6, %cst_6 {dimension_numbers = #tpu.dot_dimension_numbers<[1], [0], [0], [1], [0, 0, 1, 1], [], []>} : vector<64x128xbf16>, vector<128x128xbf16>, vector<64x128xf32> -> vector<64x128xf32>
    %9 = arith.addf %2, %8 : vector<64x128xf32>
    %10 = vector.extract_strided_slice %1 {offsets = [0, 0, 0, 128], sizes = [8, 1, 8, 128], strides = [1, 1, 1, 1]} : vector<8x2x8x256xf32> to vector<8x1x8x128xf32>
    %11 = vector.shape_cast %10 : vector<8x1x8x128xf32> to vector<8x8x128xf32>
    %12 = vector.shape_cast %11 : vector<8x8x128xf32> to vector<64x128xf32>
    %c128 = arith.constant 128 : index
    %c0_7 = arith.constant 0 : index
    %13 = vector.load %arg3[%c128, %c0_7] : memref<512x128xbf16, #tpu.memory_space<vmem>>, vector<128x128xbf16>
    %14 = arith.truncf %12 : vector<64x128xf32> to vector<64x128xbf16>
    %cst_8 = arith.constant dense<0.000000e+00> : vector<64x128xf32>
    %15 = tpu.matmul %14, %13, %cst_8 {dimension_numbers = #tpu.dot_dimension_numbers<[1], [0], [0], [1], [0, 0, 1, 1], [], []>} : vector<64x128xbf16>, vector<128x128xbf16>, vector<64x128xf32> -> vector<64x128xf32>
    %16 = arith.addf %9, %15 : vector<64x128xf32>
    %17 = vector.extract_strided_slice %1 {offsets = [0, 1, 0, 0], sizes = [8, 1, 8, 128], strides = [1, 1, 1, 1]} : vector<8x2x8x256xf32> to vector<8x1x8x128xf32>
    %18 = vector.shape_cast %17 : vector<8x1x8x128xf32> to vector<8x8x128xf32>
    %19 = vector.shape_cast %18 : vector<8x8x128xf32> to vector<64x128xf32>
    %c256 = arith.constant 256 : index
    %c0_9 = arith.constant 0 : index
    %20 = vector.load %arg3[%c256, %c0_9] : memref<512x128xbf16, #tpu.memory_space<vmem>>, vector<128x128xbf16>
    %21 = arith.truncf %19 : vector<64x128xf32> to vector<64x128xbf16>
    %cst_10 = arith.constant dense<0.000000e+00> : vector<64x128xf32>
    %22 = tpu.matmul %21, %20, %cst_10 {dimension_numbers = #tpu.dot_dimension_numbers<[1], [0], [0], [1], [0, 0, 1, 1], [], []>} : vector<64x128xbf16>, vector<128x128xbf16>, vector<64x128xf32> -> vector<64x128xf32>
    %23 = arith.addf %16, %22 : vector<64x128xf32>
    %24 = vector.extract_strided_slice %1 {offsets = [0, 1, 0, 128], sizes = [8, 1, 8, 128], strides = [1, 1, 1, 1]} : vector<8x2x8x256xf32> to vector<8x1x8x128xf32>
    %25 = vector.shape_cast %24 : vector<8x1x8x128xf32> to vector<8x8x128xf32>
    %26 = vector.shape_cast %25 : vector<8x8x128xf32> to vector<64x128xf32>
    %c384 = arith.constant 384 : index
    %c0_11 = arith.constant 0 : index
    %27 = vector.load %arg3[%c384, %c0_11] : memref<512x128xbf16, #tpu.memory_space<vmem>>, vector<128x128xbf16>
    %28 = arith.truncf %26 : vector<64x128xf32> to vector<64x128xbf16>
    %cst_12 = arith.constant dense<0.000000e+00> : vector<64x128xf32>
    %29 = tpu.matmul %28, %27, %cst_12 {dimension_numbers = #tpu.dot_dimension_numbers<[1], [0], [0], [1], [0, 0, 1, 1], [], []>} : vector<64x128xbf16>, vector<128x128xbf16>, vector<64x128xf32> -> vector<64x128xf32>
    %30 = arith.addf %23, %29 : vector<64x128xf32>
    %c0_13 = arith.constant 0 : index
    %c0_14 = arith.constant 0 : index
    %31 = vector.load %arg4[%c0_13, %c0_14] : memref<1x128xf32, #tpu.memory_space<vmem>>, vector<1x128xf32>
    %32 = vector.broadcast %31 : vector<1x128xf32> to vector<64x128xf32>
    %33 = arith.addf %30, %32 : vector<64x128xf32>
    %cst_15 = arith.constant dense<0.000000e+00> : vector<64xf32>
    %34 = vector.multi_reduction <add>, %33, %cst_15 [1] : vector<64x128xf32> to vector<64xf32>
    %35 = vector.shape_cast %34 : vector<64xf32> to vector<64x1xf32>
    %cst_16 = arith.constant 1.280000e+02 : f32
    %36 = vector.broadcast %cst_16 : f32 to vector<64x1xf32>
    %37 = arith.divf %35, %36 : vector<64x1xf32>
    %38 = vector.broadcast %37 : vector<64x1xf32> to vector<64x128xf32>
    %39 = arith.subf %33, %38 : vector<64x128xf32>
    %40 = arith.mulf %39, %39 : vector<64x128xf32>
    %cst_17 = arith.constant dense<0.000000e+00> : vector<64xf32>
    %41 = vector.multi_reduction <add>, %40, %cst_17 [1] : vector<64x128xf32> to vector<64xf32>
    %42 = vector.shape_cast %41 : vector<64xf32> to vector<64x1xf32>
    %cst_18 = arith.constant 1.280000e+02 : f32
    %43 = vector.broadcast %cst_18 : f32 to vector<64x1xf32>
    %44 = arith.divf %42, %43 : vector<64x1xf32>
    %45 = vector.broadcast %37 : vector<64x1xf32> to vector<64x128xf32>
    %46 = arith.subf %33, %45 : vector<64x128xf32>
    %cst_19 = arith.constant 9.99999974E-6 : f32
    %47 = vector.broadcast %cst_19 : f32 to vector<64x1xf32>
    %48 = arith.addf %44, %47 : vector<64x1xf32>
    %49 = math.rsqrt %48 : vector<64x1xf32>
    %50 = vector.broadcast %49 : vector<64x1xf32> to vector<64x128xf32>
    %51 = arith.mulf %46, %50 : vector<64x128xf32>
    %c0_20 = arith.constant 0 : index
    %c0_21 = arith.constant 0 : index
    %52 = vector.load %arg5[%c0_20, %c0_21] : memref<1x128xf32, #tpu.memory_space<vmem>>, vector<1x128xf32>
    %53 = vector.broadcast %52 : vector<1x128xf32> to vector<64x128xf32>
    %54 = arith.mulf %51, %53 : vector<64x128xf32>
    %c0_22 = arith.constant 0 : index
    %c0_23 = arith.constant 0 : index
    %55 = vector.load %arg6[%c0_22, %c0_23] : memref<1x128xf32, #tpu.memory_space<vmem>>, vector<1x128xf32>
    %56 = vector.broadcast %55 : vector<1x128xf32> to vector<64x128xf32>
    %57 = arith.addf %54, %56 : vector<64x128xf32>
    %58 = arith.truncf %57 : vector<64x128xf32> to vector<64x128xbf16>
    %c0_24 = arith.constant 0 : index
    %c0_25 = arith.constant 0 : index
    %59 = vector.load %arg7[%c0_24, %c0_25] : memref<128x256xbf16, #tpu.memory_space<vmem>>, vector<128x256xbf16>
    %cst_26 = arith.constant dense<0.000000e+00> : vector<64x256xf32>
    %60 = tpu.matmul %58, %59, %cst_26 {dimension_numbers = #tpu.dot_dimension_numbers<[1], [0], [0], [1], [0, 0, 1, 1], [], []>} : vector<64x128xbf16>, vector<128x256xbf16>, vector<64x256xf32> -> vector<64x256xf32>
    %c0_27 = arith.constant 0 : index
    %c0_28 = arith.constant 0 : index
    %61 = vector.load %arg8[%c0_27, %c0_28] : memref<1x256xf32, #tpu.memory_space<vmem>>, vector<1x256xf32>
    %62 = vector.broadcast %61 : vector<1x256xf32> to vector<64x256xf32>
    %63 = arith.addf %60, %62 : vector<64x256xf32>
    %c0_29 = arith.constant 0 : index
    %c0_30 = arith.constant 0 : index
    %c0_31 = arith.constant 0 : index
    %64 = vector.load %arg9[%c0_29, %c0_30, %c0_31] : memref<1x64x256xf32, #tpu.memory_space<vmem>>, vector<1x64x256xf32>
    %65 = vector.shape_cast %64 : vector<1x64x256xf32> to vector<64x256xf32>
    %66 = vector.shape_cast %63 : vector<64x256xf32> to vector<1x64x256xf32>
    tpu.vector_store %arg9[%c0_29, %c0_30, %c0_31], %66 {strides = array<i32>} : memref<1x64x256xf32, #tpu.memory_space<vmem>>, vector<1x64x256xf32>,
    return
  }
  func.func @transform_0(%arg0: i32, %arg1: i32) -> (i32, i32, i32, i32, i32) {
    %c0_i32 = arith.constant 0 : i32
    %c0_i32_0 = arith.constant 0 : i32
    %c0_i32_1 = arith.constant 0 : i32
    %c0_i32_2 = arith.constant 0 : i32
    return %arg0, %arg1, %c0_i32, %c0_i32_0, %c0_i32_1 : i32, i32, i32, i32, i32
  }
  func.func @transform_1(%arg0: i32, %arg1: i32) -> (i32, i32) {
    %c0_i32 = arith.constant 0 : i32
    %c0_i32_0 = arith.constant 0 : i32
    %c0_i32_1 = arith.constant 0 : i32
    return %c0_i32, %c0_i32_0 : i32, i32
  }
  func.func @transform_2(%arg0: i32, %arg1: i32) -> (i32, i32) {
    %c0_i32 = arith.constant 0 : i32
    %c0_i32_0 = arith.constant 0 : i32
    %c0_i32_1 = arith.constant 0 : i32
    return %c0_i32, %c0_i32_0 : i32, i32
  }
  func.func @transform_3(%arg0: i32, %arg1: i32) -> (i32, i32) {
    %c0_i32 = arith.constant 0 : i32
    %c0_i32_0 = arith.constant 0 : i32
    %c0_i32_1 = arith.constant 0 : i32
    return %c0_i32, %c0_i32_0 : i32, i32
  }
  func.func @transform_4(%arg0: i32, %arg1: i32) -> (i32, i32) {
    %c0_i32 = arith.constant 0 : i32
    %c0_i32_0 = arith.constant 0 : i32
    %c0_i32_1 = arith.constant 0 : i32
    return %c0_i32, %c0_i32_0 : i32, i32
  }
  func.func @transform_5(%arg0: i32, %arg1: i32) -> (i32, i32) {
    %c0_i32 = arith.constant 0 : i32
    %c0_i32_0 = arith.constant 0 : i32
    %c0_i32_1 = arith.constant 0 : i32
    return %c0_i32, %c0_i32_0 : i32, i32
  }
  func.func @transform_6(%arg0: i32, %arg1: i32) -> (i32, i32) {
    %c0_i32 = arith.constant 0 : i32
    %c0_i32_0 = arith.constant 0 : i32
    %c0_i32_1 = arith.constant 0 : i32
    return %c0_i32, %c0_i32_0 : i32, i32
  }
  func.func @transform_7(%arg0: i32, %arg1: i32) -> (i32, i32, i32) {
    %c0_i32 = arith.constant 0 : i32
    %c0_i32_0 = arith.constant 0 : i32
    return %arg0, %arg1, %c0_i32 : i32, i32, i32
  }
}

module attributes {stable_mosaic.version = 11 : i64} {
  func.func @_linear_kernel(%arg0: i32, %arg1: memref<512x128xf32, #tpu.memory_space<vmem>>, %arg2: memref<128x128xbf16, #tpu.memory_space<vmem>>, %arg3: memref<1x128xf32, #tpu.memory_space<vmem>>, %arg4: memref<512x128xf32, #tpu.memory_space<vmem>>) attributes {dimension_semantics = [#tpu.dimension_semantics<parallel>], iteration_bounds = array<i64: 1>, scalar_prefetch = 0 : i64, scratch_operands = 0 : i64, tpu.core_type = #tpu.core_type<tc>, window_params = [{transform_indices = @transform_0, window_bounds = array<i64: 512, 128>}, {pipeline_mode = #tpu.pipeline_mode<synchronous>, transform_indices = @transform_1, window_bounds = array<i64: 128, 128>}, {pipeline_mode = #tpu.pipeline_mode<synchronous>, transform_indices = @transform_2, window_bounds = array<i64: 1, 128>}, {transform_indices = @transform_3, window_bounds = array<i64: 512, 128>}]} {
    %c0 = arith.constant 0 : index
    %c0_0 = arith.constant 0 : index
    %0 = vector.load %arg1[%c0, %c0_0] : memref<512x128xf32, #tpu.memory_space<vmem>>, vector<512x128xf32>
    %1 = arith.truncf %0 : vector<512x128xf32> to vector<512x128xbf16>
    %c0_1 = arith.constant 0 : index
    %c0_2 = arith.constant 0 : index
    %2 = vector.load %arg2[%c0_1, %c0_2] : memref<128x128xbf16, #tpu.memory_space<vmem>>, vector<128x128xbf16>
    %cst = arith.constant dense<0.000000e+00> : vector<512x128xf32>
    %3 = tpu.matmul %1, %2, %cst {dimension_numbers = #tpu.dot_dimension_numbers<[1], [0], [0], [1], [0, 0, 1, 1], [], []>} : vector<512x128xbf16>, vector<128x128xbf16>, vector<512x128xf32> -> vector<512x128xf32>
    %c0_3 = arith.constant 0 : index
    %c0_4 = arith.constant 0 : index
    %4 = vector.load %arg3[%c0_3, %c0_4] : memref<1x128xf32, #tpu.memory_space<vmem>>, vector<1x128xf32>
    %5 = vector.broadcast %4 : vector<1x128xf32> to vector<512x128xf32>
    %6 = arith.addf %3, %5 : vector<512x128xf32>
    %c0_5 = arith.constant 0 : index
    %c0_6 = arith.constant 0 : index
    %7 = vector.load %arg4[%c0_5, %c0_6] : memref<512x128xf32, #tpu.memory_space<vmem>>, vector<512x128xf32>
    tpu.vector_store %arg4[%c0_5, %c0_6], %6 {strides = array<i32>} : memref<512x128xf32, #tpu.memory_space<vmem>>, vector<512x128xf32>,
    return
  }
  func.func @transform_0(%arg0: i32) -> (i32, i32) {
    %c0_i32 = arith.constant 0 : i32
    %c0_i32_0 = arith.constant 0 : i32
    return %arg0, %c0_i32 : i32, i32
  }
  func.func @transform_1(%arg0: i32) -> (i32, i32) {
    %c0_i32 = arith.constant 0 : i32
    %c0_i32_0 = arith.constant 0 : i32
    %c0_i32_1 = arith.constant 0 : i32
    return %c0_i32, %c0_i32_0 : i32, i32
  }
  func.func @transform_2(%arg0: i32) -> (i32, i32) {
    %c0_i32 = arith.constant 0 : i32
    %c0_i32_0 = arith.constant 0 : i32
    %c0_i32_1 = arith.constant 0 : i32
    return %c0_i32, %c0_i32_0 : i32, i32
  }
  func.func @transform_3(%arg0: i32) -> (i32, i32) {
    %c0_i32 = arith.constant 0 : i32
    %c0_i32_0 = arith.constant 0 : i32
    return %arg0, %c0_i32 : i32, i32
  }
}

module attributes {stable_mosaic.version = 11 : i64} {
  func.func @_attn_kernel(%arg0: i32, %arg1: i32, %arg2: memref<1x128x128xf32, #tpu.memory_space<vmem>>, %arg3: memref<1x64x128xf32, #tpu.memory_space<vmem>>, %arg4: memref<1x64x128xf32, #tpu.memory_space<vmem>>, %arg5: memref<1x128x128xf32, #tpu.memory_space<vmem>>) attributes {dimension_semantics = [#tpu.dimension_semantics<parallel>, #tpu.dimension_semantics<parallel>], iteration_bounds = array<i64: 2, 2>, scalar_prefetch = 0 : i64, scratch_operands = 0 : i64, tpu.core_type = #tpu.core_type<tc>, window_params = [{transform_indices = @transform_0, window_bounds = array<i64: 1, 128, 128>}, {transform_indices = @transform_1, window_bounds = array<i64: 1, 64, 128>}, {transform_indices = @transform_2, window_bounds = array<i64: 1, 64, 128>}, {transform_indices = @transform_3, window_bounds = array<i64: 1, 128, 128>}]} {
    %c0 = arith.constant 0 : index
    %c0_0 = arith.constant 0 : index
    %c0_1 = arith.constant 0 : index
    %0 = vector.load %arg2[%c0, %c0_0, %c0_1] : memref<1x128x128xf32, #tpu.memory_space<vmem>>, vector<1x128x128xf32>
    %1 = vector.shape_cast %0 : vector<1x128x128xf32> to vector<128x128xf32>
    %2 = arith.truncf %1 : vector<128x128xf32> to vector<128x128xbf16>
    %c0_2 = arith.constant 0 : index
    %c0_3 = arith.constant 0 : index
    %c0_4 = arith.constant 0 : index
    %3 = vector.load %arg3[%c0_2, %c0_3, %c0_4] : memref<1x64x128xf32, #tpu.memory_space<vmem>>, vector<1x64x128xf32>
    %4 = vector.shape_cast %3 : vector<1x64x128xf32> to vector<64x128xf32>
    %5 = arith.truncf %4 : vector<64x128xf32> to vector<64x128xbf16>
    %c0_5 = arith.constant 0 : index
    %c0_6 = arith.constant 0 : index
    %c0_7 = arith.constant 0 : index
    %6 = vector.load %arg4[%c0_5, %c0_6, %c0_7] : memref<1x64x128xf32, #tpu.memory_space<vmem>>, vector<1x64x128xf32>
    %7 = vector.shape_cast %6 : vector<1x64x128xf32> to vector<64x128xf32>
    %8 = arith.truncf %7 : vector<64x128xf32> to vector<64x128xbf16>
    %9 = vector.extract_strided_slice %2 {offsets = [0, 0], sizes = [128, 32], strides = [1, 1]} : vector<128x128xbf16> to vector<128x32xbf16>
    %10 = vector.extract_strided_slice %5 {offsets = [0, 0], sizes = [64, 32], strides = [1, 1]} : vector<64x128xbf16> to vector<64x32xbf16>
    %11 = vector.extract_strided_slice %8 {offsets = [0, 0], sizes = [64, 32], strides = [1, 1]} : vector<64x128xbf16> to vector<64x32xbf16>
    %cst = arith.constant dense<0.000000e+00> : vector<128x64xf32>
    %12 = tpu.matmul %9, %10, %cst {dimension_numbers = #tpu.dot_dimension_numbers<[1], [1], [0], [0], [0, 0, 1, 0], [], []>} : vector<128x32xbf16>, vector<64x32xbf16>, vector<128x64xf32> -> vector<128x64xf32>
    %cst_8 = arith.constant dense<0xFF800000> : vector<128xf32>
    %13 = vector.multi_reduction <maximumf>, %12, %cst_8 [1] : vector<128x64xf32> to vector<128xf32>
    %14 = vector.shape_cast %13 : vector<128xf32> to vector<128x1xf32>
    %15 = vector.broadcast %14 : vector<128x1xf32> to vector<128x64xf32>
    %16 = arith.subf %12, %15 : vector<128x64xf32>
    %17 = math.exp %16 : vector<128x64xf32>
    %cst_9 = arith.constant dense<0.000000e+00> : vector<128xf32>
    %18 = vector.multi_reduction <add>, %17, %cst_9 [1] : vector<128x64xf32> to vector<128xf32>
    %19 = vector.shape_cast %18 : vector<128xf32> to vector<128x1xf32>
    %20 = arith.truncf %17 : vector<128x64xf32> to vector<128x64xbf16>
    %cst_10 = arith.constant dense<0.000000e+00> : vector<128x32xf32>
    %21 = tpu.matmul %20, %11, %cst_10 {dimension_numbers = #tpu.dot_dimension_numbers<[1], [0], [0], [1], [0, 0, 1, 1], [], []>} : vector<128x64xbf16>, vector<64x32xbf16>, vector<128x32xf32> -> vector<128x32xf32>
    %22 = tpu.reciprocal %19 {approx = true} : vector<128x1xf32> -> vector<128x1xf32>
    %23 = vector.broadcast %22 : vector<128x1xf32> to vector<128x32xf32>
    %24 = arith.mulf %21, %23 : vector<128x32xf32>
    %25 = vector.extract_strided_slice %2 {offsets = [0, 32], sizes = [128, 32], strides = [1, 1]} : vector<128x128xbf16> to vector<128x32xbf16>
    %26 = vector.extract_strided_slice %5 {offsets = [0, 32], sizes = [64, 32], strides = [1, 1]} : vector<64x128xbf16> to vector<64x32xbf16>
    %27 = vector.extract_strided_slice %8 {offsets = [0, 32], sizes = [64, 32], strides = [1, 1]} : vector<64x128xbf16> to vector<64x32xbf16>
    %cst_11 = arith.constant dense<0.000000e+00> : vector<128x64xf32>
    %28 = tpu.matmul %25, %26, %cst_11 {dimension_numbers = #tpu.dot_dimension_numbers<[1], [1], [0], [0], [0, 0, 1, 0], [], []>} : vector<128x32xbf16>, vector<64x32xbf16>, vector<128x64xf32> -> vector<128x64xf32>
    %cst_12 = arith.constant dense<0xFF800000> : vector<128xf32>
    %29 = vector.multi_reduction <maximumf>, %28, %cst_12 [1] : vector<128x64xf32> to vector<128xf32>
    %30 = vector.shape_cast %29 : vector<128xf32> to vector<128x1xf32>
    %31 = vector.broadcast %30 : vector<128x1xf32> to vector<128x64xf32>
    %32 = arith.subf %28, %31 : vector<128x64xf32>
    %33 = math.exp %32 : vector<128x64xf32>
    %cst_13 = arith.constant dense<0.000000e+00> : vector<128xf32>
    %34 = vector.multi_reduction <add>, %33, %cst_13 [1] : vector<128x64xf32> to vector<128xf32>
    %35 = vector.shape_cast %34 : vector<128xf32> to vector<128x1xf32>
    %36 = arith.truncf %33 : vector<128x64xf32> to vector<128x64xbf16>
    %cst_14 = arith.constant dense<0.000000e+00> : vector<128x32xf32>
    %37 = tpu.matmul %36, %27, %cst_14 {dimension_numbers = #tpu.dot_dimension_numbers<[1], [0], [0], [1], [0, 0, 1, 1], [], []>} : vector<128x64xbf16>, vector<64x32xbf16>, vector<128x32xf32> -> vector<128x32xf32>
    %38 = tpu.reciprocal %35 {approx = true} : vector<128x1xf32> -> vector<128x1xf32>
    %39 = vector.broadcast %38 : vector<128x1xf32> to vector<128x32xf32>
    %40 = arith.mulf %37, %39 : vector<128x32xf32>
    %41 = vector.extract_strided_slice %2 {offsets = [0, 64], sizes = [128, 32], strides = [1, 1]} : vector<128x128xbf16> to vector<128x32xbf16>
    %42 = vector.extract_strided_slice %5 {offsets = [0, 64], sizes = [64, 32], strides = [1, 1]} : vector<64x128xbf16> to vector<64x32xbf16>
    %43 = vector.extract_strided_slice %8 {offsets = [0, 64], sizes = [64, 32], strides = [1, 1]} : vector<64x128xbf16> to vector<64x32xbf16>
    %cst_15 = arith.constant dense<0.000000e+00> : vector<128x64xf32>
    %44 = tpu.matmul %41, %42, %cst_15 {dimension_numbers = #tpu.dot_dimension_numbers<[1], [1], [0], [0], [0, 0, 1, 0], [], []>} : vector<128x32xbf16>, vector<64x32xbf16>, vector<128x64xf32> -> vector<128x64xf32>
    %cst_16 = arith.constant dense<0xFF800000> : vector<128xf32>
    %45 = vector.multi_reduction <maximumf>, %44, %cst_16 [1] : vector<128x64xf32> to vector<128xf32>
    %46 = vector.shape_cast %45 : vector<128xf32> to vector<128x1xf32>
    %47 = vector.broadcast %46 : vector<128x1xf32> to vector<128x64xf32>
    %48 = arith.subf %44, %47 : vector<128x64xf32>
    %49 = math.exp %48 : vector<128x64xf32>
    %cst_17 = arith.constant dense<0.000000e+00> : vector<128xf32>
    %50 = vector.multi_reduction <add>, %49, %cst_17 [1] : vector<128x64xf32> to vector<128xf32>
    %51 = vector.shape_cast %50 : vector<128xf32> to vector<128x1xf32>
    %52 = arith.truncf %49 : vector<128x64xf32> to vector<128x64xbf16>
    %cst_18 = arith.constant dense<0.000000e+00> : vector<128x32xf32>
    %53 = tpu.matmul %52, %43, %cst_18 {dimension_numbers = #tpu.dot_dimension_numbers<[1], [0], [0], [1], [0, 0, 1, 1], [], []>} : vector<128x64xbf16>, vector<64x32xbf16>, vector<128x32xf32> -> vector<128x32xf32>
    %54 = tpu.reciprocal %51 {approx = true} : vector<128x1xf32> -> vector<128x1xf32>
    %55 = vector.broadcast %54 : vector<128x1xf32> to vector<128x32xf32>
    %56 = arith.mulf %53, %55 : vector<128x32xf32>
    %57 = vector.extract_strided_slice %2 {offsets = [0, 96], sizes = [128, 32], strides = [1, 1]} : vector<128x128xbf16> to vector<128x32xbf16>
    %58 = vector.extract_strided_slice %5 {offsets = [0, 96], sizes = [64, 32], strides = [1, 1]} : vector<64x128xbf16> to vector<64x32xbf16>
    %59 = vector.extract_strided_slice %8 {offsets = [0, 96], sizes = [64, 32], strides = [1, 1]} : vector<64x128xbf16> to vector<64x32xbf16>
    %cst_19 = arith.constant dense<0.000000e+00> : vector<128x64xf32>
    %60 = tpu.matmul %57, %58, %cst_19 {dimension_numbers = #tpu.dot_dimension_numbers<[1], [1], [0], [0], [0, 0, 1, 0], [], []>} : vector<128x32xbf16>, vector<64x32xbf16>, vector<128x64xf32> -> vector<128x64xf32>
    %cst_20 = arith.constant dense<0xFF800000> : vector<128xf32>
    %61 = vector.multi_reduction <maximumf>, %60, %cst_20 [1] : vector<128x64xf32> to vector<128xf32>
    %62 = vector.shape_cast %61 : vector<128xf32> to vector<128x1xf32>
    %63 = vector.broadcast %62 : vector<128x1xf32> to vector<128x64xf32>
    %64 = arith.subf %60, %63 : vector<128x64xf32>
    %65 = math.exp %64 : vector<128x64xf32>
    %cst_21 = arith.constant dense<0.000000e+00> : vector<128xf32>
    %66 = vector.multi_reduction <add>, %65, %cst_21 [1] : vector<128x64xf32> to vector<128xf32>
    %67 = vector.shape_cast %66 : vector<128xf32> to vector<128x1xf32>
    %68 = arith.truncf %65 : vector<128x64xf32> to vector<128x64xbf16>
    %cst_22 = arith.constant dense<0.000000e+00> : vector<128x32xf32>
    %69 = tpu.matmul %68, %59, %cst_22 {dimension_numbers = #tpu.dot_dimension_numbers<[1], [0], [0], [1], [0, 0, 1, 1], [], []>} : vector<128x64xbf16>, vector<64x32xbf16>, vector<128x32xf32> -> vector<128x32xf32>
    %70 = tpu.reciprocal %67 {approx = true} : vector<128x1xf32> -> vector<128x1xf32>
    %71 = vector.broadcast %70 : vector<128x1xf32> to vector<128x32xf32>
    %72 = arith.mulf %69, %71 : vector<128x32xf32>
    %73 = tpu.concatenate %24, %40, %56, %72 in 1 : vector<128x32xf32>, vector<128x32xf32>, vector<128x32xf32>, vector<128x32xf32> -> vector<128x128xf32>
    %c0_23 = arith.constant 0 : index
    %c0_24 = arith.constant 0 : index
    %c0_25 = arith.constant 0 : index
    %74 = vector.load %arg5[%c0_23, %c0_24, %c0_25] : memref<1x128x128xf32, #tpu.memory_space<vmem>>, vector<1x128x128xf32>
    %75 = vector.shape_cast %74 : vector<1x128x128xf32> to vector<128x128xf32>
    %76 = vector.shape_cast %73 : vector<128x128xf32> to vector<1x128x128xf32>
    tpu.vector_store %arg5[%c0_23, %c0_24, %c0_25], %76 {strides = array<i32>} : memref<1x128x128xf32, #tpu.memory_space<vmem>>, vector<1x128x128xf32>,
    return
  }
  func.func @transform_0(%arg0: i32, %arg1: i32) -> (i32, i32, i32) {
    %c0_i32 = arith.constant 0 : i32
    %c0_i32_0 = arith.constant 0 : i32
    return %arg0, %arg1, %c0_i32 : i32, i32, i32
  }
  func.func @transform_1(%arg0: i32, %arg1: i32) -> (i32, i32, i32) {
    %c0_i32 = arith.constant 0 : i32
    %c0_i32_0 = arith.constant 0 : i32
    %c0_i32_1 = arith.constant 0 : i32
    return %arg0, %c0_i32, %c0_i32_0 : i32, i32, i32
  }
  func.func @transform_2(%arg0: i32, %arg1: i32) -> (i32, i32, i32) {
    %c0_i32 = arith.constant 0 : i32
    %c1_i32 = arith.constant 1 : i32
    %c0_i32_0 = arith.constant 0 : i32
    return %arg0, %c0_i32, %c1_i32 : i32, i32, i32
  }
  func.func @transform_3(%arg0: i32, %arg1: i32) -> (i32, i32, i32) {
    %c0_i32 = arith.constant 0 : i32
    %c0_i32_0 = arith.constant 0 : i32
    return %arg0, %arg1, %c0_i32 : i32, i32, i32
  }
}

module attributes {stable_mosaic.version = 11 : i64} {
  func.func @_linear_kernel(%arg0: i32, %arg1: memref<512x128xf32, #tpu.memory_space<vmem>>, %arg2: memref<128x128xbf16, #tpu.memory_space<vmem>>, %arg3: memref<1x128xf32, #tpu.memory_space<vmem>>, %arg4: memref<512x128xf32, #tpu.memory_space<vmem>>) attributes {dimension_semantics = [#tpu.dimension_semantics<parallel>], iteration_bounds = array<i64: 1>, scalar_prefetch = 0 : i64, scratch_operands = 0 : i64, tpu.core_type = #tpu.core_type<tc>, window_params = [{transform_indices = @transform_0, window_bounds = array<i64: 512, 128>}, {pipeline_mode = #tpu.pipeline_mode<synchronous>, transform_indices = @transform_1, window_bounds = array<i64: 128, 128>}, {pipeline_mode = #tpu.pipeline_mode<synchronous>, transform_indices = @transform_2, window_bounds = array<i64: 1, 128>}, {transform_indices = @transform_3, window_bounds = array<i64: 512, 128>}]} {
    %c0 = arith.constant 0 : index
    %c0_0 = arith.constant 0 : index
    %0 = vector.load %arg1[%c0, %c0_0] : memref<512x128xf32, #tpu.memory_space<vmem>>, vector<512x128xf32>
    %1 = arith.truncf %0 : vector<512x128xf32> to vector<512x128xbf16>
    %c0_1 = arith.constant 0 : index
    %c0_2 = arith.constant 0 : index
    %2 = vector.load %arg2[%c0_1, %c0_2] : memref<128x128xbf16, #tpu.memory_space<vmem>>, vector<128x128xbf16>
    %cst = arith.constant dense<0.000000e+00> : vector<512x128xf32>
    %3 = tpu.matmul %1, %2, %cst {dimension_numbers = #tpu.dot_dimension_numbers<[1], [0], [0], [1], [0, 0, 1, 1], [], []>} : vector<512x128xbf16>, vector<128x128xbf16>, vector<512x128xf32> -> vector<512x128xf32>
    %c0_3 = arith.constant 0 : index
    %c0_4 = arith.constant 0 : index
    %4 = vector.load %arg3[%c0_3, %c0_4] : memref<1x128xf32, #tpu.memory_space<vmem>>, vector<1x128xf32>
    %5 = vector.broadcast %4 : vector<1x128xf32> to vector<512x128xf32>
    %6 = arith.addf %3, %5 : vector<512x128xf32>
    %c0_5 = arith.constant 0 : index
    %c0_6 = arith.constant 0 : index
    %7 = vector.load %arg4[%c0_5, %c0_6] : memref<512x128xf32, #tpu.memory_space<vmem>>, vector<512x128xf32>
    tpu.vector_store %arg4[%c0_5, %c0_6], %6 {strides = array<i32>} : memref<512x128xf32, #tpu.memory_space<vmem>>, vector<512x128xf32>,
    return
  }
  func.func @transform_0(%arg0: i32) -> (i32, i32) {
    %c0_i32 = arith.constant 0 : i32
    %c0_i32_0 = arith.constant 0 : i32
    return %arg0, %c0_i32 : i32, i32
  }
  func.func @transform_1(%arg0: i32) -> (i32, i32) {
    %c0_i32 = arith.constant 0 : i32
    %c0_i32_0 = arith.constant 0 : i32
    %c0_i32_1 = arith.constant 0 : i32
    return %c0_i32, %c0_i32_0 : i32, i32
  }
  func.func @transform_2(%arg0: i32) -> (i32, i32) {
    %c0_i32 = arith.constant 0 : i32
    %c0_i32_0 = arith.constant 0 : i32
    %c0_i32_1 = arith.constant 0 : i32
    return %c0_i32, %c0_i32_0 : i32, i32
  }
  func.func @transform_3(%arg0: i32) -> (i32, i32) {
    %c0_i32 = arith.constant 0 : i32
    %c0_i32_0 = arith.constant 0 : i32
    return %arg0, %c0_i32 : i32, i32
  }
}

</mosaic_0001>

<llo_original>
// kernel: attention_forward.4
$region0: #{attention_forward.4}
  #allocation0 [shape = 'u32[]', space=smem, size = 0x4, offset = 0x4, fixed_abs, tag = 'smem constant byte address 0x4 - core index']
  #allocation1 [shape = 'u32[144,128]{1,0:T(1,128)}', space=vmem, size = 0x12000, scoped, tag = 'internal scratch']
  %s0 = inlined_call_operand.hbm [shape: f32[512,128], index: 0, kind: input, shape index: {}]
  %s1 = inlined_call_operand.hbm [shape: bf16[128,128], index: 1, kind: input, shape index: {}]
  %s2 = inlined_call_operand.vmem [shape: f32[1,128], index: 2, kind: input, shape index: {}]
  %s3 = inlined_call_operand.vmem [shape: f32[512,128], index: 3, kind: output, shape index: {}]
  %s4 = sld [smem:[#allocation0]]
  $region30: #{attention_forward.4} parent=0
    _
  %s6 = ssub.s32 1, %s4
  %s7 = scalar_select 0, %s6, %s4
  $region1: #{attention_forward.4} parent=0
    #allocation2 [shape = 'u8[262144]{0}', space=vmem, size = 0x40000, scoped, tag = 'input window, operand 0, single buffered']
    #allocation3 [shape = 's32[1]{0}', space=sflag, size = 0x4, scoped, tag = 'scoped memory for attention_forward.4']
    #allocation4 [shape = 'u8[32768]{0}', space=vmem, size = 0x8000, scoped, tag = 'input window, operand 1, single buffered']
    #allocation5 [shape = 's32[1]{0}', space=sflag, size = 0x4, scoped, tag = 'scoped memory for attention_forward.4']
    %8 = vsyncpa [#allocation3], 0
    %9 = vsyncpa [#allocation5], 0
    // Predicated region
    $region2: #{attention_forward.4} parent=1 // pred_check
      _
    $region3: #{attention_forward.4} parent=1 // pred_check_branch
      %11 = sbr.rel (0) target = $region5
    $region4: #{attention_forward.4} parent=1 // pred_region
      %s13 = ssub.s32 8192, 8192
      %14 = vsyncadd [#allocation3], %s13
      %s15 = sshll.u32 [#allocation2], 4
      %s16 = int_to_ptr.vmem [resolvable:$true] %s15
      %21 = dma.hbm_to_vmem [thread:$0]  %s0, 8192, %s16, [#allocation3], 128, 128, 8
    $region5: #{attention_forward.4} parent=1 // pred_fallthru
      _
    // Predicated region
    $region6: #{attention_forward.4} parent=1 // pred_check
      _
    $region7: #{attention_forward.4} parent=1 // pred_check_branch
      %23 = sbr.rel (0) target = $region9
    $region8: #{attention_forward.4} parent=1 // pred_region
      %s25 = ssub.s32 1024, 1024
      %26 = vsyncadd [#allocation5], %s25
      %s27 = sshll.u32 [#allocation4], 4
      %s28 = int_to_ptr.vmem [resolvable:$true] %s27
      %33 = dma.hbm_to_vmem [thread:$0]  %s1, 1024, %s28, [#allocation5], 64, 64, 4
    $region9: #{attention_forward.4} parent=1 // pred_fallthru
      _
    // Predicated region
    $region10: #{attention_forward.4} parent=1 // pred_check
      _
    $region11: #{attention_forward.4} parent=1 // pred_check_branch
      %35 = sbr.rel (0) target = $region13
    $region12: #{attention_forward.4} parent=1 // pred_region
      _
    $region13: #{attention_forward.4} parent=1 // pred_fallthru
      _
    // Predicated region
    $region14: #{attention_forward.4} parent=1 // pred_check
      _
    $region15: #{attention_forward.4} parent=1 // pred_check_branch
      %37 = sbr.rel (0) target = $region17
    $region16: #{attention_forward.4} parent=1 // pred_region
      %38 = dma.done [#allocation3], 8192
    $region17: #{attention_forward.4} parent=1 // pred_fallthru
      _
    // Predicated region
    $region18: #{attention_forward.4} parent=1 // pred_check
      _
    $region19: #{attention_forward.4} parent=1 // pred_check_branch
      %40 = sbr.rel (0) target = $region21
    $region20: #{attention_forward.4} parent=1 // pred_region
      %41 = dma.done [#allocation5], 1024
    $region21: #{attention_forward.4} parent=1 // pred_fallthru
      _
    %v43 = vld [vmem:[#allocation2] sm:$0xff]
    %v44 = vld [vmem:[#allocation2 + $0x8] sm:$0xff]
    %v45 = vld [vmem:[#allocation2 + $0x10] sm:$0xff]
    %v46 = vld [vmem:[#allocation2 + $0x18] sm:$0xff]
    %v47 = vld [vmem:[#allocation2 + $0x20] sm:$0xff]
    %v48 = vld [vmem:[#allocation2 + $0x28] sm:$0xff]
    %v49 = vld [vmem:[#allocation2 + $0x30] sm:$0xff]
    %v50 = vld [vmem:[#allocation2 + $0x38] sm:$0xff]
    %v51 = vld [vmem:[#allocation2 + $0x40] sm:$0xff]
    %v52 = vld [vmem:[#allocation2 + $0x48] sm:$0xff]
    %v53 = vld [vmem:[#allocation2 + $0x50] sm:$0xff]
    %v54 = vld [vmem:[#allocation2 + $0x58] sm:$0xff]
    %v55 = vld [vmem:[#allocation2 + $0x60] sm:$0xff]
    %v56 = vld [vmem:[#allocation2 + $0x68] sm:$0xff]
    %v57 = vld [vmem:[#allocation2 + $0x70] sm:$0xff]
    %v58 = vld [vmem:[#allocation2 + $0x78] sm:$0xff]
    %v59 = vld [vmem:[#allocation2 + $0x80] sm:$0xff]
    %v60 = vld [vmem:[#allocation2 + $0x88] sm:$0xff]
    %v61 = vld [vmem:[#allocation2 + $0x90] sm:$0xff]
    %v62 = vld [vmem:[#allocation2 + $0x98] sm:$0xff]
    %v63 = vld [vmem:[#allocation2 + $0xa0] sm:$0xff]
    %v64 = vld [vmem:[#allocation2 + $0xa8] sm:$0xff]
    %v65 = vld [vmem:[#allocation2 + $0xb0] sm:$0xff]
    %v66 = vld [vmem:[#allocation2 + $0xb8] sm:$0xff]
    %v67 = vld [vmem:[#allocation2 + $0xc0] sm:$0xff]
    %v68 = vld [vmem:[#allocation2 + $0xc8] sm:$0xff]
    %v69 = vld [vmem:[#allocation2 + $0xd0] sm:$0xff]
    %v70 = vld [vmem:[#allocation2 + $0xd8] sm:$0xff]
    %v71 = vld [vmem:[#allocation2 + $0xe0] sm:$0xff]
    %v72 = vld [vmem:[#allocation2 + $0xe8] sm:$0xff]
    %v73 = vld [vmem:[#allocation2 + $0xf0] sm:$0xff]
    %v74 = vld [vmem:[#allocation2 + $0xf8] sm:$0xff]
    %v75 = vld [vmem:[#allocation2 + $0x100] sm:$0xff]
    %v76 = vld [vmem:[#allocation2 + $0x108] sm:$0xff]
    %v77 = vld [vmem:[#allocation2 + $0x110] sm:$0xff]
    %v78 = vld [vmem:[#allocation2 + $0x118] sm:$0xff]
    %v79 = vld [vmem:[#allocation2 + $0x120] sm:$0xff]
    %v80 = vld [vmem:[#allocation2 + $0x128] sm:$0xff]
    %v81 = vld [vmem:[#allocation2 + $0x130] sm:$0xff]
    %v82 = vld [vmem:[#allocation2 + $0x138] sm:$0xff]
    %v83 = vld [vmem:[#allocation2 + $0x140] sm:$0xff]
    %v84 = vld [vmem:[#allocation2 + $0x148] sm:$0xff]
    %v85 = vld [vmem:[#allocation2 + $0x150] sm:$0xff]
    %v86 = vld [vmem:[#allocation2 + $0x158] sm:$0xff]
    %v87 = vld [vmem:[#allocation2 + $0x160] sm:$0xff]
    %v88 = vld [vmem:[#allocation2 + $0x168] sm:$0xff]
    %v89 = vld [vmem:[#allocation2 + $0x170] sm:$0xff]
    %v90 = vld [vmem:[#allocation2 + $0x178] sm:$0xff]
    %v91 = vld [vmem:[#allocation2 + $0x180] sm:$0xff]
    %v92 = vld [vmem:[#allocation2 + $0x188] sm:$0xff]
    %v93 = vld [vmem:[#allocation2 + $0x190] sm:$0xff]
    %v94 = vld [vmem:[#allocation2 + $0x198] sm:$0xff]
    %v95 = vld [vmem:[#allocation2 + $0x1a0] sm:$0xff]
    %v96 = vld [vmem:[#allocation2 + $0x1a8] sm:$0xff]
    %v97 = vld [vmem:[#allocation2 + $0x1b0] sm:$0xff]
    %v98 = vld [vmem:[#allocation2 + $0x1b8] sm:$0xff]
    %v99 = vld [vmem:[#allocation2 + $0x1c0] sm:$0xff]
    %v100 = vld [vmem:[#allocation2 + $0x1c8] sm:$0xff]
    %v101 = vld [vmem:[#allocation2 + $0x1d0] sm:$0xff]
    %v102 = vld [vmem:[#allocation2 + $0x1d8] sm:$0xff]
    %v103 = vld [vmem:[#allocation2 + $0x1e0] sm:$0xff]
    %v104 = vld [vmem:[#allocation2 + $0x1e8] sm:$0xff]
    %v105 = vld [vmem:[#allocation2 + $0x1f0] sm:$0xff]
    %v106 = vld [vmem:[#allocation2 + $0x1f8] sm:$0xff]
    %v107 = vpack.c.bf16 %v44, %v43
    %v108 = vpack.c.bf16 %v46, %v45
    %v109 = vpack.c.bf16 %v48, %v47
    %v110 = vpack.c.bf16 %v50, %v49
    %v111 = vpack.c.bf16 %v52, %v51
    %v112 = vpack.c.bf16 %v54, %v53
    %v113 = vpack.c.bf16 %v56, %v55
    %v114 = vpack.c.bf16 %v58, %v57
    %v115 = vpack.c.bf16 %v60, %v59
    %v116 = vpack.c.bf16 %v62, %v61
    %v117 = vpack.c.bf16 %v64, %v63
    %v118 = vpack.c.bf16 %v66, %v65
    %v119 = vpack.c.bf16 %v68, %v67
    %v120 = vpack.c.bf16 %v70, %v69
    %v121 = vpack.c.bf16 %v72, %v71
    %v122 = vpack.c.bf16 %v74, %v73
    %v123 = vpack.c.bf16 %v76, %v75
    %v124 = vpack.c.bf16 %v78, %v77
    %v125 = vpack.c.bf16 %v80, %v79
    %v126 = vpack.c.bf16 %v82, %v81
    %v127 = vpack.c.bf16 %v84, %v83
    %v128 = vpack.c.bf16 %v86, %v85
    %v129 = vpack.c.bf16 %v88, %v87
    %v130 = vpack.c.bf16 %v90, %v89
    %v131 = vpack.c.bf16 %v92, %v91
    %v132 = vpack.c.bf16 %v94, %v93
    %v133 = vpack.c.bf16 %v96, %v95
    %v134 = vpack.c.bf16 %v98, %v97
    %v135 = vpack.c.bf16 %v100, %v99
    %v136 = vpack.c.bf16 %v102, %v101
    %v137 = vpack.c.bf16 %v104, %v103
    %v138 = vpack.c.bf16 %v106, %v105
    %v139 = vld [vmem:[#allocation4] sm:$0xf]
    %v140 = vld [vmem:[#allocation4 + $0x4] sm:$0xf]
    %v141 = vld [vmem:[#allocation4 + $0x8] sm:$0xf]
    %v142 = vld [vmem:[#allocation4 + $0xc] sm:$0xf]
    %v143 = vld [vmem:[#allocation4 + $0x10] sm:$0xf]
    %v144 = vld [vmem:[#allocation4 + $0x14] sm:$0xf]
    %v145 = vld [vmem:[#allocation4 + $0x18] sm:$0xf]
    %v146 = vld [vmem:[#allocation4 + $0x1c] sm:$0xf]
    %v147 = vld [vmem:[#allocation4 + $0x20] sm:$0xf]
    %v148 = vld [vmem:[#allocation4 + $0x24] sm:$0xf]
    %v149 = vld [vmem:[#allocation4 + $0x28] sm:$0xf]
    %v150 = vld [vmem:[#allocation4 + $0x2c] sm:$0xf]
    %v151 = vld [vmem:[#allocation4 + $0x30] sm:$0xf]
    %v152 = vld [vmem:[#allocation4 + $0x34] sm:$0xf]
    %v153 = vld [vmem:[#allocation4 + $0x38] sm:$0xf]
    %v154 = vld [vmem:[#allocation4 + $0x3c] sm:$0xf]
    %v155 = vld [vmem:[%s2] sm:$0x1]
    %v157 = vlaneseq
    %v158 = vshrl.u32 %v157, 7
    %v159 = vsub.s32 0, %v158
    %v160 = vrot.slane %v155, %v159
    %v178 = vunpack.c.l.b16 %v139
    %v179 = vunpack.c.l.b16 %v140
    %v180 = vunpack.c.l.b16 %v141
    %v181 = vunpack.c.l.b16 %v142
    %v182 = vunpack.c.l.b16 %v143
    %v183 = vunpack.c.l.b16 %v144
    %v184 = vunpack.c.l.b16 %v145
    %v185 = vunpack.c.l.b16 %v146
    %v186 = vunpack.c.l.b16 %v147
    %v187 = vunpack.c.l.b16 %v148
    %v188 = vunpack.c.l.b16 %v149
    %v189 = vunpack.c.l.b16 %v150
    %v190 = vunpack.c.l.b16 %v151
    %v191 = vunpack.c.l.b16 %v152
    %v192 = vunpack.c.l.b16 %v153
    %v193 = vunpack.c.l.b16 %v154
    %v194 = vpack.c.b16 %v179, %v178
    %v195 = vpack.c.b16 %v181, %v180
    %v196 = vpack.c.b16 %v183, %v182
    %v197 = vpack.c.b16 %v185, %v184
    %v198 = vpack.c.b16 %v187, %v186
    %v199 = vpack.c.b16 %v189, %v188
    %v200 = vpack.c.b16 %v191, %v190
    %v201 = vpack.c.b16 %v193, %v192
    %210 = vmatprep.subr.bf16.mxu0 0
    %211 = vmatpush1.bf16.msra.mxu0 %v194
    %212 = vmatprep.subr.bf16.mxu0 0
    %213 = vmatpush1.bf16.msra.mxu0 %v195
    %214 = vmatprep.subr.bf16.mxu0 0
    %215 = vmatpush1.bf16.msra.mxu0 %v196
    %216 = vmatprep.subr.bf16.mxu0 0
    %217 = vmatpush1.bf16.msra.mxu0 %v197
    %218 = vmatprep.subr.bf16.mxu0 0
    %219 = vmatpush1.bf16.msra.mxu0 %v198
    %220 = vmatprep.subr.bf16.mxu0 0
    %221 = vmatpush1.bf16.msra.mxu0 %v199
    %222 = vmatprep.subr.bf16.mxu0 0
    %223 = vmatpush1.bf16.msra.mxu0 %v200
    %224 = vmatprep.subr.bf16.mxu0 0
    %225 = vmatpush1.bf16.msra.mxu0 %v201
    %226 = vmatprep.subr.bf16.mxu0 0
    %227 = vmatpush1.bf16.msra.mxu0 0
    %228 = vmatprep.subr.bf16.mxu0 0
    %229 = vmatpush1.bf16.msra.mxu0 0
    %230 = vmatprep.subr.bf16.mxu0 0
    %231 = vmatpush1.bf16.msra.mxu0 0
    %232 = vmatprep.subr.bf16.mxu0 0
    %233 = vmatpush1.bf16.msra.mxu0 0
    %234 = vmatprep.subr.bf16.mxu0 0
    %235 = vmatpush1.bf16.msra.mxu0 0
    %236 = vmatprep.subr.bf16.mxu0 0
    %237 = vmatpush1.bf16.msra.mxu0 0
    %238 = vmatprep.subr.bf16.mxu0 0
    %239 = vmatpush1.bf16.msra.mxu0 0
    %240 = vmatprep.subr.bf16.mxu0 0
    %241 = vmatpush1.bf16.msra.mxu0 0
    %242 = vmatprep.mubr.bf16.mxu0 0
    %243 = vmatmul.mubr.bf16.gmra.mrb[0].mxu0 %v107
    %v244 = vpop.f32.mrb[0].mxu0
    %v245 = vadd.f32 %v160, %v244
    %v246 = vpop.f32.mrb[0].mxu0
    %v247 = vpop.f32.mrb[0].mxu0
    %v248 = vadd.f32 %v160, %v247
    %v249 = vpop.f32.mrb[0].mxu0
    %250 = vmatprep.mubr.bf16.mxu0 0
    %251 = vmatmul.mubr.bf16.gmra.mrb[0].mxu0 %v108
    %v252 = vpop.f32.mrb[0].mxu0
    %v253 = vadd.f32 %v160, %v252
    %v254 = vpop.f32.mrb[0].mxu0
    %v255 = vpop.f32.mrb[0].mxu0
    %v256 = vadd.f32 %v160, %v255
    %v257 = vpop.f32.mrb[0].mxu0
    %258 = vmatprep.mubr.bf16.mxu0 0
    %259 = vmatmul.mubr.bf16.gmra.mrb[0].mxu0 %v109
    %v260 = vpop.f32.mrb[0].mxu0
    %v261 = vadd.f32 %v160, %v260
    %v262 = vpop.f32.mrb[0].mxu0
    %v263 = vpop.f32.mrb[0].mxu0
    %v264 = vadd.f32 %v160, %v263
    %v265 = vpop.f32.mrb[0].mxu0
    %266 = vmatprep.mubr.bf16.mxu0 0
    %267 = vmatmul.mubr.bf16.gmra.mrb[0].mxu0 %v110
    %v268 = vpop.f32.mrb[0].mxu0
    %v269 = vadd.f32 %v160, %v268
    %v270 = vpop.f32.mrb[0].mxu0
    %v271 = vpop.f32.mrb[0].mxu0
    %v272 = vadd.f32 %v160, %v271
    %v273 = vpop.f32.mrb[0].mxu0
    %274 = vmatprep.mubr.bf16.mxu0 0
    %275 = vmatmul.mubr.bf16.gmra.mrb[0].mxu0 %v111
    %v276 = vpop.f32.mrb[0].mxu0
    %v277 = vadd.f32 %v160, %v276
    %v278 = vpop.f32.mrb[0].mxu0
    %v279 = vpop.f32.mrb[0].mxu0
    %v280 = vadd.f32 %v160, %v279
    %v281 = vpop.f32.mrb[0].mxu0
    %282 = vmatprep.mubr.bf16.mxu0 0
    %283 = vmatmul.mubr.bf16.gmra.mrb[0].mxu0 %v112
    %v284 = vpop.f32.mrb[0].mxu0
    %v285 = vadd.f32 %v160, %v284
    %v286 = vpop.f32.mrb[0].mxu0
    %v287 = vpop.f32.mrb[0].mxu0
    %v288 = vadd.f32 %v160, %v287
    %v289 = vpop.f32.mrb[0].mxu0
    %290 = vmatprep.mubr.bf16.mxu0 0
    %291 = vmatmul.mubr.bf16.gmra.mrb[0].mxu0 %v113
    %v292 = vpop.f32.mrb[0].mxu0
    %v293 = vadd.f32 %v160, %v292
    %v294 = vpop.f32.mrb[0].mxu0
    %v295 = vpop.f32.mrb[0].mxu0
    %v296 = vadd.f32 %v160, %v295
    %v297 = vpop.f32.mrb[0].mxu0
    %298 = vmatprep.mubr.bf16.mxu0 0
    %299 = vmatmul.mubr.bf16.gmra.mrb[0].mxu0 %v114
    %v300 = vpop.f32.mrb[0].mxu0
    %v301 = vadd.f32 %v160, %v300
    %v302 = vpop.f32.mrb[0].mxu0
    %v303 = vpop.f32.mrb[0].mxu0
    %v304 = vadd.f32 %v160, %v303
    %v305 = vpop.f32.mrb[0].mxu0
    %306 = vmatprep.mubr.bf16.mxu0 0
    %307 = vmatmul.mubr.bf16.gmra.mrb[0].mxu0 %v115
    %v308 = vpop.f32.mrb[0].mxu0
    %v309 = vadd.f32 %v160, %v308
    %v310 = vpop.f32.mrb[0].mxu0
    %v311 = vpop.f32.mrb[0].mxu0
    %v312 = vadd.f32 %v160, %v311
    %v313 = vpop.f32.mrb[0].mxu0
    %314 = vmatprep.mubr.bf16.mxu0 0
    %315 = vmatmul.mubr.bf16.gmra.mrb[0].mxu0 %v116
    %v316 = vpop.f32.mrb[0].mxu0
    %v317 = vadd.f32 %v160, %v316
    %v318 = vpop.f32.mrb[0].mxu0
    %v319 = vpop.f32.mrb[0].mxu0
    %v320 = vadd.f32 %v160, %v319
    %v321 = vpop.f32.mrb[0].mxu0
    %322 = vmatprep.mubr.bf16.mxu0 0
    %323 = vmatmul.mubr.bf16.gmra.mrb[0].mxu0 %v117
    %v324 = vpop.f32.mrb[0].mxu0
    %v325 = vadd.f32 %v160, %v324
    %v326 = vpop.f32.mrb[0].mxu0
    %v327 = vpop.f32.mrb[0].mxu0
    %v328 = vadd.f32 %v160, %v327
    %v329 = vpop.f32.mrb[0].mxu0
    %330 = vmatprep.mubr.bf16.mxu0 0
    %331 = vmatmul.mubr.bf16.gmra.mrb[0].mxu0 %v118
    %v332 = vpop.f32.mrb[0].mxu0
    %v333 = vadd.f32 %v160, %v332
    %v334 = vpop.f32.mrb[0].mxu0
    %v335 = vpop.f32.mrb[0].mxu0
    %v336 = vadd.f32 %v160, %v335
    %v337 = vpop.f32.mrb[0].mxu0
    %338 = vmatprep.mubr.bf16.mxu0 0
    %339 = vmatmul.mubr.bf16.gmra.mrb[0].mxu0 %v119
    %v340 = vpop.f32.mrb[0].mxu0
    %v341 = vadd.f32 %v160, %v340
    %v342 = vpop.f32.mrb[0].mxu0
    %v343 = vpop.f32.mrb[0].mxu0
    %v344 = vadd.f32 %v160, %v343
    %v345 = vpop.f32.mrb[0].mxu0
    %346 = vmatprep.mubr.bf16.mxu0 0
    %347 = vmatmul.mubr.bf16.gmra.mrb[0].mxu0 %v120
    %v348 = vpop.f32.mrb[0].mxu0
    %v349 = vadd.f32 %v160, %v348
    %v350 = vpop.f32.mrb[0].mxu0
    %v351 = vpop.f32.mrb[0].mxu0
    %v352 = vadd.f32 %v160, %v351
    %v353 = vpop.f32.mrb[0].mxu0
    %354 = vmatprep.mubr.bf16.mxu0 0
    %355 = vmatmul.mubr.bf16.gmra.mrb[0].mxu0 %v121
    %v356 = vpop.f32.mrb[0].mxu0
    %v357 = vadd.f32 %v160, %v356
    %v358 = vpop.f32.mrb[0].mxu0
    %v359 = vpop.f32.mrb[0].mxu0
    %v360 = vadd.f32 %v160, %v359
    %v361 = vpop.f32.mrb[0].mxu0
    %362 = vmatprep.mubr.bf16.mxu0 0
    %363 = vmatmul.mubr.bf16.gmra.mrb[0].mxu0 %v122
    %v364 = vpop.f32.mrb[0].mxu0
    %v365 = vadd.f32 %v160, %v364
    %v366 = vpop.f32.mrb[0].mxu0
    %v367 = vpop.f32.mrb[0].mxu0
    %v368 = vadd.f32 %v160, %v367
    %v369 = vpop.f32.mrb[0].mxu0
    %370 = vmatprep.mubr.bf16.mxu0 0
    %371 = vmatmul.mubr.bf16.gmra.mrb[0].mxu0 %v123
    %v372 = vpop.f32.mrb[0].mxu0
    %v373 = vadd.f32 %v160, %v372
    %v374 = vpop.f32.mrb[0].mxu0
    %v375 = vpop.f32.mrb[0].mxu0
    %v376 = vadd.f32 %v160, %v375
    %v377 = vpop.f32.mrb[0].mxu0
    %378 = vmatprep.mubr.bf16.mxu0 0
    %379 = vmatmul.mubr.bf16.gmra.mrb[0].mxu0 %v124
    %v380 = vpop.f32.mrb[0].mxu0
    %v381 = vadd.f32 %v160, %v380
    %v382 = vpop.f32.mrb[0].mxu0
    %v383 = vpop.f32.mrb[0].mxu0
    %v384 = vadd.f32 %v160, %v383
    %v385 = vpop.f32.mrb[0].mxu0
    %386 = vmatprep.mubr.bf16.mxu0 0
    %387 = vmatmul.mubr.bf16.gmra.mrb[0].mxu0 %v125
    %v388 = vpop.f32.mrb[0].mxu0
    %v389 = vadd.f32 %v160, %v388
    %v390 = vpop.f32.mrb[0].mxu0
    %v391 = vpop.f32.mrb[0].mxu0
    %v392 = vadd.f32 %v160, %v391
    %v393 = vpop.f32.mrb[0].mxu0
    %394 = vmatprep.mubr.bf16.mxu0 0
    %395 = vmatmul.mubr.bf16.gmra.mrb[0].mxu0 %v126
    %v396 = vpop.f32.mrb[0].mxu0
    %v397 = vadd.f32 %v160, %v396
    %v398 = vpop.f32.mrb[0].mxu0
    %v399 = vpop.f32.mrb[0].mxu0
    %v400 = vadd.f32 %v160, %v399
    %v401 = vpop.f32.mrb[0].mxu0
    %402 = vmatprep.mubr.bf16.mxu0 0
    %403 = vmatmul.mubr.bf16.gmra.mrb[0].mxu0 %v127
    %v404 = vpop.f32.mrb[0].mxu0
    %v405 = vadd.f32 %v160, %v404
    %v406 = vpop.f32.mrb[0].mxu0
    %v407 = vpop.f32.mrb[0].mxu0
    %v408 = vadd.f32 %v160, %v407
    %v409 = vpop.f32.mrb[0].mxu0
    %410 = vmatprep.mubr.bf16.mxu0 0
    %411 = vmatmul.mubr.bf16.gmra.mrb[0].mxu0 %v128
    %v412 = vpop.f32.mrb[0].mxu0
    %v413 = vadd.f32 %v160, %v412
    %v414 = vpop.f32.mrb[0].mxu0
    %v415 = vpop.f32.mrb[0].mxu0
    %v416 = vadd.f32 %v160, %v415
    %v417 = vpop.f32.mrb[0].mxu0
    %418 = vmatprep.mubr.bf16.mxu0 0
    %419 = vmatmul.mubr.bf16.gmra.mrb[0].mxu0 %v129
    %v420 = vpop.f32.mrb[0].mxu0
    %v421 = vadd.f32 %v160, %v420
    %v422 = vpop.f32.mrb[0].mxu0
    %v423 = vpop.f32.mrb[0].mxu0
    %v424 = vadd.f32 %v160, %v423
    %v425 = vpop.f32.mrb[0].mxu0
    %426 = vmatprep.mubr.bf16.mxu0 0
    %427 = vmatmul.mubr.bf16.gmra.mrb[0].mxu0 %v130
    %v428 = vpop.f32.mrb[0].mxu0
    %v429 = vadd.f32 %v160, %v428
    %v430 = vpop.f32.mrb[0].mxu0
    %v431 = vpop.f32.mrb[0].mxu0
    %v432 = vadd.f32 %v160, %v431
    %v433 = vpop.f32.mrb[0].mxu0
    %434 = vmatprep.mubr.bf16.mxu0 0
    %435 = vmatmul.mubr.bf16.gmra.mrb[0].mxu0 %v131
    %v436 = vpop.f32.mrb[0].mxu0
    %v437 = vadd.f32 %v160, %v436
    %v438 = vpop.f32.mrb[0].mxu0
    %v439 = vpop.f32.mrb[0].mxu0
    %v440 = vadd.f32 %v160, %v439
    %v441 = vpop.f32.mrb[0].mxu0
    %442 = vmatprep.mubr.bf16.mxu0 0
    %443 = vmatmul.mubr.bf16.gmra.mrb[0].mxu0 %v132
    %v444 = vpop.f32.mrb[0].mxu0
    %v445 = vadd.f32 %v160, %v444
    %v446 = vpop.f32.mrb[0].mxu0
    %v447 = vpop.f32.mrb[0].mxu0
    %v448 = vadd.f32 %v160, %v447
    %v449 = vpop.f32.mrb[0].mxu0
    %450 = vmatprep.mubr.bf16.mxu0 0
    %451 = vmatmul.mubr.bf16.gmra.mrb[0].mxu0 %v133
    %v452 = vpop.f32.mrb[0].mxu0
    %v453 = vadd.f32 %v160, %v452
    %v454 = vpop.f32.mrb[0].mxu0
    %v455 = vpop.f32.mrb[0].mxu0
    %v456 = vadd.f32 %v160, %v455
    %v457 = vpop.f32.mrb[0].mxu0
    %458 = vmatprep.mubr.bf16.mxu0 0
    %459 = vmatmul.mubr.bf16.gmra.mrb[0].mxu0 %v134
    %v460 = vpop.f32.mrb[0].mxu0
    %v461 = vadd.f32 %v160, %v460
    %v462 = vpop.f32.mrb[0].mxu0
    %v463 = vpop.f32.mrb[0].mxu0
    %v464 = vadd.f32 %v160, %v463
    %v465 = vpop.f32.mrb[0].mxu0
    %466 = vmatprep.mubr.bf16.mxu0 0
    %467 = vmatmul.mubr.bf16.gmra.mrb[0].mxu0 %v135
    %v468 = vpop.f32.mrb[0].mxu0
    %v469 = vadd.f32 %v160, %v468
    %v470 = vpop.f32.mrb[0].mxu0
    %v471 = vpop.f32.mrb[0].mxu0
    %v472 = vadd.f32 %v160, %v471
    %v473 = vpop.f32.mrb[0].mxu0
    %474 = vmatprep.mubr.bf16.mxu0 0
    %475 = vmatmul.mubr.bf16.gmra.mrb[0].mxu0 %v136
    %v476 = vpop.f32.mrb[0].mxu0
    %v477 = vadd.f32 %v160, %v476
    %v478 = vpop.f32.mrb[0].mxu0
    %v479 = vpop.f32.mrb[0].mxu0
    %v480 = vadd.f32 %v160, %v479
    %v481 = vpop.f32.mrb[0].mxu0
    %482 = vmatprep.mubr.bf16.mxu0 0
    %483 = vmatmul.mubr.bf16.gmra.mrb[0].mxu0 %v137
    %v484 = vpop.f32.mrb[0].mxu0
    %v485 = vadd.f32 %v160, %v484
    %v486 = vpop.f32.mrb[0].mxu0
    %v487 = vpop.f32.mrb[0].mxu0
    %v488 = vadd.f32 %v160, %v487
    %v489 = vpop.f32.mrb[0].mxu0
    %490 = vmatprep.mubr.bf16.mxu0 0
    %491 = vmatmul.mubr.bf16.gmra.mrb[0].mxu0 %v138
    %v492 = vpop.f32.mrb[0].mxu0
    %v493 = vadd.f32 %v160, %v492
    %v494 = vpop.f32.mrb[0].mxu0
    %v495 = vpop.f32.mrb[0].mxu0
    %v496 = vadd.f32 %v160, %v495
    %v497 = vpop.f32.mrb[0].mxu0
    %498 = vdwg.mxu0
    %499 = vst [vmem:[%s3] sm:$0xff] %v245
    %500 = vst [vmem:[%s3 + $0x8] sm:$0xff] %v248
    %501 = vst [vmem:[%s3 + $0x10] sm:$0xff] %v253
    %502 = vst [vmem:[%s3 + $0x18] sm:$0xff] %v256
    %503 = vst [vmem:[%s3 + $0x20] sm:$0xff] %v261
    %504 = vst [vmem:[%s3 + $0x28] sm:$0xff] %v264
    %505 = vst [vmem:[%s3 + $0x30] sm:$0xff] %v269
    %506 = vst [vmem:[%s3 + $0x38] sm:$0xff] %v272
    %507 = vst [vmem:[%s3 + $0x40] sm:$0xff] %v277
    %508 = vst [vmem:[%s3 + $0x48] sm:$0xff] %v280
    %509 = vst [vmem:[%s3 + $0x50] sm:$0xff] %v285
    %510 = vst [vmem:[%s3 + $0x58] sm:$0xff] %v288
    %511 = vst [vmem:[%s3 + $0x60] sm:$0xff] %v293
    %512 = vst [vmem:[%s3 + $0x68] sm:$0xff] %v296
    %513 = vst [vmem:[%s3 + $0x70] sm:$0xff] %v301
    %514 = vst [vmem:[%s3 + $0x78] sm:$0xff] %v304
    %515 = vst [vmem:[%s3 + $0x80] sm:$0xff] %v309
    %516 = vst [vmem:[%s3 + $0x88] sm:$0xff] %v312
    %517 = vst [vmem:[%s3 + $0x90] sm:$0xff] %v317
    %518 = vst [vmem:[%s3 + $0x98] sm:$0xff] %v320
    %519 = vst [vmem:[%s3 + $0xa0] sm:$0xff] %v325
    %520 = vst [vmem:[%s3 + $0xa8] sm:$0xff] %v328
    %521 = vst [vmem:[%s3 + $0xb0] sm:$0xff] %v333
    %522 = vst [vmem:[%s3 + $0xb8] sm:$0xff] %v336
    %523 = vst [vmem:[%s3 + $0xc0] sm:$0xff] %v341
    %524 = vst [vmem:[%s3 + $0xc8] sm:$0xff] %v344
    %525 = vst [vmem:[%s3 + $0xd0] sm:$0xff] %v349
    %526 = vst [vmem:[%s3 + $0xd8] sm:$0xff] %v352
    %527 = vst [vmem:[%s3 + $0xe0] sm:$0xff] %v357
    %528 = vst [vmem:[%s3 + $0xe8] sm:$0xff] %v360
    %529 = vst [vmem:[%s3 + $0xf0] sm:$0xff] %v365
    %530 = vst [vmem:[%s3 + $0xf8] sm:$0xff] %v368
    %531 = vst [vmem:[%s3 + $0x100] sm:$0xff] %v373
    %532 = vst [vmem:[%s3 + $0x108] sm:$0xff] %v376
    %533 = vst [vmem:[%s3 + $0x110] sm:$0xff] %v381
    %534 = vst [vmem:[%s3 + $0x118] sm:$0xff] %v384
    %535 = vst [vmem:[%s3 + $0x120] sm:$0xff] %v389
    %536 = vst [vmem:[%s3 + $0x128] sm:$0xff] %v392
    %537 = vst [vmem:[%s3 + $0x130] sm:$0xff] %v397
    %538 = vst [vmem:[%s3 + $0x138] sm:$0xff] %v400
    %539 = vst [vmem:[%s3 + $0x140] sm:$0xff] %v405
    %540 = vst [vmem:[%s3 + $0x148] sm:$0xff] %v408
    %541 = vst [vmem:[%s3 + $0x150] sm:$0xff] %v413
    %542 = vst [vmem:[%s3 + $0x158] sm:$0xff] %v416
    %543 = vst [vmem:[%s3 + $0x160] sm:$0xff] %v421
    %544 = vst [vmem:[%s3 + $0x168] sm:$0xff] %v424
    %545 = vst [vmem:[%s3 + $0x170] sm:$0xff] %v429
    %546 = vst [vmem:[%s3 + $0x178] sm:$0xff] %v432
    %547 = vst [vmem:[%s3 + $0x180] sm:$0xff] %v437
    %548 = vst [vmem:[%s3 + $0x188] sm:$0xff] %v440
    %549 = vst [vmem:[%s3 + $0x190] sm:$0xff] %v445
    %550 = vst [vmem:[%s3 + $0x198] sm:$0xff] %v448
    %551 = vst [vmem:[%s3 + $0x1a0] sm:$0xff] %v453
    %552 = vst [vmem:[%s3 + $0x1a8] sm:$0xff] %v456
    %553 = vst [vmem:[%s3 + $0x1b0] sm:$0xff] %v461
    %554 = vst [vmem:[%s3 + $0x1b8] sm:$0xff] %v464
    %555 = vst [vmem:[%s3 + $0x1c0] sm:$0xff] %v469
    %556 = vst [vmem:[%s3 + $0x1c8] sm:$0xff] %v472
    %557 = vst [vmem:[%s3 + $0x1d0] sm:$0xff] %v477
    %558 = vst [vmem:[%s3 + $0x1d8] sm:$0xff] %v480
    %559 = vst [vmem:[%s3 + $0x1e0] sm:$0xff] %v485
    %560 = vst [vmem:[%s3 + $0x1e8] sm:$0xff] %v488
    %561 = vst [vmem:[%s3 + $0x1f0] sm:$0xff] %v493
    %562 = vst [vmem:[%s3 + $0x1f8] sm:$0xff] %v496
    // Predicated region
    $region22: #{attention_forward.4} parent=1 // pred_check
      _
    $region23: #{attention_forward.4} parent=1 // pred_check_branch
      %564 = sbr.rel (0) target = $region25
    $region24: #{attention_forward.4} parent=1 // pred_region
      _
    $region25: #{attention_forward.4} parent=1 // pred_fallthru
      _
    // Predicated region
    $region26: #{attention_forward.4} parent=1 // pred_check
      _
    $region27: #{attention_forward.4} parent=1 // pred_check_branch
      %566 = sbr.rel (0) target = $region29
    $region28: #{attention_forward.4} parent=1 // pred_region
      _
    $region29: #{attention_forward.4} parent=1 // pred_fallthru
      _
    %567 = vsyncpa [#allocation3], 1
    %568 = vsyncpa [#allocation5], 1

// kernel: attention_forward.5
$region0: #{attention_forward.5}
  #allocation0 [shape = 'u32[]', space=smem, size = 0x4, offset = 0x4, fixed_abs, tag = 'smem constant byte address 0x4 - core index']
  #allocation1 [shape = 'u32[144,128]{1,0:T(1,128)}', space=vmem, size = 0x12000, scoped, tag = 'internal scratch']
  %s0 = inlined_call_operand.vmem [shape: f32[2,8,2,8,256], index: 0, kind: input, shape index: {}]
  %s1 = inlined_call_operand.vmem [shape: bf16[512,128], index: 1, kind: input, shape index: {}]
  %s2 = inlined_call_operand.vmem [shape: f32[1,128], index: 2, kind: input, shape index: {}]
  %s3 = inlined_call_operand.vmem [shape: f32[1,128], index: 3, kind: input, shape index: {}]
  %s4 = inlined_call_operand.vmem [shape: f32[1,128], index: 4, kind: input, shape index: {}]
  %s5 = inlined_call_operand.vmem [shape: bf16[128,256], index: 5, kind: input, shape index: {}]
  %s6 = inlined_call_operand.vmem [shape: f32[1,256], index: 6, kind: input, shape index: {}]
  %s7 = inlined_call_operand.vmem [shape: f32[2,64,256], index: 7, kind: output, shape index: {}]
  %s8 = sld [smem:[#allocation0]]
  $region61: #{attention_forward.5} parent=0
    _
  %s10 = ssub.s32 1, %s8
  %s11 = scalar_select 0, %s10, %s8
  loop: start=0, step=1, limit=4
  $region2: #{attention_forward.5} parent=0 // loop_pre_header
    _
  $region3: #{attention_forward.5} parent=0 // loop_header
    %s13 = sphi 0, %s17
    %p14 = scmp.ge.s32.totalorder %s13, 4
    %s20 = sphi 0, %s32
    %s21 = sphi 0, %s28
    %s22 = sphi 0, %s20
    %s23 = sphi 0, %s21
    %s24 = sphi 0, %s22
    %s25 = sphi 0, %s23
    %s37 = sphi 0, %s39
    %s40 = sphi 0, %s37
    %s41 = sphi 0, %s40
    %s57 = sphi 0, %s41
    %s61 = sphi 0, %s61
    %s63 = sphi 0, %s61
    %s64 = sphi 0, %s63
    %s78 = sphi 0, %s64
    %s82 = sphi 0, %s82
    %s84 = sphi 0, %s82
    %s85 = sphi 0, %s84
    %s99 = sphi 0, %s85
    %s103 = sphi 0, %s103
    %s105 = sphi 0, %s103
    %s106 = sphi 0, %s105
    %s120 = sphi 0, %s106
    %s124 = sphi 0, %s124
    %s126 = sphi 0, %s124
    %s127 = sphi 0, %s126
    %s141 = sphi 0, %s127
    %s145 = sphi 0, %s145
    %s147 = sphi 0, %s145
    %s148 = sphi 0, %s147
    %s162 = sphi 0, %s148
    %s166 = sphi 0, %s166
    %s168 = sphi 0, %s166
    %s169 = sphi 0, %s168
    %s183 = sphi 0, %s169
    %s191 = sphi 0, %s193
    %s194 = sphi 0, %s191
    %s195 = sphi 0, %s194
    %s211 = sphi 0, %s195
  $region4: #{attention_forward.5} parent=0 // loop_header_branch
    %16 = sbr.rel (%p14) target = $region8
  $region5: #{attention_forward.5} parent=0 // loop_body
    %s18 = ssub.s32 %s13, 1
    %s19 = ssub.s32 %s13, 2
    %s26 = sadd.s32 1, %s21
    %p27 = scmp.ge.s32.totalorder %s26, 1
    %s28 = scalar_select %p27, 0, %s26
    %s29 = sadd.s32 1, %s20
    %s30 = scalar_select %p27, %s29, %s20
    %p31 = scmp.ge.s32.totalorder %s30, 2
    %s32 = scalar_select %p31, 0, %s30
    %s33 = ssub.s32 %s20, %s32
    %s34 = ssub.s32 %s21, %s28
    %s35 = sor.u32 %s33, %s34
    %p36 = scmp.eq.s32.totalorder %s35, 0
    %s38 = sadd.s32 %s37, 1
    %s39 = scalar_select %p36, %s37, %s38
    %p42 = pneg %p36
    %p43 = scmp.eq.s32.totalorder %s13, 1
    %p44 = por %p42, %p43
    %p45 = scmp.ne.s32.totalorder %s37, %s40
    %p46 = scmp.eq.s32.totalorder %s13, 0
    %p47 = por %p45, %p46
    %p48 = scmp.ne.s32.totalorder %s37, %s40
    %p49 = scmp.eq.s32.totalorder %s18, 1
    %p50 = por %p48, %p49
    %p51 = scmp.ne.s32.totalorder %s40, %s41
    %p52 = scmp.eq.s32.totalorder %s18, 0
    %p53 = por %p51, %p52
    %p54 = scmp.ne.s32.totalorder %s40, %s41
    %p55 = scmp.eq.s32.totalorder %s19, 1
    %p56 = por %p54, %p55
    %p58 = scmp.ne.s32.totalorder %s41, %s57
    %p59 = scmp.eq.s32.totalorder %s19, 0
    %p60 = por %p58, %p59
    %s62 = sadd.s32 %s61, 1
    %p65 = scmp.eq.s32.totalorder %s13, 1
    %p66 = scmp.ne.s32.totalorder %s61, %s63
    %p67 = scmp.eq.s32.totalorder %s13, 0
    %p68 = por %p66, %p67
    %p69 = scmp.ne.s32.totalorder %s61, %s63
    %p70 = scmp.eq.s32.totalorder %s18, 1
    %p71 = por %p69, %p70
    %p72 = scmp.ne.s32.totalorder %s63, %s64
    %p73 = scmp.eq.s32.totalorder %s18, 0
    %p74 = por %p72, %p73
    %p75 = scmp.ne.s32.totalorder %s63, %s64
    %p76 = scmp.eq.s32.totalorder %s19, 1
    %p77 = por %p75, %p76
    %p79 = scmp.ne.s32.totalorder %s64, %s78
    %p80 = scmp.eq.s32.totalorder %s19, 0
    %p81 = por %p79, %p80
    %s83 = sadd.s32 %s82, 1
    %p86 = scmp.eq.s32.totalorder %s13, 1
    %p87 = scmp.ne.s32.totalorder %s82, %s84
    %p88 = scmp.eq.s32.totalorder %s13, 0
    %p89 = por %p87, %p88
    %p90 = scmp.ne.s32.totalorder %s82, %s84
    %p91 = scmp.eq.s32.totalorder %s18, 1
    %p92 = por %p90, %p91
    %p93 = scmp.ne.s32.totalorder %s84, %s85
    %p94 = scmp.eq.s32.totalorder %s18, 0
    %p95 = por %p93, %p94
    %p96 = scmp.ne.s32.totalorder %s84, %s85
    %p97 = scmp.eq.s32.totalorder %s19, 1
    %p98 = por %p96, %p97
    %p100 = scmp.ne.s32.totalorder %s85, %s99
    %p101 = scmp.eq.s32.totalorder %s19, 0
    %p102 = por %p100, %p101
    %s104 = sadd.s32 %s103, 1
    %p107 = scmp.eq.s32.totalorder %s13, 1
    %p108 = scmp.ne.s32.totalorder %s103, %s105
    %p109 = scmp.eq.s32.totalorder %s13, 0
    %p110 = por %p108, %p109
    %p111 = scmp.ne.s32.totalorder %s103, %s105
    %p112 = scmp.eq.s32.totalorder %s18, 1
    %p113 = por %p111, %p112
    %p114 = scmp.ne.s32.totalorder %s105, %s106
    %p115 = scmp.eq.s32.totalorder %s18, 0
    %p116 = por %p114, %p115
    %p117 = scmp.ne.s32.totalorder %s105, %s106
    %p118 = scmp.eq.s32.totalorder %s19, 1
    %p119 = por %p117, %p118
    %p121 = scmp.ne.s32.totalorder %s106, %s120
    %p122 = scmp.eq.s32.totalorder %s19, 0
    %p123 = por %p121, %p122
    %s125 = sadd.s32 %s124, 1
    %p128 = scmp.eq.s32.totalorder %s13, 1
    %p129 = scmp.ne.s32.totalorder %s124, %s126
    %p130 = scmp.eq.s32.totalorder %s13, 0
    %p131 = por %p129, %p130
    %p132 = scmp.ne.s32.totalorder %s124, %s126
    %p133 = scmp.eq.s32.totalorder %s18, 1
    %p134 = por %p132, %p133
    %p135 = scmp.ne.s32.totalorder %s126, %s127
    %p136 = scmp.eq.s32.totalorder %s18, 0
    %p137 = por %p135, %p136
    %p138 = scmp.ne.s32.totalorder %s126, %s127
    %p139 = scmp.eq.s32.totalorder %s19, 1
    %p140 = por %p138, %p139
    %p142 = scmp.ne.s32.totalorder %s127, %s141
    %p143 = scmp.eq.s32.totalorder %s19, 0
    %p144 = por %p142, %p143
    %s146 = sadd.s32 %s145, 1
    %p149 = scmp.eq.s32.totalorder %s13, 1
    %p150 = scmp.ne.s32.totalorder %s145, %s147
    %p151 = scmp.eq.s32.totalorder %s13, 0
    %p152 = por %p150, %p151
    %p153 = scmp.ne.s32.totalorder %s145, %s147
    %p154 = scmp.eq.s32.totalorder %s18, 1
    %p155 = por %p153, %p154
    %p156 = scmp.ne.s32.totalorder %s147, %s148
    %p157 = scmp.eq.s32.totalorder %s18, 0
    %p158 = por %p156, %p157
    %p159 = scmp.ne.s32.totalorder %s147, %s148
    %p160 = scmp.eq.s32.totalorder %s19, 1
    %p161 = por %p159, %p160
    %p163 = scmp.ne.s32.totalorder %s148, %s162
    %p164 = scmp.eq.s32.totalorder %s19, 0
    %p165 = por %p163, %p164
    %s167 = sadd.s32 %s166, 1
    %p170 = scmp.eq.s32.totalorder %s13, 1
    %p171 = scmp.ne.s32.totalorder %s166, %s168
    %p172 = scmp.eq.s32.totalorder %s13, 0
    %p173 = por %p171, %p172
    %p174 = scmp.ne.s32.totalorder %s166, %s168
    %p175 = scmp.eq.s32.totalorder %s18, 1
    %p176 = por %p174, %p175
    %p177 = scmp.ne.s32.totalorder %s168, %s169
    %p178 = scmp.eq.s32.totalorder %s18, 0
    %p179 = por %p177, %p178
    %p180 = scmp.ne.s32.totalorder %s168, %s169
    %p181 = scmp.eq.s32.totalorder %s19, 1
    %p182 = por %p180, %p181
    %p184 = scmp.ne.s32.totalorder %s169, %s183
    %p185 = scmp.eq.s32.totalorder %s19, 0
    %p186 = por %p184, %p185
    %s187 = ssub.s32 %s20, %s32
    %s188 = ssub.s32 %s21, %s28
    %s189 = sor.u32 %s187, %s188
    %p190 = scmp.eq.s32.totalorder %s189, 0
    %s192 = sadd.s32 %s191, 1
    %s193 = scalar_select %p190, %s191, %s192
    %p196 = pneg %p190
    %p197 = scmp.eq.s32.totalorder %s13, 1
    %p198 = por %p196, %p197
    %p199 = scmp.ne.s32.totalorder %s191, %s194
    %p200 = scmp.eq.s32.totalorder %s13, 0
    %p201 = por %p199, %p200
    %p202 = scmp.ne.s32.totalorder %s191, %s194
    %p203 = scmp.eq.s32.totalorder %s18, 1
    %p204 = por %p202, %p203
    %p205 = scmp.ne.s32.totalorder %s194, %s195
    %p206 = scmp.eq.s32.totalorder %s18, 0
    %p207 = por %p205, %p206
    %p208 = scmp.ne.s32.totalorder %s194, %s195
    %p209 = scmp.eq.s32.totalorder %s19, 1
    %p210 = por %p208, %p209
    %p212 = scmp.ne.s32.totalorder %s195, %s211
    %p213 = scmp.eq.s32.totalorder %s19, 0
    %p214 = por %p212, %p213
    %p215 = scmp.le.s32.totalorder 1, %s13
    %p216 = scmp.lt.s32.totalorder %s13, 3
    %p217 = pnand %p215, %p216
    %p218 = pneg %p217
    // Predicated region
    $region9: #{attention_forward.5} parent=5 // pred_check
      _
    $region10: #{attention_forward.5} parent=5 // pred_check_branch
      %220 = sbr.rel (%p217) target = $region12
    $region11: #{attention_forward.5} parent=5 // pred_region
      %s221 = ssub.s32 %s13, 1
      // Predicated region
      $region13: #{attention_forward.5} parent=11 // pred_check
        %p222 = pneg %p74
      $region14: #{attention_forward.5} parent=11 // pred_check_branch
        %224 = sbr.rel (%p222) target = $region16
      $region15: #{attention_forward.5} parent=11 // pred_region
        _
      $region16: #{attention_forward.5} parent=11 // pred_fallthru
        _
      // Predicated region
      $region17: #{attention_forward.5} parent=11 // pred_check
        %p225 = pneg %p95
      $region18: #{attention_forward.5} parent=11 // pred_check_branch
        %227 = sbr.rel (%p225) target = $region20
      $region19: #{attention_forward.5} parent=11 // pred_region
        _
      $region20: #{attention_forward.5} parent=11 // pred_fallthru
        _
      // Predicated region
      $region21: #{attention_forward.5} parent=11 // pred_check
        %p228 = pneg %p116
      $region22: #{attention_forward.5} parent=11 // pred_check_branch
        %230 = sbr.rel (%p228) target = $region24
      $region23: #{attention_forward.5} parent=11 // pred_region
        _
      $region24: #{attention_forward.5} parent=11 // pred_fallthru
        _
      // Predicated region
      $region25: #{attention_forward.5} parent=11 // pred_check
        %p231 = pneg %p137
      $region26: #{attention_forward.5} parent=11 // pred_check_branch
        %233 = sbr.rel (%p231) target = $region28
      $region27: #{attention_forward.5} parent=11 // pred_region
        _
      $region28: #{attention_forward.5} parent=11 // pred_fallthru
        _
      // Predicated region
      $region29: #{attention_forward.5} parent=11 // pred_check
        %p234 = pneg %p158
      $region30: #{attention_forward.5} parent=11 // pred_check_branch
        %236 = sbr.rel (%p234) target = $region32
      $region31: #{attention_forward.5} parent=11 // pred_region
        _
      $region32: #{attention_forward.5} parent=11 // pred_fallthru
        _
      // Predicated region
      $region33: #{attention_forward.5} parent=11 // pred_check
        %p237 = pneg %p179
      $region34: #{attention_forward.5} parent=11 // pred_check_branch
        %239 = sbr.rel (%p237) target = $region36
      $region35: #{attention_forward.5} parent=11 // pred_region
        _
      $region36: #{attention_forward.5} parent=11 // pred_fallthru
        _
    $region12: #{attention_forward.5} parent=5 // pred_fallthru
      _
    %p240 = scmp.lt.s32.totalorder %s13, 2
    // Predicated region
    $region37: #{attention_forward.5} parent=5 // pred_check
      %p241 = pneg %p240
    $region38: #{attention_forward.5} parent=5 // pred_check_branch
      %243 = sbr.rel (%p241) target = $region40
    $region39: #{attention_forward.5} parent=5 // pred_region
      // Predicated region
      $region41: #{attention_forward.5} parent=39 // pred_check
        %p244 = pneg %p47
      $region42: #{attention_forward.5} parent=39 // pred_check_branch
        %246 = sbr.rel (%p244) target = $region44
      $region43: #{attention_forward.5} parent=39 // pred_region
        %s247 = smul.u32 8, %s21
        %p248 = scmp.lt.s32.totalorder %s20, 1
        %s249 = scalar_select %p248, %s20, 1
        %p250 = scmp.lt.s32.totalorder %s247, 7
        %s251 = scalar_select %p250, %s247, 7
        %s252 = smul.addr %s251, 4
        %s253 = smul.addr %s249, 32
        %s254 = sadd.s32 %s252, %s253
        %s255 = smul.addr %s254, 8
        %s256 = scalar_lea.vmem %s0, %s255
        %s257 = smul.u32 8, %s21
      $region44: #{attention_forward.5} parent=39 // pred_fallthru
        _
    $region40: #{attention_forward.5} parent=5 // pred_fallthru
      _
    %p258 = scmp.le.s32.totalorder 1, %s13
    %p259 = scmp.lt.s32.totalorder %s13, 3
    %p260 = pnand %p258, %p259
    %p261 = pneg %p260
    // Predicated region
    $region45: #{attention_forward.5} parent=5 // pred_check
      _
    $region46: #{attention_forward.5} parent=5 // pred_check_branch
      %263 = sbr.rel (%p260) target = $region48
    $region47: #{attention_forward.5} parent=5 // pred_region
      %s264 = ssub.s32 %s13, 1
      %s265 = smul.u32 8, %s23
      %p266 = scmp.lt.s32.totalorder %s22, 1
      %s267 = scalar_select %p266, %s22, 1
      %p268 = scmp.lt.s32.totalorder %s265, 7
      %s269 = scalar_select %p268, %s265, 7
      %s270 = smul.addr %s269, 4
      %s271 = smul.addr %s267, 32
      %s272 = sadd.s32 %s270, %s271
      %s273 = smul.addr %s272, 8
      %s274 = scalar_lea.vmem %s0, %s273
      %p275 = pneg %p53
      %p276 = pneg %p50
      %p277 = pneg %p74
      %p278 = pneg %p71
      %p279 = pneg %p95
      %p280 = pneg %p92
      %p281 = pneg %p116
      %p282 = pneg %p113
      %p283 = pneg %p137
      %p284 = pneg %p134
      %p285 = pneg %p158
      %p286 = pneg %p155
      %p287 = pneg %p179
      %p288 = pneg %p176
      %p289 = pneg %p207
      %p290 = pneg %p204
      %s291 = smul.u32 8, %s23
      %p292 = scmp.lt.s32.totalorder %s22, 1
      %s293 = scalar_select %p292, %s22, 1
      %p294 = scmp.lt.s32.totalorder %s291, 7
      %s295 = scalar_select %p294, %s291, 7
      %s296 = smul.addr %s295, 2
      %s297 = smul.addr %s293, 16
      %s298 = sadd.s32 %s296, %s297
      %s299 = smul.addr %s298, 8
      %s300 = scalar_lea.vmem %s7, %s299
      %s301 = smul.u32 8, %s23
      %p302 = scmp.lt.s32.totalorder %s22, 1
      %s303 = scalar_select %p302, %s22, 1
      %p304 = scmp.lt.s32.totalorder %s301, 7
      %s305 = scalar_select %p304, %s301, 7
      %s306 = smul.addr %s305, 4
      %s307 = smul.addr %s303, 32
      %s308 = sadd.s32 %s306, %s307
      %s309 = smul.addr %s308, 8
      %s310 = scalar_lea.vmem %s0, %s309
      %s311 = smul.u32 8, %s23
      %s312 = smul.u32 8, %s23
      %p313 = scmp.lt.s32.totalorder %s22, 1
      %s314 = scalar_select %p313, %s22, 1
      %p315 = scmp.lt.s32.totalorder %s312, 7
      %s316 = scalar_select %p315, %s312, 7
      %s317 = smul.addr %s316, 2
      %s318 = smul.addr %s314, 16
      %s319 = sadd.s32 %s317, %s318
      %s320 = smul.addr %s319, 8
      %s321 = scalar_lea.vmem %s7, %s320
      %s322 = smul.u32 8, %s23
      %v324 = vld [vmem:[%s310] sm:$0xff]
      %v325 = vld [vmem:[%s310 + $0x8] sm:$0xff]
      %v326 = vld [vmem:[%s310 + $0x10] sm:$0xff]
      %v327 = vld [vmem:[%s310 + $0x18] sm:$0xff]
      %v328 = vld [vmem:[%s310 + $0x20] sm:$0xff]
      %v329 = vld [vmem:[%s310 + $0x28] sm:$0xff]
      %v330 = vld [vmem:[%s310 + $0x30] sm:$0xff]
      %v331 = vld [vmem:[%s310 + $0x38] sm:$0xff]
      %v332 = vld [vmem:[%s310 + $0x40] sm:$0xff]
      %v333 = vld [vmem:[%s310 + $0x48] sm:$0xff]
      %v334 = vld [vmem:[%s310 + $0x50] sm:$0xff]
      %v335 = vld [vmem:[%s310 + $0x58] sm:$0xff]
      %v336 = vld [vmem:[%s310 + $0x60] sm:$0xff]
      %v337 = vld [vmem:[%s310 + $0x68] sm:$0xff]
      %v338 = vld [vmem:[%s310 + $0x70] sm:$0xff]
      %v339 = vld [vmem:[%s310 + $0x78] sm:$0xff]
      %v340 = vld [vmem:[%s310 + $0x80] sm:$0xff]
      %v341 = vld [vmem:[%s310 + $0x88] sm:$0xff]
      %v342 = vld [vmem:[%s310 + $0x90] sm:$0xff]
      %v343 = vld [vmem:[%s310 + $0x98] sm:$0xff]
      %v344 = vld [vmem:[%s310 + $0xa0] sm:$0xff]
      %v345 = vld [vmem:[%s310 + $0xa8] sm:$0xff]
      %v346 = vld [vmem:[%s310 + $0xb0] sm:$0xff]
      %v347 = vld [vmem:[%s310 + $0xb8] sm:$0xff]
      %v348 = vld [vmem:[%s310 + $0xc0] sm:$0xff]
      %v349 = vld [vmem:[%s310 + $0xc8] sm:$0xff]
      %v350 = vld [vmem:[%s310 + $0xd0] sm:$0xff]
      %v351 = vld [vmem:[%s310 + $0xd8] sm:$0xff]
      %v352 = vld [vmem:[%s310 + $0xe0] sm:$0xff]
      %v353 = vld [vmem:[%s310 + $0xe8] sm:$0xff]
      %v354 = vld [vmem:[%s310 + $0xf0] sm:$0xff]
      %v355 = vld [vmem:[%s310 + $0xf8] sm:$0xff]
      %v356 = vld [vmem:[%s1] sm:$0xf]
      %v357 = vld [vmem:[%s1 + $0x4] sm:$0xf]
      %v358 = vld [vmem:[%s1 + $0x8] sm:$0xf]
      %v359 = vld [vmem:[%s1 + $0xc] sm:$0xf]
      %v360 = vld [vmem:[%s1 + $0x10] sm:$0xf]
      %v361 = vld [vmem:[%s1 + $0x14] sm:$0xf]
      %v362 = vld [vmem:[%s1 + $0x18] sm:$0xf]
      %v363 = vld [vmem:[%s1 + $0x1c] sm:$0xf]
      %v364 = vld [vmem:[%s1 + $0x20] sm:$0xf]
      %v365 = vld [vmem:[%s1 + $0x24] sm:$0xf]
      %v366 = vld [vmem:[%s1 + $0x28] sm:$0xf]
      %v367 = vld [vmem:[%s1 + $0x2c] sm:$0xf]
      %v368 = vld [vmem:[%s1 + $0x30] sm:$0xf]
      %v369 = vld [vmem:[%s1 + $0x34] sm:$0xf]
      %v370 = vld [vmem:[%s1 + $0x38] sm:$0xf]
      %v371 = vld [vmem:[%s1 + $0x3c] sm:$0xf]
      %v372 = vpack.c.bf16 %v328, %v324
      %v373 = vpack.c.bf16 %v336, %v332
      %v374 = vpack.c.bf16 %v344, %v340
      %v375 = vpack.c.bf16 %v352, %v348
      %v376 = vld [vmem:[%s1 + $0x40] sm:$0xf]
      %v377 = vld [vmem:[%s1 + $0x44] sm:$0xf]
      %v378 = vld [vmem:[%s1 + $0x48] sm:$0xf]
      %v379 = vld [vmem:[%s1 + $0x4c] sm:$0xf]
      %v380 = vld [vmem:[%s1 + $0x50] sm:$0xf]
      %v381 = vld [vmem:[%s1 + $0x54] sm:$0xf]
      %v382 = vld [vmem:[%s1 + $0x58] sm:$0xf]
      %v383 = vld [vmem:[%s1 + $0x5c] sm:$0xf]
      %v384 = vld [vmem:[%s1 + $0x60] sm:$0xf]
      %v385 = vld [vmem:[%s1 + $0x64] sm:$0xf]
      %v386 = vld [vmem:[%s1 + $0x68] sm:$0xf]
      %v387 = vld [vmem:[%s1 + $0x6c] sm:$0xf]
      %v388 = vld [vmem:[%s1 + $0x70] sm:$0xf]
      %v389 = vld [vmem:[%s1 + $0x74] sm:$0xf]
      %v390 = vld [vmem:[%s1 + $0x78] sm:$0xf]
      %v391 = vld [vmem:[%s1 + $0x7c] sm:$0xf]
      %v392 = vpack.c.bf16 %v329, %v325
      %v393 = vpack.c.bf16 %v337, %v333
      %v394 = vpack.c.bf16 %v345, %v341
      %v395 = vpack.c.bf16 %v353, %v349
      %v412 = vunpack.c.l.b16 %v376
      %v413 = vunpack.c.l.b16 %v377
      %v414 = vunpack.c.l.b16 %v378
      %v415 = vunpack.c.l.b16 %v379
      %v416 = vunpack.c.l.b16 %v380
      %v417 = vunpack.c.l.b16 %v381
      %v418 = vunpack.c.l.b16 %v382
      %v419 = vunpack.c.l.b16 %v383
      %v420 = vunpack.c.l.b16 %v384
      %v421 = vunpack.c.l.b16 %v385
      %v422 = vunpack.c.l.b16 %v386
      %v423 = vunpack.c.l.b16 %v387
      %v424 = vunpack.c.l.b16 %v388
      %v425 = vunpack.c.l.b16 %v389
      %v426 = vunpack.c.l.b16 %v390
      %v427 = vunpack.c.l.b16 %v391
      %v428 = vpack.c.b16 %v413, %v412
      %v429 = vpack.c.b16 %v415, %v414
      %v430 = vpack.c.b16 %v417, %v416
      %v431 = vpack.c.b16 %v419, %v418
      %v432 = vpack.c.b16 %v421, %v420
      %v433 = vpack.c.b16 %v423, %v422
      %v434 = vpack.c.b16 %v425, %v424
      %v435 = vpack.c.b16 %v427, %v426
      %444 = vmatprep.subr.bf16.mxu0 0
      %445 = vmatpush1.bf16.msra.mxu0 %v428
      %446 = vmatprep.subr.bf16.mxu0 0
      %447 = vmatpush1.bf16.msra.mxu0 %v429
      %448 = vmatprep.subr.bf16.mxu0 0
      %449 = vmatpush1.bf16.msra.mxu0 %v430
      %450 = vmatprep.subr.bf16.mxu0 0
      %451 = vmatpush1.bf16.msra.mxu0 %v431
      %452 = vmatprep.subr.bf16.mxu0 0
      %453 = vmatpush1.bf16.msra.mxu0 %v432
      %454 = vmatprep.subr.bf16.mxu0 0
      %455 = vmatpush1.bf16.msra.mxu0 %v433
      %456 = vmatprep.subr.bf16.mxu0 0
      %457 = vmatpush1.bf16.msra.mxu0 %v434
      %458 = vmatprep.subr.bf16.mxu0 0
      %459 = vmatpush1.bf16.msra.mxu0 %v435
      %460 = vmatprep.subr.bf16.mxu0 0
      %461 = vmatpush1.bf16.msra.mxu0 0
      %462 = vmatprep.subr.bf16.mxu0 0
      %463 = vmatpush1.bf16.msra.mxu0 0
      %464 = vmatprep.subr.bf16.mxu0 0
      %465 = vmatpush1.bf16.msra.mxu0 0
      %466 = vmatprep.subr.bf16.mxu0 0
      %467 = vmatpush1.bf16.msra.mxu0 0
      %468 = vmatprep.subr.bf16.mxu0 0
      %469 = vmatpush1.bf16.msra.mxu0 0
      %470 = vmatprep.subr.bf16.mxu0 0
      %471 = vmatpush1.bf16.msra.mxu0 0
      %472 = vmatprep.subr.bf16.mxu0 0
      %473 = vmatpush1.bf16.msra.mxu0 0
      %474 = vmatprep.subr.bf16.mxu0 0
      %475 = vmatpush1.bf16.msra.mxu0 0
      %476 = vmatprep.mubr.bf16.mxu0 0
      %477 = vmatmul.mubr.bf16.gmra.mrb[0].mxu0 %v392
      %v478 = vpop.f32.mrb[0].mxu0
      %v479 = vadd.f32 0.0, %v478
      %v480 = vpop.f32.mrb[0].mxu0
      %v481 = vpop.f32.mrb[0].mxu0
      %v482 = vadd.f32 0.0, %v481
      %v483 = vpop.f32.mrb[0].mxu0
      %484 = vmatprep.mubr.bf16.mxu0 0
      %485 = vmatmul.mubr.bf16.gmra.mrb[0].mxu0 %v393
      %v486 = vpop.f32.mrb[0].mxu0
      %v487 = vadd.f32 0.0, %v486
      %v488 = vpop.f32.mrb[0].mxu0
      %v489 = vpop.f32.mrb[0].mxu0
      %v490 = vadd.f32 0.0, %v489
      %v491 = vpop.f32.mrb[0].mxu0
      %492 = vmatprep.mubr.bf16.mxu0 0
      %493 = vmatmul.mubr.bf16.gmra.mrb[0].mxu0 %v394
      %v494 = vpop.f32.mrb[0].mxu0
      %v495 = vadd.f32 0.0, %v494
      %v496 = vpop.f32.mrb[0].mxu0
      %v497 = vpop.f32.mrb[0].mxu0
      %v498 = vadd.f32 0.0, %v497
      %v499 = vpop.f32.mrb[0].mxu0
      %500 = vmatprep.mubr.bf16.mxu0 0
      %501 = vmatmul.mubr.bf16.gmra.mrb[0].mxu0 %v395
      %v502 = vpop.f32.mrb[0].mxu0
      %v503 = vadd.f32 0.0, %v502
      %v504 = vpop.f32.mrb[0].mxu0
      %v505 = vpop.f32.mrb[0].mxu0
      %v506 = vadd.f32 0.0, %v505
      %v507 = vpop.f32.mrb[0].mxu0
      %508 = vdwg.mxu0
      %v525 = vunpack.c.l.b16 %v356
      %v526 = vunpack.c.l.b16 %v357
      %v527 = vunpack.c.l.b16 %v358
      %v528 = vunpack.c.l.b16 %v359
      %v529 = vunpack.c.l.b16 %v360
      %v530 = vunpack.c.l.b16 %v361
      %v531 = vunpack.c.l.b16 %v362
      %v532 = vunpack.c.l.b16 %v363
      %v533 = vunpack.c.l.b16 %v364
      %v534 = vunpack.c.l.b16 %v365
      %v535 = vunpack.c.l.b16 %v366
      %v536 = vunpack.c.l.b16 %v367
      %v537 = vunpack.c.l.b16 %v368
      %v538 = vunpack.c.l.b16 %v369
      %v539 = vunpack.c.l.b16 %v370
      %v540 = vunpack.c.l.b16 %v371
      %v541 = vpack.c.b16 %v526, %v525
      %v542 = vpack.c.b16 %v528, %v527
      %v543 = vpack.c.b16 %v530, %v529
      %v544 = vpack.c.b16 %v532, %v531
      %v545 = vpack.c.b16 %v534, %v533
      %v546 = vpack.c.b16 %v536, %v535
      %v547 = vpack.c.b16 %v538, %v537
      %v548 = vpack.c.b16 %v540, %v539
      %557 = vmatprep.subr.bf16.mxu0 0
      %558 = vmatpush1.bf16.msra.mxu0 %v541
      %559 = vmatprep.subr.bf16.mxu0 0
      %560 = vmatpush1.bf16.msra.mxu0 %v542
      %561 = vmatprep.subr.bf16.mxu0 0
      %562 = vmatpush1.bf16.msra.mxu0 %v543
      %563 = vmatprep.subr.bf16.mxu0 0
      %564 = vmatpush1.bf16.msra.mxu0 %v544
      %565 = vmatprep.subr.bf16.mxu0 0
      %566 = vmatpush1.bf16.msra.mxu0 %v545
      %567 = vmatprep.subr.bf16.mxu0 0
      %568 = vmatpush1.bf16.msra.mxu0 %v546
      %569 = vmatprep.subr.bf16.mxu0 0
      %570 = vmatpush1.bf16.msra.mxu0 %v547
      %571 = vmatprep.subr.bf16.mxu0 0
      %572 = vmatpush1.bf16.msra.mxu0 %v548
      %573 = vmatprep.subr.bf16.mxu0 0
      %574 = vmatpush1.bf16.msra.mxu0 0
      %575 = vmatprep.subr.bf16.mxu0 0
      %576 = vmatpush1.bf16.msra.mxu0 0
      %577 = vmatprep.subr.bf16.mxu0 0
      %578 = vmatpush1.bf16.msra.mxu0 0
      %579 = vmatprep.subr.bf16.mxu0 0
      %580 = vmatpush1.bf16.msra.mxu0 0
      %581 = vmatprep.subr.bf16.mxu0 0
      %582 = vmatpush1.bf16.msra.mxu0 0
      %583 = vmatprep.subr.bf16.mxu0 0
      %584 = vmatpush1.bf16.msra.mxu0 0
      %585 = vmatprep.subr.bf16.mxu0 0
      %586 = vmatpush1.bf16.msra.mxu0 0
      %587 = vmatprep.subr.bf16.mxu0 0
      %588 = vmatpush1.bf16.msra.mxu0 0
      %589 = vmatprep.mubr.bf16.mxu0 0
      %590 = vmatmul.mubr.bf16.gmra.mrb[0].mxu0 %v372
      %v591 = vpop.f32.mrb[0].mxu0
      %v592 = vadd.f32 %v479, %v591
      %v593 = vpop.f32.mrb[0].mxu0
      %v594 = vpop.f32.mrb[0].mxu0
      %v595 = vadd.f32 %v482, %v594
      %v596 = vpop.f32.mrb[0].mxu0
      %597 = vmatprep.mubr.bf16.mxu0 0
      %598 = vmatmul.mubr.bf16.gmra.mrb[0].mxu0 %v373
      %v599 = vpop.f32.mrb[0].mxu0
      %v600 = vadd.f32 %v487, %v599
      %v601 = vpop.f32.mrb[0].mxu0
      %v602 = vpop.f32.mrb[0].mxu0
      %v603 = vadd.f32 %v490, %v602
      %v604 = vpop.f32.mrb[0].mxu0
      %605 = vmatprep.mubr.bf16.mxu0 0
      %606 = vmatmul.mubr.bf16.gmra.mrb[0].mxu0 %v374
      %v607 = vpop.f32.mrb[0].mxu0
      %v608 = vadd.f32 %v495, %v607
      %v609 = vpop.f32.mrb[0].mxu0
      %v610 = vpop.f32.mrb[0].mxu0
      %v611 = vadd.f32 %v498, %v610
      %v612 = vpop.f32.mrb[0].mxu0
      %613 = vmatprep.mubr.bf16.mxu0 0
      %614 = vmatmul.mubr.bf16.gmra.mrb[0].mxu0 %v375
      %v615 = vpop.f32.mrb[0].mxu0
      %v616 = vadd.f32 %v503, %v615
      %v617 = vpop.f32.mrb[0].mxu0
      %v618 = vpop.f32.mrb[0].mxu0
      %v619 = vadd.f32 %v506, %v618
      %v620 = vpop.f32.mrb[0].mxu0
      %621 = vdwg.mxu0
      %v622 = vld [vmem:[%s1 + $0x80] sm:$0xf]
      %v623 = vld [vmem:[%s1 + $0x84] sm:$0xf]
      %v624 = vld [vmem:[%s1 + $0x88] sm:$0xf]
      %v625 = vld [vmem:[%s1 + $0x8c] sm:$0xf]
      %v626 = vld [vmem:[%s1 + $0x90] sm:$0xf]
      %v627 = vld [vmem:[%s1 + $0x94] sm:$0xf]
      %v628 = vld [vmem:[%s1 + $0x98] sm:$0xf]
      %v629 = vld [vmem:[%s1 + $0x9c] sm:$0xf]
      %v630 = vld [vmem:[%s1 + $0xa0] sm:$0xf]
      %v631 = vld [vmem:[%s1 + $0xa4] sm:$0xf]
      %v632 = vld [vmem:[%s1 + $0xa8] sm:$0xf]
      %v633 = vld [vmem:[%s1 + $0xac] sm:$0xf]
      %v634 = vld [vmem:[%s1 + $0xb0] sm:$0xf]
      %v635 = vld [vmem:[%s1 + $0xb4] sm:$0xf]
      %v636 = vld [vmem:[%s1 + $0xb8] sm:$0xf]
      %v637 = vld [vmem:[%s1 + $0xbc] sm:$0xf]
      %v638 = vpack.c.bf16 %v330, %v326
      %v639 = vpack.c.bf16 %v338, %v334
      %v640 = vpack.c.bf16 %v346, %v342
      %v641 = vpack.c.bf16 %v354, %v350
      %v658 = vunpack.c.l.b16 %v622
      %v659 = vunpack.c.l.b16 %v623
      %v660 = vunpack.c.l.b16 %v624
      %v661 = vunpack.c.l.b16 %v625
      %v662 = vunpack.c.l.b16 %v626
      %v663 = vunpack.c.l.b16 %v627
      %v664 = vunpack.c.l.b16 %v628
      %v665 = vunpack.c.l.b16 %v629
      %v666 = vunpack.c.l.b16 %v630
      %v667 = vunpack.c.l.b16 %v631
      %v668 = vunpack.c.l.b16 %v632
      %v669 = vunpack.c.l.b16 %v633
      %v670 = vunpack.c.l.b16 %v634
      %v671 = vunpack.c.l.b16 %v635
      %v672 = vunpack.c.l.b16 %v636
      %v673 = vunpack.c.l.b16 %v637
      %v674 = vpack.c.b16 %v659, %v658
      %v675 = vpack.c.b16 %v661, %v660
      %v676 = vpack.c.b16 %v663, %v662
      %v677 = vpack.c.b16 %v665, %v664
      %v678 = vpack.c.b16 %v667, %v666
      %v679 = vpack.c.b16 %v669, %v668
      %v680 = vpack.c.b16 %v671, %v670
      %v681 = vpack.c.b16 %v673, %v672
      %690 = vmatprep.subr.bf16.mxu0 0
      %691 = vmatpush1.bf16.msra.mxu0 %v674
      %692 = vmatprep.subr.bf16.mxu0 0
      %693 = vmatpush1.bf16.msra.mxu0 %v675
      %694 = vmatprep.subr.bf16.mxu0 0
      %695 = vmatpush1.bf16.msra.mxu0 %v676
      %696 = vmatprep.subr.bf16.mxu0 0
      %697 = vmatpush1.bf16.msra.mxu0 %v677
      %698 = vmatprep.subr.bf16.mxu0 0
      %699 = vmatpush1.bf16.msra.mxu0 %v678
      %700 = vmatprep.subr.bf16.mxu0 0
      %701 = vmatpush1.bf16.msra.mxu0 %v679
      %702 = vmatprep.subr.bf16.mxu0 0
      %703 = vmatpush1.bf16.msra.mxu0 %v680
      %704 = vmatprep.subr.bf16.mxu0 0
      %705 = vmatpush1.bf16.msra.mxu0 %v681
      %706 = vmatprep.subr.bf16.mxu0 0
      %707 = vmatpush1.bf16.msra.mxu0 0
      %708 = vmatprep.subr.bf16.mxu0 0
      %709 = vmatpush1.bf16.msra.mxu0 0
      %710 = vmatprep.subr.bf16.mxu0 0
      %711 = vmatpush1.bf16.msra.mxu0 0
      %712 = vmatprep.subr.bf16.mxu0 0
      %713 = vmatpush1.bf16.msra.mxu0 0
      %714 = vmatprep.subr.bf16.mxu0 0
      %715 = vmatpush1.bf16.msra.mxu0 0
      %716 = vmatprep.subr.bf16.mxu0 0
      %717 = vmatpush1.bf16.msra.mxu0 0
      %718 = vmatprep.subr.bf16.mxu0 0
      %719 = vmatpush1.bf16.msra.mxu0 0
      %720 = vmatprep.subr.bf16.mxu0 0
      %721 = vmatpush1.bf16.msra.mxu0 0
      %722 = vmatprep.mubr.bf16.mxu0 0
      %723 = vmatmul.mubr.bf16.gmra.mrb[0].mxu0 %v638
      %v724 = vpop.f32.mrb[0].mxu0
      %v725 = vadd.f32 0.0, %v724
      %v726 = vpop.f32.mrb[0].mxu0
      %v727 = vpop.f32.mrb[0].mxu0
      %v728 = vadd.f32 0.0, %v727
      %v729 = vpop.f32.mrb[0].mxu0
      %730 = vmatprep.mubr.bf16.mxu0 0
      %731 = vmatmul.mubr.bf16.gmra.mrb[0].mxu0 %v639
      %v732 = vpop.f32.mrb[0].mxu0
      %v733 = vadd.f32 0.0, %v732
      %v734 = vpop.f32.mrb[0].mxu0
      %v735 = vpop.f32.mrb[0].mxu0
      %v736 = vadd.f32 0.0, %v735
      %v737 = vpop.f32.mrb[0].mxu0
      %738 = vmatprep.mubr.bf16.mxu0 0
      %739 = vmatmul.mubr.bf16.gmra.mrb[0].mxu0 %v640
      %v740 = vpop.f32.mrb[0].mxu0
      %v741 = vadd.f32 0.0, %v740
      %v742 = vpop.f32.mrb[0].mxu0
      %v743 = vpop.f32.mrb[0].mxu0
      %v744 = vadd.f32 0.0, %v743
      %v745 = vpop.f32.mrb[0].mxu0
      %746 = vmatprep.mubr.bf16.mxu0 0
      %747 = vmatmul.mubr.bf16.gmra.mrb[0].mxu0 %v641
      %v748 = vpop.f32.mrb[0].mxu0
      %v749 = vadd.f32 0.0, %v748
      %v750 = vpop.f32.mrb[0].mxu0
      %v751 = vpop.f32.mrb[0].mxu0
      %v752 = vadd.f32 0.0, %v751
      %v753 = vpop.f32.mrb[0].mxu0
      %754 = vdwg.mxu0
      %v755 = vadd.f32 %v592, %v725
      %v756 = vadd.f32 %v595, %v728
      %v757 = vadd.f32 %v600, %v733
      %v758 = vadd.f32 %v603, %v736
      %v759 = vadd.f32 %v608, %v741
      %v760 = vadd.f32 %v611, %v744
      %v761 = vadd.f32 %v616, %v749
      %v762 = vadd.f32 %v619, %v752
      %v763 = vld [vmem:[%s1 + $0xc0] sm:$0xf]
      %v764 = vld [vmem:[%s1 + $0xc4] sm:$0xf]
      %v765 = vld [vmem:[%s1 + $0xc8] sm:$0xf]
      %v766 = vld [vmem:[%s1 + $0xcc] sm:$0xf]
      %v767 = vld [vmem:[%s1 + $0xd0] sm:$0xf]
      %v768 = vld [vmem:[%s1 + $0xd4] sm:$0xf]
      %v769 = vld [vmem:[%s1 + $0xd8] sm:$0xf]
      %v770 = vld [vmem:[%s1 + $0xdc] sm:$0xf]
      %v771 = vld [vmem:[%s1 + $0xe0] sm:$0xf]
      %v772 = vld [vmem:[%s1 + $0xe4] sm:$0xf]
      %v773 = vld [vmem:[%s1 + $0xe8] sm:$0xf]
      %v774 = vld [vmem:[%s1 + $0xec] sm:$0xf]
      %v775 = vld [vmem:[%s1 + $0xf0] sm:$0xf]
      %v776 = vld [vmem:[%s1 + $0xf4] sm:$0xf]
      %v777 = vld [vmem:[%s1 + $0xf8] sm:$0xf]
      %v778 = vld [vmem:[%s1 + $0xfc] sm:$0xf]
      %v779 = vpack.c.bf16 %v331, %v327
      %v780 = vpack.c.bf16 %v339, %v335
      %v781 = vpack.c.bf16 %v347, %v343
      %v782 = vpack.c.bf16 %v355, %v351
      %v799 = vunpack.c.l.b16 %v763
      %v800 = vunpack.c.l.b16 %v764
      %v801 = vunpack.c.l.b16 %v765
      %v802 = vunpack.c.l.b16 %v766
      %v803 = vunpack.c.l.b16 %v767
      %v804 = vunpack.c.l.b16 %v768
      %v805 = vunpack.c.l.b16 %v769
      %v806 = vunpack.c.l.b16 %v770
      %v807 = vunpack.c.l.b16 %v771
      %v808 = vunpack.c.l.b16 %v772
      %v809 = vunpack.c.l.b16 %v773
      %v810 = vunpack.c.l.b16 %v774
      %v811 = vunpack.c.l.b16 %v775
      %v812 = vunpack.c.l.b16 %v776
      %v813 = vunpack.c.l.b16 %v777
      %v814 = vunpack.c.l.b16 %v778
      %v815 = vpack.c.b16 %v800, %v799
      %v816 = vpack.c.b16 %v802, %v801
      %v817 = vpack.c.b16 %v804, %v803
      %v818 = vpack.c.b16 %v806, %v805
      %v819 = vpack.c.b16 %v808, %v807
      %v820 = vpack.c.b16 %v810, %v809
      %v821 = vpack.c.b16 %v812, %v811
      %v822 = vpack.c.b16 %v814, %v813
      %831 = vmatprep.subr.bf16.mxu0 0
      %832 = vmatpush1.bf16.msra.mxu0 %v815
      %833 = vmatprep.subr.bf16.mxu0 0
      %834 = vmatpush1.bf16.msra.mxu0 %v816
      %835 = vmatprep.subr.bf16.mxu0 0
      %836 = vmatpush1.bf16.msra.mxu0 %v817
      %837 = vmatprep.subr.bf16.mxu0 0
      %838 = vmatpush1.bf16.msra.mxu0 %v818
      %839 = vmatprep.subr.bf16.mxu0 0
      %840 = vmatpush1.bf16.msra.mxu0 %v819
      %841 = vmatprep.subr.bf16.mxu0 0
      %842 = vmatpush1.bf16.msra.mxu0 %v820
      %843 = vmatprep.subr.bf16.mxu0 0
      %844 = vmatpush1.bf16.msra.mxu0 %v821
      %845 = vmatprep.subr.bf16.mxu0 0
      %846 = vmatpush1.bf16.msra.mxu0 %v822
      %847 = vmatprep.subr.bf16.mxu0 0
      %848 = vmatpush1.bf16.msra.mxu0 0
      %849 = vmatprep.subr.bf16.mxu0 0
      %850 = vmatpush1.bf16.msra.mxu0 0
      %851 = vmatprep.subr.bf16.mxu0 0
      %852 = vmatpush1.bf16.msra.mxu0 0
      %853 = vmatprep.subr.bf16.mxu0 0
      %854 = vmatpush1.bf16.msra.mxu0 0
      %855 = vmatprep.subr.bf16.mxu0 0
      %856 = vmatpush1.bf16.msra.mxu0 0
      %857 = vmatprep.subr.bf16.mxu0 0
      %858 = vmatpush1.bf16.msra.mxu0 0
      %859 = vmatprep.subr.bf16.mxu0 0
      %860 = vmatpush1.bf16.msra.mxu0 0
      %861 = vmatprep.subr.bf16.mxu0 0
      %862 = vmatpush1.bf16.msra.mxu0 0
      %863 = vmatprep.mubr.bf16.mxu0 0
      %864 = vmatmul.mubr.bf16.gmra.mrb[0].mxu0 %v779
      %v865 = vpop.f32.mrb[0].mxu0
      %v866 = vadd.f32 0.0, %v865
      %v867 = vpop.f32.mrb[0].mxu0
      %v868 = vpop.f32.mrb[0].mxu0
      %v869 = vadd.f32 0.0, %v868
      %v870 = vpop.f32.mrb[0].mxu0
      %871 = vmatprep.mubr.bf16.mxu0 0
      %872 = vmatmul.mubr.bf16.gmra.mrb[0].mxu0 %v780
      %v873 = vpop.f32.mrb[0].mxu0
      %v874 = vadd.f32 0.0, %v873
      %v875 = vpop.f32.mrb[0].mxu0
      %v876 = vpop.f32.mrb[0].mxu0
      %v877 = vadd.f32 0.0, %v876
      %v878 = vpop.f32.mrb[0].mxu0
      %879 = vmatprep.mubr.bf16.mxu0 0
      %880 = vmatmul.mubr.bf16.gmra.mrb[0].mxu0 %v781
      %v881 = vpop.f32.mrb[0].mxu0
      %v882 = vadd.f32 0.0, %v881
      %v883 = vpop.f32.mrb[0].mxu0
      %v884 = vpop.f32.mrb[0].mxu0
      %v885 = vadd.f32 0.0, %v884
      %v886 = vpop.f32.mrb[0].mxu0
      %887 = vmatprep.mubr.bf16.mxu0 0
      %888 = vmatmul.mubr.bf16.gmra.mrb[0].mxu0 %v782
      %v889 = vpop.f32.mrb[0].mxu0
      %v890 = vadd.f32 0.0, %v889
      %v891 = vpop.f32.mrb[0].mxu0
      %v892 = vpop.f32.mrb[0].mxu0
      %v893 = vadd.f32 0.0, %v892
      %v894 = vpop.f32.mrb[0].mxu0
      %895 = vdwg.mxu0
      %v896 = vadd.f32 %v755, %v866
      %v897 = vadd.f32 %v756, %v869
      %v898 = vadd.f32 %v757, %v874
      %v899 = vadd.f32 %v758, %v877
      %v900 = vadd.f32 %v759, %v882
      %v901 = vadd.f32 %v760, %v885
      %v902 = vadd.f32 %v761, %v890
      %v903 = vadd.f32 %v762, %v893
      %v904 = vld [vmem:[%s2] sm:$0x1]
      %v906 = vlaneseq
      %v907 = vshrl.u32 %v906, 7
      %v908 = vsub.s32 0, %v907
      %v909 = vrot.slane %v904, %v908
      %v911 = vadd.f32 %v896, %v909
      %v912 = vadd.f32 %v897, %v909
      %v913 = vadd.f32 %v898, %v909
      %v914 = vadd.f32 %v899, %v909
      %v915 = vadd.f32 %v900, %v909
      %v916 = vadd.f32 %v901, %v909
      %v917 = vadd.f32 %v902, %v909
      %v918 = vadd.f32 %v903, %v909
      %919 = vadd.xlane.f32.xlu0 %v911
      %v920 = vpop.xlane.xlu0 %919
      %921 = vadd.xlane.f32.xlu0 %v912
      %v922 = vpop.xlane.xlu0 %921
      %923 = vadd.xlane.f32.xlu0 %v913
      %v924 = vpop.xlane.xlu0 %923
      %925 = vadd.xlane.f32.xlu0 %v914
      %v926 = vpop.xlane.xlu0 %925
      %927 = vadd.xlane.f32.xlu0 %v915
      %v928 = vpop.xlane.xlu0 %927
      %929 = vadd.xlane.f32.xlu0 %v916
      %v930 = vpop.xlane.xlu0 %929
      %931 = vadd.xlane.f32.xlu0 %v917
      %v932 = vpop.xlane.xlu0 %931
      %933 = vadd.xlane.f32.xlu0 %v918
      %v934 = vpop.xlane.xlu0 %933
      %v935 = vrcp.pop 128.0
      %v936 = vmul.f32 %v920, %v935
      %v937 = vmul.f32 %v922, %v935
      %v938 = vmul.f32 %v924, %v935
      %v939 = vmul.f32 %v926, %v935
      %v940 = vmul.f32 %v928, %v935
      %v941 = vmul.f32 %v930, %v935
      %v942 = vmul.f32 %v932, %v935
      %v943 = vmul.f32 %v934, %v935
      %v944 = vsub.f32 %v911, %v936
      %v945 = vsub.f32 %v912, %v937
      %v946 = vsub.f32 %v913, %v938
      %v947 = vsub.f32 %v914, %v939
      %v948 = vsub.f32 %v915, %v940
      %v949 = vsub.f32 %v916, %v941
      %v950 = vsub.f32 %v917, %v942
      %v951 = vsub.f32 %v918, %v943
      %v952 = vmul.f32 %v944, %v944
      %v953 = vmul.f32 %v945, %v945
      %v954 = vmul.f32 %v946, %v946
      %v955 = vmul.f32 %v947, %v947
      %v956 = vmul.f32 %v948, %v948
      %v957 = vmul.f32 %v949, %v949
      %v958 = vmul.f32 %v950, %v950
      %v959 = vmul.f32 %v951, %v951
      %960 = vadd.xlane.f32.xlu0 %v952
      %v961 = vpop.xlane.xlu0 %960
      %962 = vadd.xlane.f32.xlu0 %v953
      %v963 = vpop.xlane.xlu0 %962
      %964 = vadd.xlane.f32.xlu0 %v954
      %v965 = vpop.xlane.xlu0 %964
      %966 = vadd.xlane.f32.xlu0 %v955
      %v967 = vpop.xlane.xlu0 %966
      %968 = vadd.xlane.f32.xlu0 %v956
      %v969 = vpop.xlane.xlu0 %968
      %970 = vadd.xlane.f32.xlu0 %v957
      %v971 = vpop.xlane.xlu0 %970
      %972 = vadd.xlane.f32.xlu0 %v958
      %v973 = vpop.xlane.xlu0 %972
      %974 = vadd.xlane.f32.xlu0 %v959
      %v975 = vpop.xlane.xlu0 %974
      %v976 = vmul.f32 %v961, %v935
      %v977 = vmul.f32 %v963, %v935
      %v978 = vmul.f32 %v965, %v935
      %v979 = vmul.f32 %v967, %v935
      %v980 = vmul.f32 %v969, %v935
      %v981 = vmul.f32 %v971, %v935
      %v982 = vmul.f32 %v973, %v935
      %v983 = vmul.f32 %v975, %v935
      %v984 = vadd.f32 %v976, 1e-05
      %v985 = vadd.f32 %v977, 1e-05
      %v986 = vadd.f32 %v978, 1e-05
      %v987 = vadd.f32 %v979, 1e-05
      %v988 = vadd.f32 %v980, 1e-05
      %v989 = vadd.f32 %v981, 1e-05
      %v990 = vadd.f32 %v982, 1e-05
      %v991 = vadd.f32 %v983, 1e-05
      %v992 = vrsqrt.pop %v984
      %v993 = vrsqrt.pop %v985
      %v994 = vrsqrt.pop %v986
      %v995 = vrsqrt.pop %v987
      %v996 = vrsqrt.pop %v988
      %v997 = vrsqrt.pop %v989
      %v998 = vrsqrt.pop %v990
      %v999 = vrsqrt.pop %v991
      %v1000 = vmul.f32 %v944, %v992
      %v1001 = vmul.f32 %v945, %v993
      %v1002 = vmul.f32 %v946, %v994
      %v1003 = vmul.f32 %v947, %v995
      %v1004 = vmul.f32 %v948, %v996
      %v1005 = vmul.f32 %v949, %v997
      %v1006 = vmul.f32 %v950, %v998
      %v1007 = vmul.f32 %v951, %v999
      %v1008 = vld [vmem:[%s3] sm:$0x1]
      %v1010 = vlaneseq
      %v1011 = vshrl.u32 %v1010, 7
      %v1012 = vsub.s32 0, %v1011
      %v1013 = vrot.slane %v1008, %v1012
      %v1015 = vmul.f32 %v1000, %v1013
      %v1016 = vmul.f32 %v1001, %v1013
      %v1017 = vmul.f32 %v1002, %v1013
      %v1018 = vmul.f32 %v1003, %v1013
      %v1019 = vmul.f32 %v1004, %v1013
      %v1020 = vmul.f32 %v1005, %v1013
      %v1021 = vmul.f32 %v1006, %v1013
      %v1022 = vmul.f32 %v1007, %v1013
      %v1023 = vld [vmem:[%s4] sm:$0x1]
      %v1025 = vlaneseq
      %v1026 = vshrl.u32 %v1025, 7
      %v1027 = vsub.s32 0, %v1026
      %v1028 = vrot.slane %v1023, %v1027
      %v1030 = vadd.f32 %v1015, %v1028
      %v1031 = vadd.f32 %v1016, %v1028
      %v1032 = vadd.f32 %v1017, %v1028
      %v1033 = vadd.f32 %v1018, %v1028
      %v1034 = vadd.f32 %v1019, %v1028
      %v1035 = vadd.f32 %v1020, %v1028
      %v1036 = vadd.f32 %v1021, %v1028
      %v1037 = vadd.f32 %v1022, %v1028
      %v1038 = vpack.c.bf16 %v1031, %v1030
      %v1039 = vpack.c.bf16 %v1033, %v1032
      %v1040 = vpack.c.bf16 %v1035, %v1034
      %v1041 = vpack.c.bf16 %v1037, %v1036
      %v1042 = vld [vmem:[%s5] sm:$0xff]
      %v1043 = vld [vmem:[%s5 + $0x8] sm:$0xff]
      %v1044 = vld [vmem:[%s5 + $0x10] sm:$0xff]
      %v1045 = vld [vmem:[%s5 + $0x18] sm:$0xff]
      %v1046 = vld [vmem:[%s5 + $0x20] sm:$0xff]
      %v1047 = vld [vmem:[%s5 + $0x28] sm:$0xff]
      %v1048 = vld [vmem:[%s5 + $0x30] sm:$0xff]
      %v1049 = vld [vmem:[%s5 + $0x38] sm:$0xff]
      %v1050 = vld [vmem:[%s5 + $0x40] sm:$0xff]
      %v1051 = vld [vmem:[%s5 + $0x48] sm:$0xff]
      %v1052 = vld [vmem:[%s5 + $0x50] sm:$0xff]
      %v1053 = vld [vmem:[%s5 + $0x58] sm:$0xff]
      %v1054 = vld [vmem:[%s5 + $0x60] sm:$0xff]
      %v1055 = vld [vmem:[%s5 + $0x68] sm:$0xff]
      %v1056 = vld [vmem:[%s5 + $0x70] sm:$0xff]
      %v1057 = vld [vmem:[%s5 + $0x78] sm:$0xff]
      %v1058 = vld [vmem:[%s6] sm:$0x3]
      %v1060 = vlaneseq
      %v1061 = vshrl.u32 %v1060, 7
      %v1062 = vsub.s32 0, %v1061
      %v1063 = vrot.slane %v1058, %v1062
      %v1064 = vlaneseq
      %v1065 = vshrl.u32 %v1064, 7
      %v1066 = vsub.s32 1, %v1065
      %v1067 = vrot.slane %v1058, %v1066
      %v1086 = vunpack.c.l.b16 %v1042
      %v1087 = vunpack.c.h.b16 %v1042
      %v1088 = vunpack.c.l.b16 %v1043
      %v1089 = vunpack.c.h.b16 %v1043
      %v1090 = vunpack.c.l.b16 %v1044
      %v1091 = vunpack.c.h.b16 %v1044
      %v1092 = vunpack.c.l.b16 %v1045
      %v1093 = vunpack.c.h.b16 %v1045
      %v1094 = vunpack.c.l.b16 %v1046
      %v1095 = vunpack.c.h.b16 %v1046
      %v1096 = vunpack.c.l.b16 %v1047
      %v1097 = vunpack.c.h.b16 %v1047
      %v1098 = vunpack.c.l.b16 %v1048
      %v1099 = vunpack.c.h.b16 %v1048
      %v1100 = vunpack.c.l.b16 %v1049
      %v1101 = vunpack.c.h.b16 %v1049
      %v1102 = vunpack.c.l.b16 %v1050
      %v1103 = vunpack.c.h.b16 %v1050
      %v1104 = vunpack.c.l.b16 %v1051
      %v1105 = vunpack.c.h.b16 %v1051
      %v1106 = vunpack.c.l.b16 %v1052
      %v1107 = vunpack.c.h.b16 %v1052
      %v1108 = vunpack.c.l.b16 %v1053
      %v1109 = vunpack.c.h.b16 %v1053
      %v1110 = vunpack.c.l.b16 %v1054
      %v1111 = vunpack.c.h.b16 %v1054
      %v1112 = vunpack.c.l.b16 %v1055
      %v1113 = vunpack.c.h.b16 %v1055
      %v1114 = vunpack.c.l.b16 %v1056
      %v1115 = vunpack.c.h.b16 %v1056
      %v1116 = vunpack.c.l.b16 %v1057
      %v1117 = vunpack.c.h.b16 %v1057
      %v1118 = vpack.c.b16 %v1088, %v1086
      %v1119 = vpack.c.b16 %v1089, %v1087
      %v1120 = vpack.c.b16 %v1092, %v1090
      %v1121 = vpack.c.b16 %v1093, %v1091
      %v1122 = vpack.c.b16 %v1096, %v1094
      %v1123 = vpack.c.b16 %v1097, %v1095
      %v1124 = vpack.c.b16 %v1100, %v1098
      %v1125 = vpack.c.b16 %v1101, %v1099
      %v1126 = vpack.c.b16 %v1104, %v1102
      %v1127 = vpack.c.b16 %v1105, %v1103
      %v1128 = vpack.c.b16 %v1108, %v1106
      %v1129 = vpack.c.b16 %v1109, %v1107
      %v1130 = vpack.c.b16 %v1112, %v1110
      %v1131 = vpack.c.b16 %v1113, %v1111
      %v1132 = vpack.c.b16 %v1116, %v1114
      %v1133 = vpack.c.b16 %v1117, %v1115
      %1150 = vmatprep.subr.bf16.mxu0 %v1119
      %1151 = vmatpush1.bf16.msra.mxu0 %v1118
      %1152 = vmatprep.subr.bf16.mxu0 %v1121
      %1153 = vmatpush1.bf16.msra.mxu0 %v1120
      %1154 = vmatprep.subr.bf16.mxu0 %v1123
      %1155 = vmatpush1.bf16.msra.mxu0 %v1122
      %1156 = vmatprep.subr.bf16.mxu0 %v1125
      %1157 = vmatpush1.bf16.msra.mxu0 %v1124
      %1158 = vmatprep.subr.bf16.mxu0 %v1127
      %1159 = vmatpush1.bf16.msra.mxu0 %v1126
      %1160 = vmatprep.subr.bf16.mxu0 %v1129
      %1161 = vmatpush1.bf16.msra.mxu0 %v1128
      %1162 = vmatprep.subr.bf16.mxu0 %v1131
      %1163 = vmatpush1.bf16.msra.mxu0 %v1130
      %1164 = vmatprep.subr.bf16.mxu0 %v1133
      %1165 = vmatpush1.bf16.msra.mxu0 %v1132
      %1166 = vmatprep.subr.bf16.mxu0 0
      %1167 = vmatpush1.bf16.msra.mxu0 0
      %1168 = vmatprep.subr.bf16.mxu0 0
      %1169 = vmatpush1.bf16.msra.mxu0 0
      %1170 = vmatprep.subr.bf16.mxu0 0
      %1171 = vmatpush1.bf16.msra.mxu0 0
      %1172 = vmatprep.subr.bf16.mxu0 0
      %1173 = vmatpush1.bf16.msra.mxu0 0
      %1174 = vmatprep.subr.bf16.mxu0 0
      %1175 = vmatpush1.bf16.msra.mxu0 0
      %1176 = vmatprep.subr.bf16.mxu0 0
      %1177 = vmatpush1.bf16.msra.mxu0 0
      %1178 = vmatprep.subr.bf16.mxu0 0
      %1179 = vmatpush1.bf16.msra.mxu0 0
      %1180 = vmatprep.subr.bf16.mxu0 0
      %1181 = vmatpush1.bf16.msra.mxu0 0
      %1182 = vmatprep.mubr.bf16.mxu0 0
      %1183 = vmatmul.mubr.bf16.gmra.mrb[0].mxu0 %v1038
      %v1184 = vpop.f32.mrb[0].mxu0
      %v1185 = vadd.f32 %v1063, %v1184
      %v1186 = vpop.f32.mrb[0].mxu0
      %v1187 = vadd.f32 %v1067, %v1186
      %v1188 = vpop.f32.mrb[0].mxu0
      %v1189 = vadd.f32 %v1063, %v1188
      %v1190 = vpop.f32.mrb[0].mxu0
      %v1191 = vadd.f32 %v1067, %v1190
      %1192 = vmatprep.mubr.bf16.mxu0 0
      %1193 = vmatmul.mubr.bf16.gmra.mrb[0].mxu0 %v1039
      %v1194 = vpop.f32.mrb[0].mxu0
      %v1195 = vadd.f32 %v1063, %v1194
      %v1196 = vpop.f32.mrb[0].mxu0
      %v1197 = vadd.f32 %v1067, %v1196
      %v1198 = vpop.f32.mrb[0].mxu0
      %v1199 = vadd.f32 %v1063, %v1198
      %v1200 = vpop.f32.mrb[0].mxu0
      %v1201 = vadd.f32 %v1067, %v1200
      %1202 = vmatprep.mubr.bf16.mxu0 0
      %1203 = vmatmul.mubr.bf16.gmra.mrb[0].mxu0 %v1040
      %v1204 = vpop.f32.mrb[0].mxu0
      %v1205 = vadd.f32 %v1063, %v1204
      %v1206 = vpop.f32.mrb[0].mxu0
      %v1207 = vadd.f32 %v1067, %v1206
      %v1208 = vpop.f32.mrb[0].mxu0
      %v1209 = vadd.f32 %v1063, %v1208
      %v1210 = vpop.f32.mrb[0].mxu0
      %v1211 = vadd.f32 %v1067, %v1210
      %1212 = vmatprep.mubr.bf16.mxu0 0
      %1213 = vmatmul.mubr.bf16.gmra.mrb[0].mxu0 %v1041
      %v1214 = vpop.f32.mrb[0].mxu0
      %v1215 = vadd.f32 %v1063, %v1214
      %v1216 = vpop.f32.mrb[0].mxu0
      %v1217 = vadd.f32 %v1067, %v1216
      %v1218 = vpop.f32.mrb[0].mxu0
      %v1219 = vadd.f32 %v1063, %v1218
      %v1220 = vpop.f32.mrb[0].mxu0
      %v1221 = vadd.f32 %v1067, %v1220
      %1222 = vdwg.mxu0
      %1223 = vst [vmem:[%s321] sm:$0xff] %v1185
      %1224 = vst [vmem:[%s321 + $0x8] sm:$0xff] %v1187
      %1225 = vst [vmem:[%s321 + $0x10] sm:$0xff] %v1189
      %1226 = vst [vmem:[%s321 + $0x18] sm:$0xff] %v1191
      %1227 = vst [vmem:[%s321 + $0x20] sm:$0xff] %v1195
      %1228 = vst [vmem:[%s321 + $0x28] sm:$0xff] %v1197
      %1229 = vst [vmem:[%s321 + $0x30] sm:$0xff] %v1199
      %1230 = vst [vmem:[%s321 + $0x38] sm:$0xff] %v1201
      %1231 = vst [vmem:[%s321 + $0x40] sm:$0xff] %v1205
      %1232 = vst [vmem:[%s321 + $0x48] sm:$0xff] %v1207
      %1233 = vst [vmem:[%s321 + $0x50] sm:$0xff] %v1209
      %1234 = vst [vmem:[%s321 + $0x58] sm:$0xff] %v1211
      %1235 = vst [vmem:[%s321 + $0x60] sm:$0xff] %v1215
      %1236 = vst [vmem:[%s321 + $0x68] sm:$0xff] %v1217
      %1237 = vst [vmem:[%s321 + $0x70] sm:$0xff] %v1219
      %1238 = vst [vmem:[%s321 + $0x78] sm:$0xff] %v1221
      %s1239 = smul.u32 8, %s23
      %p1240 = scmp.lt.s32.totalorder %s22, 1
      %s1241 = scalar_select %p1240, %s22, 1
      %p1242 = scmp.lt.s32.totalorder %s1239, 7
      %s1243 = scalar_select %p1242, %s1239, 7
      %s1244 = smul.addr %s1243, 2
      %s1245 = smul.addr %s1241, 16
      %s1246 = sadd.s32 %s1244, %s1245
      %s1247 = smul.addr %s1246, 8
      %s1248 = scalar_lea.vmem %s7, %s1247
      // Predicated region
      $region49: #{attention_forward.5} parent=47 // pred_check
        %p1249 = pneg %p204
      $region50: #{attention_forward.5} parent=47 // pred_check_branch
        %1251 = sbr.rel (%p1249) target = $region52
      $region51: #{attention_forward.5} parent=47 // pred_region
        %s1252 = smul.u32 8, %s23
      $region52: #{attention_forward.5} parent=47 // pred_fallthru
        _
    $region48: #{attention_forward.5} parent=5 // pred_fallthru
      _
    %p1253 = scmp.le.s32.totalorder 2, %s13
    // Predicated region
    $region53: #{attention_forward.5} parent=5 // pred_check
      %p1254 = pneg %p1253
    $region54: #{attention_forward.5} parent=5 // pred_check_branch
      %1256 = sbr.rel (%p1254) target = $region56
    $region55: #{attention_forward.5} parent=5 // pred_region
      %s1257 = ssub.s32 %s13, 2
      // Predicated region
      $region57: #{attention_forward.5} parent=55 // pred_check
        %p1258 = pneg %p210
      $region58: #{attention_forward.5} parent=55 // pred_check_branch
        %1260 = sbr.rel (%p1258) target = $region60
      $region59: #{attention_forward.5} parent=55 // pred_region
        %s1261 = smul.u32 8, %s25
        %p1262 = scmp.lt.s32.totalorder %s24, 1
        %s1263 = scalar_select %p1262, %s24, 1
        %p1264 = scmp.lt.s32.totalorder %s1261, 7
        %s1265 = scalar_select %p1264, %s1261, 7
        %s1266 = smul.addr %s1265, 2
        %s1267 = smul.addr %s1263, 16
        %s1268 = sadd.s32 %s1266, %s1267
        %s1269 = smul.addr %s1268, 8
        %s1270 = scalar_lea.vmem %s7, %s1269
      $region60: #{attention_forward.5} parent=55 // pred_fallthru
        _
    $region56: #{attention_forward.5} parent=5 // pred_fallthru
      _
  $region6: #{attention_forward.5} parent=0 // loop_footer
    %s17 = sadd.s32 1, %s13
  $region7: #{attention_forward.5} parent=0 // loop_footer_branch
    %12 = sbr.rel target = $region3
  $region8: #{attention_forward.5} parent=0 // loop_exit
    _

// kernel: attention_forward.6
$region0: #{attention_forward.6}
  #allocation0 [shape = 'u32[]', space=smem, size = 0x4, offset = 0x4, fixed_abs, tag = 'smem constant byte address 0x4 - core index']
  #allocation1 [shape = 'u32[144,128]{1,0:T(1,128)}', space=vmem, size = 0x12000, scoped, tag = 'internal scratch']
  %s0 = inlined_call_operand.vmem [shape: f32[2,256,128], index: 0, kind: input, shape index: {}]
  %s1 = inlined_call_operand.vmem [shape: f32[2,64,256], index: 1, kind: input, shape index: {}, may-alias: {1,2}]
  %s2 = inlined_call_operand.vmem [shape: f32[2,64,256], index: 2, kind: input, shape index: {}, may-alias: {1,2}]
  %s3 = inlined_call_operand.vmem [shape: f32[2,256,128], index: 3, kind: output, shape index: {}]
  %s4 = sld [smem:[#allocation0]]
  $region121: #{attention_forward.6} parent=0
    _
  %s6 = ssub.s32 1, %s4
  %s7 = scalar_select 0, %s6, %s4
  $region1: #{attention_forward.6} parent=0
    #allocation2 [shape = 'u8[65536]{0}', space=vmem, size = 0x10000, scoped, tag = 'input window, operand 1']
    #allocation3 [shape = 'u8[65536]{0}', space=vmem, size = 0x10000, scoped, tag = 'input window, operand 2']
    loop: start=0, step=1, limit=6
    $region2: #{attention_forward.6} parent=1 // loop_pre_header
      _
    $region3: #{attention_forward.6} parent=1 // loop_header
      %s9 = sphi 0, %s13
      %p10 = scmp.ge.s32.totalorder %s9, 6
      %s16 = sphi 0, %s28
      %s17 = sphi 0, %s24
      %s18 = sphi 0, %s16
      %s19 = sphi 0, %s17
      %s20 = sphi 0, %s18
      %s21 = sphi 0, %s19
      %s33 = sphi 0, %s35
      %s36 = sphi 0, %s33
      %s37 = sphi 0, %s36
      %s53 = sphi 0, %s37
      %s59 = sphi 0, %s61
      %s62 = sphi 0, %s59
      %s63 = sphi 0, %s62
      %s79 = sphi 0, %s63
      %s85 = sphi 0, %s87
      %s88 = sphi 0, %s85
      %s89 = sphi 0, %s88
      %s105 = sphi 0, %s89
      %s113 = sphi 0, %s115
      %s116 = sphi 0, %s113
      %s117 = sphi 0, %s116
      %s133 = sphi 0, %s117
    $region4: #{attention_forward.6} parent=1 // loop_header_branch
      %12 = sbr.rel (%p10) target = $region8
    $region5: #{attention_forward.6} parent=1 // loop_body
      %s14 = ssub.s32 %s9, 1
      %s15 = ssub.s32 %s9, 2
      %s22 = sadd.s32 1, %s17
      %p23 = scmp.ge.s32.totalorder %s22, 2
      %s24 = scalar_select %p23, 0, %s22
      %s25 = sadd.s32 1, %s16
      %s26 = scalar_select %p23, %s25, %s16
      %p27 = scmp.ge.s32.totalorder %s26, 2
      %s28 = scalar_select %p27, 0, %s26
      %s29 = ssub.s32 %s16, %s28
      %s30 = ssub.s32 %s17, %s24
      %s31 = sor.u32 %s29, %s30
      %p32 = scmp.eq.s32.totalorder %s31, 0
      %s34 = sadd.s32 %s33, 1
      %s35 = scalar_select %p32, %s33, %s34
      %p38 = pneg %p32
      %p39 = scmp.eq.s32.totalorder %s9, 3
      %p40 = por %p38, %p39
      %p41 = scmp.ne.s32.totalorder %s33, %s36
      %p42 = scmp.eq.s32.totalorder %s9, 0
      %p43 = por %p41, %p42
      %p44 = scmp.ne.s32.totalorder %s33, %s36
      %p45 = scmp.eq.s32.totalorder %s14, 3
      %p46 = por %p44, %p45
      %p47 = scmp.ne.s32.totalorder %s36, %s37
      %p48 = scmp.eq.s32.totalorder %s14, 0
      %p49 = por %p47, %p48
      %p50 = scmp.ne.s32.totalorder %s36, %s37
      %p51 = scmp.eq.s32.totalorder %s15, 3
      %p52 = por %p50, %p51
      %p54 = scmp.ne.s32.totalorder %s37, %s53
      %p55 = scmp.eq.s32.totalorder %s15, 0
      %p56 = por %p54, %p55
      %s57 = ssub.s32 %s16, %s28
      %p58 = scmp.eq.s32.totalorder %s57, 0
      %s60 = sadd.s32 %s59, 1
      %s61 = scalar_select %p58, %s59, %s60
      %p64 = pneg %p58
      %p65 = scmp.eq.s32.totalorder %s9, 3
      %p66 = por %p64, %p65
      %p67 = scmp.ne.s32.totalorder %s59, %s62
      %p68 = scmp.eq.s32.totalorder %s9, 0
      %p69 = por %p67, %p68
      %p70 = scmp.ne.s32.totalorder %s59, %s62
      %p71 = scmp.eq.s32.totalorder %s14, 3
      %p72 = por %p70, %p71
      %p73 = scmp.ne.s32.totalorder %s62, %s63
      %p74 = scmp.eq.s32.totalorder %s14, 0
      %p75 = por %p73, %p74
      %p76 = scmp.ne.s32.totalorder %s62, %s63
      %p77 = scmp.eq.s32.totalorder %s15, 3
      %p78 = por %p76, %p77
      %p80 = scmp.ne.s32.totalorder %s63, %s79
      %p81 = scmp.eq.s32.totalorder %s15, 0
      %p82 = por %p80, %p81
      %s83 = ssub.s32 %s16, %s28
      %p84 = scmp.eq.s32.totalorder %s83, 0
      %s86 = sadd.s32 %s85, 1
      %s87 = scalar_select %p84, %s85, %s86
      %p90 = pneg %p84
      %p91 = scmp.eq.s32.totalorder %s9, 3
      %p92 = por %p90, %p91
      %p93 = scmp.ne.s32.totalorder %s85, %s88
      %p94 = scmp.eq.s32.totalorder %s9, 0
      %p95 = por %p93, %p94
      %p96 = scmp.ne.s32.totalorder %s85, %s88
      %p97 = scmp.eq.s32.totalorder %s14, 3
      %p98 = por %p96, %p97
      %p99 = scmp.ne.s32.totalorder %s88, %s89
      %p100 = scmp.eq.s32.totalorder %s14, 0
      %p101 = por %p99, %p100
      %p102 = scmp.ne.s32.totalorder %s88, %s89
      %p103 = scmp.eq.s32.totalorder %s15, 3
      %p104 = por %p102, %p103
      %p106 = scmp.ne.s32.totalorder %s89, %s105
      %p107 = scmp.eq.s32.totalorder %s15, 0
      %p108 = por %p106, %p107
      %s109 = ssub.s32 %s16, %s28
      %s110 = ssub.s32 %s17, %s24
      %s111 = sor.u32 %s109, %s110
      %p112 = scmp.eq.s32.totalorder %s111, 0
      %s114 = sadd.s32 %s113, 1
      %s115 = scalar_select %p112, %s113, %s114
      %p118 = pneg %p112
      %p119 = scmp.eq.s32.totalorder %s9, 3
      %p120 = por %p118, %p119
      %p121 = scmp.ne.s32.totalorder %s113, %s116
      %p122 = scmp.eq.s32.totalorder %s9, 0
      %p123 = por %p121, %p122
      %p124 = scmp.ne.s32.totalorder %s113, %s116
      %p125 = scmp.eq.s32.totalorder %s14, 3
      %p126 = por %p124, %p125
      %p127 = scmp.ne.s32.totalorder %s116, %s117
      %p128 = scmp.eq.s32.totalorder %s14, 0
      %p129 = por %p127, %p128
      %p130 = scmp.ne.s32.totalorder %s116, %s117
      %p131 = scmp.eq.s32.totalorder %s15, 3
      %p132 = por %p130, %p131
      %p134 = scmp.ne.s32.totalorder %s117, %s133
      %p135 = scmp.eq.s32.totalorder %s15, 0
      %p136 = por %p134, %p135
      %p137 = scmp.le.s32.totalorder 1, %s9
      %p138 = scmp.lt.s32.totalorder %s9, 5
      %p139 = pnand %p137, %p138
      %p140 = pneg %p139
      // Predicated region
      $region9: #{attention_forward.6} parent=5 // pred_check
        _
      $region10: #{attention_forward.6} parent=5 // pred_check_branch
        %142 = sbr.rel (%p139) target = $region12
      $region11: #{attention_forward.6} parent=5 // pred_region
        %s143 = ssub.s32 %s9, 1
      $region12: #{attention_forward.6} parent=5 // pred_fallthru
        _
      %p144 = scmp.lt.s32.totalorder %s9, 4
      // Predicated region
      $region13: #{attention_forward.6} parent=5 // pred_check
        %p145 = pneg %p144
      $region14: #{attention_forward.6} parent=5 // pred_check_branch
        %147 = sbr.rel (%p145) target = $region16
      $region15: #{attention_forward.6} parent=5 // pred_region
        // Predicated region
        $region17: #{attention_forward.6} parent=15 // pred_check
          %p148 = pneg %p43
        $region18: #{attention_forward.6} parent=15 // pred_check_branch
          %150 = sbr.rel (%p148) target = $region20
        $region19: #{attention_forward.6} parent=15 // pred_region
          %s151 = smul.u32 16, %s17
          %p152 = scmp.lt.s32.totalorder %s16, 1
          %s153 = scalar_select %p152, %s16, 1
          %p154 = scmp.lt.s32.totalorder %s151, 31
          %s155 = scalar_select %p154, %s151, 31
          %s156 = smul.addr %s153, 32
          %s157 = sadd.s32 %s155, %s156
          %s158 = smul.addr %s157, 8
          %s159 = scalar_lea.vmem %s0, %s158
          %s160 = smul.u32 16, %s17
        $region20: #{attention_forward.6} parent=15 // pred_fallthru
          _
        // Predicated region
        $region21: #{attention_forward.6} parent=15 // pred_check
          %p161 = pneg %p69
        $region22: #{attention_forward.6} parent=15 // pred_check_branch
          %163 = sbr.rel (%p161) target = $region24
        $region23: #{attention_forward.6} parent=15 // pred_region
          %s164 = sand.u32 %s59, 1
          %s165 = sand.u32 %s59, 1
          %s166 = smul.addr %s165, 64
          %s167 = scalar_lea.vmem [#allocation2], %s166
          %s168 = smul.addr %s16, 16
          %s169 = smul.addr %s168, 8
          %s170 = scalar_lea.vmem %s1, %s169
          // Predicated region
          $region25: #{attention_forward.6} parent=23 // pred_check
            _
          $region26: #{attention_forward.6} parent=23 // pred_check_branch
            %172 = sbr.rel (0) target = $region28
          $region27: #{attention_forward.6} parent=23 // pred_region
            // Predicated region
            $region29: #{attention_forward.6} parent=27 // pred_check
              _
            $region30: #{attention_forward.6} parent=27 // pred_check_branch
              %174 = sbr.rel (0) target = $region32
            $region31: #{attention_forward.6} parent=27 // pred_region
              // Predicated region
              $region44: #{attention_forward.6} parent=31 // pred_check
                _
              $region45: #{attention_forward.6} parent=31 // pred_check_branch
                %203 = sbr.rel (0) target = $region47
              $region46: #{attention_forward.6} parent=31 // pred_region
                loop: start=0, step=1, limit=1
                $region48: #{attention_forward.6} parent=46 // loop_pre_header
                  _
                $region49: #{attention_forward.6} parent=46 // loop_header
                  %s205 = sphi 0, %s209
                  %p206 = scmp.ge.s32.totalorder %s205, 1
                  %s210 = sphi %s170, %s170
                  %s211 = sphi %s167, %s167
                $region50: #{attention_forward.6} parent=46 // loop_header_branch
                  %208 = sbr.rel (%p206) target = $region54
                $region51: #{attention_forward.6} parent=46 // loop_body
                  %v212 = vld [vmem:[%s210] sm:$0xff]
                  %213 = vst [vmem:[%s211] sm:$0xff] %v212
                  %v214 = vld [vmem:[%s210 + $0x10] sm:$0xff]
                  %215 = vst [vmem:[%s211 + $0x8] sm:$0xff] %v214
                  %v216 = vld [vmem:[%s210 + $0x20] sm:$0xff]
                  %217 = vst [vmem:[%s211 + $0x10] sm:$0xff] %v216
                  %v218 = vld [vmem:[%s210 + $0x30] sm:$0xff]
                  %219 = vst [vmem:[%s211 + $0x18] sm:$0xff] %v218
                  %v220 = vld [vmem:[%s210 + $0x40] sm:$0xff]
                  %221 = vst [vmem:[%s211 + $0x20] sm:$0xff] %v220
                  %v222 = vld [vmem:[%s210 + $0x50] sm:$0xff]
                  %223 = vst [vmem:[%s211 + $0x28] sm:$0xff] %v222
                  %v224 = vld [vmem:[%s210 + $0x60] sm:$0xff]
                  %225 = vst [vmem:[%s211 + $0x30] sm:$0xff] %v224
                  %v226 = vld [vmem:[%s210 + $0x70] sm:$0xff]
                  %227 = vst [vmem:[%s211 + $0x38] sm:$0xff] %v226
                $region52: #{attention_forward.6} parent=46 // loop_footer
                  %s209 = sadd.s32 1, %s205
                $region53: #{attention_forward.6} parent=46 // loop_footer_branch
                  %204 = sbr.rel target = $region49
                $region54: #{attention_forward.6} parent=46 // loop_exit
                  _
              $region47: #{attention_forward.6} parent=31 // pred_fallthru
                _
              // Predicated region
              $region55: #{attention_forward.6} parent=31 // pred_check
                _
              $region56: #{attention_forward.6} parent=31 // pred_check_branch
                %229 = sbr.rel target = $region58
              $region57: #{attention_forward.6} parent=31 // pred_region
                _
              $region58: #{attention_forward.6} parent=31 // pred_fallthru
                _
            $region32: #{attention_forward.6} parent=27 // pred_fallthru
              _
            // Predicated region
            $region33: #{attention_forward.6} parent=27 // pred_check
              _
            $region34: #{attention_forward.6} parent=27 // pred_check_branch
              %176 = sbr.rel target = $region36
            $region35: #{attention_forward.6} parent=27 // pred_region
              loop: start=0, step=1, limit=1
              $region37: #{attention_forward.6} parent=35 // loop_pre_header
                _
              $region38: #{attention_forward.6} parent=35 // loop_header
                %s179 = sphi 0, %s183
                %p180 = scmp.ge.s32.totalorder %s179, 1
                %s184 = sphi %s170, %s170
                %s185 = sphi %s167, %s167
              $region39: #{attention_forward.6} parent=35 // loop_header_branch
                %182 = sbr.rel (%p180) target = $region43
              $region40: #{attention_forward.6} parent=35 // loop_body
                %v186 = vld [vmem:[%s184] sm:$0xff]
                %187 = vst [vmem:[%s185] sm:$0xff] %v186
                %v188 = vld [vmem:[%s184 + $0x10] sm:$0xff]
                %189 = vst [vmem:[%s185 + $0x8] sm:$0xff] %v188
                %v190 = vld [vmem:[%s184 + $0x20] sm:$0xff]
                %191 = vst [vmem:[%s185 + $0x10] sm:$0xff] %v190
                %v192 = vld [vmem:[%s184 + $0x30] sm:$0xff]
                %193 = vst [vmem:[%s185 + $0x18] sm:$0xff] %v192
                %v194 = vld [vmem:[%s184 + $0x40] sm:$0xff]
                %195 = vst [vmem:[%s185 + $0x20] sm:$0xff] %v194
                %v196 = vld [vmem:[%s184 + $0x50] sm:$0xff]
                %197 = vst [vmem:[%s185 + $0x28] sm:$0xff] %v196
                %v198 = vld [vmem:[%s184 + $0x60] sm:$0xff]
                %199 = vst [vmem:[%s185 + $0x30] sm:$0xff] %v198
                %v200 = vld [vmem:[%s184 + $0x70] sm:$0xff]
                %201 = vst [vmem:[%s185 + $0x38] sm:$0xff] %v200
              $region41: #{attention_forward.6} parent=35 // loop_footer
                %s183 = sadd.s32 1, %s179
              $region42: #{attention_forward.6} parent=35 // loop_footer_branch
                %178 = sbr.rel target = $region38
              $region43: #{attention_forward.6} parent=35 // loop_exit
                _
            $region36: #{attention_forward.6} parent=27 // pred_fallthru
              _
          $region28: #{attention_forward.6} parent=23 // pred_fallthru
            _
          %230 = vnop
        $region24: #{attention_forward.6} parent=15 // pred_fallthru
          _
        // Predicated region
        $region59: #{attention_forward.6} parent=15 // pred_check
          %p231 = pneg %p95
        $region60: #{attention_forward.6} parent=15 // pred_check_branch
          %233 = sbr.rel (%p231) target = $region62
        $region61: #{attention_forward.6} parent=15 // pred_region
          %s234 = sand.u32 %s85, 1
          %s235 = sand.u32 %s85, 1
          %s236 = smul.addr %s235, 64
          %s237 = scalar_lea.vmem [#allocation3], %s236
          %s238 = smul.addr %s16, 16
          %s239 = sadd.s32 1, %s238
          %s240 = smul.addr %s239, 8
          %s241 = scalar_lea.vmem %s2, %s240
          // Predicated region
          $region63: #{attention_forward.6} parent=61 // pred_check
            _
          $region64: #{attention_forward.6} parent=61 // pred_check_branch
            %243 = sbr.rel (0) target = $region66
          $region65: #{attention_forward.6} parent=61 // pred_region
            // Predicated region
            $region67: #{attention_forward.6} parent=65 // pred_check
              _
            $region68: #{attention_forward.6} parent=65 // pred_check_branch
              %245 = sbr.rel (0) target = $region70
            $region69: #{attention_forward.6} parent=65 // pred_region
              // Predicated region
              $region82: #{attention_forward.6} parent=69 // pred_check
                _
              $region83: #{attention_forward.6} parent=69 // pred_check_branch
                %274 = sbr.rel (0) target = $region85
              $region84: #{attention_forward.6} parent=69 // pred_region
                loop: start=0, step=1, limit=1
                $region86: #{attention_forward.6} parent=84 // loop_pre_header
                  _
                $region87: #{attention_forward.6} parent=84 // loop_header
                  %s276 = sphi 0, %s280
                  %p277 = scmp.ge.s32.totalorder %s276, 1
                  %s281 = sphi %s241, %s241
                  %s282 = sphi %s237, %s237
                $region88: #{attention_forward.6} parent=84 // loop_header_branch
                  %279 = sbr.rel (%p277) target = $region92
                $region89: #{attention_forward.6} parent=84 // loop_body
                  %v283 = vld [vmem:[%s281] sm:$0xff]
                  %284 = vst [vmem:[%s282] sm:$0xff] %v283
                  %v285 = vld [vmem:[%s281 + $0x10] sm:$0xff]
                  %286 = vst [vmem:[%s282 + $0x8] sm:$0xff] %v285
                  %v287 = vld [vmem:[%s281 + $0x20] sm:$0xff]
                  %288 = vst [vmem:[%s282 + $0x10] sm:$0xff] %v287
                  %v289 = vld [vmem:[%s281 + $0x30] sm:$0xff]
                  %290 = vst [vmem:[%s282 + $0x18] sm:$0xff] %v289
                  %v291 = vld [vmem:[%s281 + $0x40] sm:$0xff]
                  %292 = vst [vmem:[%s282 + $0x20] sm:$0xff] %v291
                  %v293 = vld [vmem:[%s281 + $0x50] sm:$0xff]
                  %294 = vst [vmem:[%s282 + $0x28] sm:$0xff] %v293
                  %v295 = vld [vmem:[%s281 + $0x60] sm:$0xff]
                  %296 = vst [vmem:[%s282 + $0x30] sm:$0xff] %v295
                  %v297 = vld [vmem:[%s281 + $0x70] sm:$0xff]
                  %298 = vst [vmem:[%s282 + $0x38] sm:$0xff] %v297
                $region90: #{attention_forward.6} parent=84 // loop_footer
                  %s280 = sadd.s32 1, %s276
                $region91: #{attention_forward.6} parent=84 // loop_footer_branch
                  %275 = sbr.rel target = $region87
                $region92: #{attention_forward.6} parent=84 // loop_exit
                  _
              $region85: #{attention_forward.6} parent=69 // pred_fallthru
                _
              // Predicated region
              $region93: #{attention_forward.6} parent=69 // pred_check
                _
              $region94: #{attention_forward.6} parent=69 // pred_check_branch
                %300 = sbr.rel target = $region96
              $region95: #{attention_forward.6} parent=69 // pred_region
                _
              $region96: #{attention_forward.6} parent=69 // pred_fallthru
                _
            $region70: #{attention_forward.6} parent=65 // pred_fallthru
              _
            // Predicated region
            $region71: #{attention_forward.6} parent=65 // pred_check
              _
            $region72: #{attention_forward.6} parent=65 // pred_check_branch
              %247 = sbr.rel target = $region74
            $region73: #{attention_forward.6} parent=65 // pred_region
              loop: start=0, step=1, limit=1
              $region75: #{attention_forward.6} parent=73 // loop_pre_header
                _
              $region76: #{attention_forward.6} parent=73 // loop_header
                %s250 = sphi 0, %s254
                %p251 = scmp.ge.s32.totalorder %s250, 1
                %s255 = sphi %s241, %s241
                %s256 = sphi %s237, %s237
              $region77: #{attention_forward.6} parent=73 // loop_header_branch
                %253 = sbr.rel (%p251) target = $region81
              $region78: #{attention_forward.6} parent=73 // loop_body
                %v257 = vld [vmem:[%s255] sm:$0xff]
                %258 = vst [vmem:[%s256] sm:$0xff] %v257
                %v259 = vld [vmem:[%s255 + $0x10] sm:$0xff]
                %260 = vst [vmem:[%s256 + $0x8] sm:$0xff] %v259
                %v261 = vld [vmem:[%s255 + $0x20] sm:$0xff]
                %262 = vst [vmem:[%s256 + $0x10] sm:$0xff] %v261
                %v263 = vld [vmem:[%s255 + $0x30] sm:$0xff]
                %264 = vst [vmem:[%s256 + $0x18] sm:$0xff] %v263
                %v265 = vld [vmem:[%s255 + $0x40] sm:$0xff]
                %266 = vst [vmem:[%s256 + $0x20] sm:$0xff] %v265
                %v267 = vld [vmem:[%s255 + $0x50] sm:$0xff]
                %268 = vst [vmem:[%s256 + $0x28] sm:$0xff] %v267
                %v269 = vld [vmem:[%s255 + $0x60] sm:$0xff]
                %270 = vst [vmem:[%s256 + $0x30] sm:$0xff] %v269
                %v271 = vld [vmem:[%s255 + $0x70] sm:$0xff]
                %272 = vst [vmem:[%s256 + $0x38] sm:$0xff] %v271
              $region79: #{attention_forward.6} parent=73 // loop_footer
                %s254 = sadd.s32 1, %s250
              $region80: #{attention_forward.6} parent=73 // loop_footer_branch
                %249 = sbr.rel target = $region76
              $region81: #{attention_forward.6} parent=73 // loop_exit
                _
            $region74: #{attention_forward.6} parent=65 // pred_fallthru
              _
          $region66: #{attention_forward.6} parent=61 // pred_fallthru
            _
          %301 = vnop
        $region62: #{attention_forward.6} parent=15 // pred_fallthru
          _
      $region16: #{attention_forward.6} parent=5 // pred_fallthru
        _
      %p302 = scmp.le.s32.totalorder 1, %s9
      %p303 = scmp.lt.s32.totalorder %s9, 5
      %p304 = pnand %p302, %p303
      %p305 = pneg %p304
      // Predicated region
      $region97: #{attention_forward.6} parent=5 // pred_check
        _
      $region98: #{attention_forward.6} parent=5 // pred_check_branch
        %307 = sbr.rel (%p304) target = $region100
      $region99: #{attention_forward.6} parent=5 // pred_region
        %s308 = ssub.s32 %s9, 1
        %s309 = sand.u32 %s62, 1
        %s310 = sand.u32 %s62, 1
        %s311 = smul.addr %s310, 64
        %s312 = scalar_lea.vmem [#allocation2], %s311
        // Predicated region
        $region101: #{attention_forward.6} parent=99 // pred_check
          %p313 = pneg %p75
        $region102: #{attention_forward.6} parent=99 // pred_check_branch
          %315 = sbr.rel (%p313) target = $region104
        $region103: #{attention_forward.6} parent=99 // pred_region
          _
        $region104: #{attention_forward.6} parent=99 // pred_fallthru
          _
        %s316 = sand.u32 %s88, 1
        %s317 = sand.u32 %s88, 1
        %s318 = smul.addr %s317, 64
        %s319 = scalar_lea.vmem [#allocation3], %s318
        // Predicated region
        $region105: #{attention_forward.6} parent=99 // pred_check
          %p320 = pneg %p101
        $region106: #{attention_forward.6} parent=99 // pred_check_branch
          %322 = sbr.rel (%p320) target = $region108
        $region107: #{attention_forward.6} parent=99 // pred_region
          _
        $region108: #{attention_forward.6} parent=99 // pred_fallthru
          _
        %s323 = smul.u32 16, %s19
        %p324 = scmp.lt.s32.totalorder %s18, 1
        %s325 = scalar_select %p324, %s18, 1
        %p326 = scmp.lt.s32.totalorder %s323, 31
        %s327 = scalar_select %p326, %s323, 31
        %s328 = smul.addr %s325, 32
        %s329 = sadd.s32 %s327, %s328
        %s330 = smul.addr %s329, 8
        %s331 = scalar_lea.vmem %s0, %s330
        %p332 = pneg %p49
        %p333 = pneg %p46
        %s334 = sand.u32 %s62, 1
        %s335 = sand.u32 %s62, 1
        %s336 = smul.addr %s335, 64
        %s337 = scalar_lea.vmem [#allocation2], %s336
        %p338 = pneg %p75
        %p339 = pneg %p72
        %s340 = sand.u32 %s88, 1
        %s341 = sand.u32 %s88, 1
        %s342 = smul.addr %s341, 64
        %s343 = scalar_lea.vmem [#allocation3], %s342
        %p344 = pneg %p101
        %p345 = pneg %p98
        %p346 = pneg %p129
        %p347 = pneg %p126
        %s348 = smul.u32 16, %s19
        %p349 = scmp.lt.s32.totalorder %s18, 1
        %s350 = scalar_select %p349, %s18, 1
        %p351 = scmp.lt.s32.totalorder %s348, 31
        %s352 = scalar_select %p351, %s348, 31
        %s353 = smul.addr %s350, 32
        %s354 = sadd.s32 %s352, %s353
        %s355 = smul.addr %s354, 8
        %s356 = scalar_lea.vmem %s3, %s355
        %s357 = smul.u32 16, %s19
        %p358 = scmp.lt.s32.totalorder %s18, 1
        %s359 = scalar_select %p358, %s18, 1
        %p360 = scmp.lt.s32.totalorder %s357, 31
        %s361 = scalar_select %p360, %s357, 31
        %s362 = smul.addr %s359, 32
        %s363 = sadd.s32 %s361, %s362
        %s364 = smul.addr %s363, 8
        %s365 = scalar_lea.vmem %s0, %s364
        %s366 = smul.u32 16, %s19
        %s367 = smul.u32 16, %s19
        %p368 = scmp.lt.s32.totalorder %s18, 1
        %s369 = scalar_select %p368, %s18, 1
        %p370 = scmp.lt.s32.totalorder %s367, 31
        %s371 = scalar_select %p370, %s367, 31
        %s372 = smul.addr %s369, 32
        %s373 = sadd.s32 %s371, %s372
        %s374 = smul.addr %s373, 8
        %s375 = scalar_lea.vmem %s3, %s374
        %s376 = smul.u32 16, %s19
        %v378 = vld [vmem:[%s365] sm:$0xff]
        %v379 = vld [vmem:[%s365 + $0x8] sm:$0xff]
        %v380 = vld [vmem:[%s365 + $0x10] sm:$0xff]
        %v381 = vld [vmem:[%s365 + $0x18] sm:$0xff]
        %v382 = vld [vmem:[%s365 + $0x20] sm:$0xff]
        %v383 = vld [vmem:[%s365 + $0x28] sm:$0xff]
        %v384 = vld [vmem:[%s365 + $0x30] sm:$0xff]
        %v385 = vld [vmem:[%s365 + $0x38] sm:$0xff]
        %v386 = vld [vmem:[%s365 + $0x40] sm:$0xff]
        %v387 = vld [vmem:[%s365 + $0x48] sm:$0xff]
        %v388 = vld [vmem:[%s365 + $0x50] sm:$0xff]
        %v389 = vld [vmem:[%s365 + $0x58] sm:$0xff]
        %v390 = vld [vmem:[%s365 + $0x60] sm:$0xff]
        %v391 = vld [vmem:[%s365 + $0x68] sm:$0xff]
        %v392 = vld [vmem:[%s365 + $0x70] sm:$0xff]
        %v393 = vld [vmem:[%s365 + $0x78] sm:$0xff]
        %v394 = vpack.c.bf16 %v379, %v378
        %v395 = vpack.c.bf16 %v381, %v380
        %v396 = vpack.c.bf16 %v383, %v382
        %v397 = vpack.c.bf16 %v385, %v384
        %v398 = vpack.c.bf16 %v387, %v386
        %v399 = vpack.c.bf16 %v389, %v388
        %v400 = vpack.c.bf16 %v391, %v390
        %v401 = vpack.c.bf16 %v393, %v392
        %v402 = vld [vmem:[%s312] sm:$0xff]
        %v403 = vld [vmem:[%s312 + $0x8] sm:$0xff]
        %v404 = vld [vmem:[%s312 + $0x10] sm:$0xff]
        %v405 = vld [vmem:[%s312 + $0x18] sm:$0xff]
        %v406 = vld [vmem:[%s312 + $0x20] sm:$0xff]
        %v407 = vld [vmem:[%s312 + $0x28] sm:$0xff]
        %v408 = vld [vmem:[%s312 + $0x30] sm:$0xff]
        %v409 = vld [vmem:[%s312 + $0x38] sm:$0xff]
        %v410 = vpack.c.bf16 %v403, %v402
        %v411 = vpack.c.bf16 %v405, %v404
        %v412 = vpack.c.bf16 %v407, %v406
        %v413 = vpack.c.bf16 %v409, %v408
        %v414 = vld [vmem:[%s319] sm:$0xff]
        %v415 = vld [vmem:[%s319 + $0x8] sm:$0xff]
        %v416 = vld [vmem:[%s319 + $0x10] sm:$0xff]
        %v417 = vld [vmem:[%s319 + $0x18] sm:$0xff]
        %v418 = vld [vmem:[%s319 + $0x20] sm:$0xff]
        %v419 = vld [vmem:[%s319 + $0x28] sm:$0xff]
        %v420 = vld [vmem:[%s319 + $0x30] sm:$0xff]
        %v421 = vld [vmem:[%s319 + $0x38] sm:$0xff]
        %v422 = vpack.c.bf16 %v415, %v414
        %v423 = vpack.c.bf16 %v417, %v416
        %v424 = vpack.c.bf16 %v419, %v418
        %v425 = vpack.c.bf16 %v421, %v420
        %vm426 = vcmask 261120
        %v428 = vsel %vm426, %v394, 0
        %v431 = vsel %vm426, %v395, 0
        %v434 = vsel %vm426, %v396, 0
        %v437 = vsel %vm426, %v397, 0
        %v440 = vsel %vm426, %v398, 0
        %v443 = vsel %vm426, %v399, 0
        %v446 = vsel %vm426, %v400, 0
        %v449 = vsel %vm426, %v401, 0
        %v452 = vsel %vm426, %v410, 0
        %v455 = vsel %vm426, %v411, 0
        %v458 = vsel %vm426, %v412, 0
        %v461 = vsel %vm426, %v413, 0
        %463 = vmatprep.subr.bf16.mxu0 0
        %464 = vmatpush1.bf16.xpose.msra.mxu0 %v452
        %465 = vmatprep.subr.bf16.mxu0 0
        %466 = vmatpush1.bf16.xpose.msra.mxu0 %v455
        %467 = vmatprep.subr.bf16.mxu0 0
        %468 = vmatpush1.bf16.xpose.msra.mxu0 %v458
        %469 = vmatprep.subr.bf16.mxu0 0
        %470 = vmatpush1.bf16.xpose.msra.mxu0 %v461
        %471 = vmatprep.subr.bf16.mxu0 0
        %472 = vmatpush1.bf16.xpose.msra.mxu0 0
        %473 = vmatprep.subr.bf16.mxu0 0
        %474 = vmatpush1.bf16.xpose.msra.mxu0 0
        %475 = vmatprep.subr.bf16.mxu0 0
        %476 = vmatpush1.bf16.xpose.msra.mxu0 0
        %477 = vmatprep.subr.bf16.mxu0 0
        %478 = vmatpush1.bf16.xpose.msra.mxu0 0
        %479 = vmatprep.subr.bf16.mxu0 0
        %480 = vmatpush1.bf16.xpose.msra.mxu0 0
        %481 = vmatprep.subr.bf16.mxu0 0
        %482 = vmatpush1.bf16.xpose.msra.mxu0 0
        %483 = vmatprep.subr.bf16.mxu0 0
        %484 = vmatpush1.bf16.xpose.msra.mxu0 0
        %485 = vmatprep.subr.bf16.mxu0 0
        %486 = vmatpush1.bf16.xpose.msra.mxu0 0
        %487 = vmatprep.subr.bf16.mxu0 0
        %488 = vmatpush1.bf16.xpose.msra.mxu0 0
        %489 = vmatprep.subr.bf16.mxu0 0
        %490 = vmatpush1.bf16.xpose.msra.mxu0 0
        %491 = vmatprep.subr.bf16.mxu0 0
        %492 = vmatpush1.bf16.xpose.msra.mxu0 0
        %493 = vmatprep.subr.bf16.mxu0 0
        %494 = vmatpush1.bf16.xpose.msra.mxu0 0
        %495 = vmatprep.mubr.bf16.mxu0 0
        %496 = vmatmul.mubr.bf16.gmra.mrb[0].mxu0 %v428
        %v497 = vpop.f32.mrb[0].mxu0
        %v498 = vadd.f32 0.0, %v497
        %v499 = vpop.f32.mrb[0].mxu0
        %v500 = vpop.f32.mrb[0].mxu0
        %v501 = vadd.f32 0.0, %v500
        %v502 = vpop.f32.mrb[0].mxu0
        %503 = vmatprep.mubr.bf16.mxu0 0
        %504 = vmatmul.mubr.bf16.gmra.mrb[0].mxu0 %v431
        %v505 = vpop.f32.mrb[0].mxu0
        %v506 = vadd.f32 0.0, %v505
        %v507 = vpop.f32.mrb[0].mxu0
        %v508 = vpop.f32.mrb[0].mxu0
        %v509 = vadd.f32 0.0, %v508
        %v510 = vpop.f32.mrb[0].mxu0
        %511 = vmatprep.mubr.bf16.mxu0 0
        %512 = vmatmul.mubr.bf16.gmra.mrb[0].mxu0 %v434
        %v513 = vpop.f32.mrb[0].mxu0
        %v514 = vadd.f32 0.0, %v513
        %v515 = vpop.f32.mrb[0].mxu0
        %v516 = vpop.f32.mrb[0].mxu0
        %v517 = vadd.f32 0.0, %v516
        %v518 = vpop.f32.mrb[0].mxu0
        %519 = vmatprep.mubr.bf16.mxu0 0
        %520 = vmatmul.mubr.bf16.gmra.mrb[0].mxu0 %v437
        %v521 = vpop.f32.mrb[0].mxu0
        %v522 = vadd.f32 0.0, %v521
        %v523 = vpop.f32.mrb[0].mxu0
        %v524 = vpop.f32.mrb[0].mxu0
        %v525 = vadd.f32 0.0, %v524
        %v526 = vpop.f32.mrb[0].mxu0
        %527 = vmatprep.mubr.bf16.mxu0 0
        %528 = vmatmul.mubr.bf16.gmra.mrb[0].mxu0 %v440
        %v529 = vpop.f32.mrb[0].mxu0
        %v530 = vadd.f32 0.0, %v529
        %v531 = vpop.f32.mrb[0].mxu0
        %v532 = vpop.f32.mrb[0].mxu0
        %v533 = vadd.f32 0.0, %v532
        %v534 = vpop.f32.mrb[0].mxu0
        %535 = vmatprep.mubr.bf16.mxu0 0
        %536 = vmatmul.mubr.bf16.gmra.mrb[0].mxu0 %v443
        %v537 = vpop.f32.mrb[0].mxu0
        %v538 = vadd.f32 0.0, %v537
        %v539 = vpop.f32.mrb[0].mxu0
        %v540 = vpop.f32.mrb[0].mxu0
        %v541 = vadd.f32 0.0, %v540
        %v542 = vpop.f32.mrb[0].mxu0
        %543 = vmatprep.mubr.bf16.mxu0 0
        %544 = vmatmul.mubr.bf16.gmra.mrb[0].mxu0 %v446
        %v545 = vpop.f32.mrb[0].mxu0
        %v546 = vadd.f32 0.0, %v545
        %v547 = vpop.f32.mrb[0].mxu0
        %v548 = vpop.f32.mrb[0].mxu0
        %v549 = vadd.f32 0.0, %v548
        %v550 = vpop.f32.mrb[0].mxu0
        %551 = vmatprep.mubr.bf16.mxu0 0
        %552 = vmatmul.mubr.bf16.gmra.mrb[0].mxu0 %v449
        %v553 = vpop.f32.mrb[0].mxu0
        %v554 = vadd.f32 0.0, %v553
        %v555 = vpop.f32.mrb[0].mxu0
        %v556 = vpop.f32.mrb[0].mxu0
        %v557 = vadd.f32 0.0, %v556
        %v558 = vpop.f32.mrb[0].mxu0
        %559 = vdwg.mxu0
        %vm560 = vcmask 523264
        %v561 = vsel %vm560, %v498, -inf
        %562 = vmax.xlane.f32.xlu0 %v561
        %v563 = vpop.xlane.xlu0 %562
        %v564 = vsel %vm560, %v501, -inf
        %565 = vmax.xlane.f32.xlu0 %v564
        %v566 = vpop.xlane.xlu0 %565
        %v567 = vsel %vm560, %v506, -inf
        %568 = vmax.xlane.f32.xlu0 %v567
        %v569 = vpop.xlane.xlu0 %568
        %v570 = vsel %vm560, %v509, -inf
        %571 = vmax.xlane.f32.xlu0 %v570
        %v572 = vpop.xlane.xlu0 %571
        %v573 = vsel %vm560, %v514, -inf
        %574 = vmax.xlane.f32.xlu0 %v573
        %v575 = vpop.xlane.xlu0 %574
        %v576 = vsel %vm560, %v517, -inf
        %577 = vmax.xlane.f32.xlu0 %v576
        %v578 = vpop.xlane.xlu0 %577
        %v579 = vsel %vm560, %v522, -inf
        %580 = vmax.xlane.f32.xlu0 %v579
        %v581 = vpop.xlane.xlu0 %580
        %v582 = vsel %vm560, %v525, -inf
        %583 = vmax.xlane.f32.xlu0 %v582
        %v584 = vpop.xlane.xlu0 %583
        %v585 = vsel %vm560, %v530, -inf
        %586 = vmax.xlane.f32.xlu0 %v585
        %v587 = vpop.xlane.xlu0 %586
        %v588 = vsel %vm560, %v533, -inf
        %589 = vmax.xlane.f32.xlu0 %v588
        %v590 = vpop.xlane.xlu0 %589
        %v591 = vsel %vm560, %v538, -inf
        %592 = vmax.xlane.f32.xlu0 %v591
        %v593 = vpop.xlane.xlu0 %592
        %v594 = vsel %vm560, %v541, -inf
        %595 = vmax.xlane.f32.xlu0 %v594
        %v596 = vpop.xlane.xlu0 %595
        %v597 = vsel %vm560, %v546, -inf
        %598 = vmax.xlane.f32.xlu0 %v597
        %v599 = vpop.xlane.xlu0 %598
        %v600 = vsel %vm560, %v549, -inf
        %601 = vmax.xlane.f32.xlu0 %v600
        %v602 = vpop.xlane.xlu0 %601
        %v603 = vsel %vm560, %v554, -inf
        %604 = vmax.xlane.f32.xlu0 %v603
        %v605 = vpop.xlane.xlu0 %604
        %v606 = vsel %vm560, %v557, -inf
        %607 = vmax.xlane.f32.xlu0 %v606
        %v608 = vpop.xlane.xlu0 %607
        %v609 = vsub.f32 %v498, %v563
        %v610 = vsub.f32 %v501, %v566
        %v611 = vsub.f32 %v506, %v569
        %v612 = vsub.f32 %v509, %v572
        %v613 = vsub.f32 %v514, %v575
        %v614 = vsub.f32 %v517, %v578
        %v615 = vsub.f32 %v522, %v581
        %v616 = vsub.f32 %v525, %v584
        %v617 = vsub.f32 %v530, %v587
        %v618 = vsub.f32 %v533, %v590
        %v619 = vsub.f32 %v538, %v593
        %v620 = vsub.f32 %v541, %v596
        %v621 = vsub.f32 %v546, %v599
        %v622 = vsub.f32 %v549, %v602
        %v623 = vsub.f32 %v554, %v605
        %v624 = vsub.f32 %v557, %v608
        %v625 = vmul.f32 %v609, 1.442695
        %v626 = vpow.pop %v625
        %v627 = vmul.f32 %v610, 1.442695
        %v628 = vpow.pop %v627
        %v629 = vmul.f32 %v611, 1.442695
        %v630 = vpow.pop %v629
        %v631 = vmul.f32 %v612, 1.442695
        %v632 = vpow.pop %v631
        %v633 = vmul.f32 %v613, 1.442695
        %v634 = vpow.pop %v633
        %v635 = vmul.f32 %v614, 1.442695
        %v636 = vpow.pop %v635
        %v637 = vmul.f32 %v615, 1.442695
        %v638 = vpow.pop %v637
        %v639 = vmul.f32 %v616, 1.442695
        %v640 = vpow.pop %v639
        %v641 = vmul.f32 %v617, 1.442695
        %v642 = vpow.pop %v641
        %v643 = vmul.f32 %v618, 1.442695
        %v644 = vpow.pop %v643
        %v645 = vmul.f32 %v619, 1.442695
        %v646 = vpow.pop %v645
        %v647 = vmul.f32 %v620, 1.442695
        %v648 = vpow.pop %v647
        %v649 = vmul.f32 %v621, 1.442695
        %v650 = vpow.pop %v649
        %v651 = vmul.f32 %v622, 1.442695
        %v652 = vpow.pop %v651
        %v653 = vmul.f32 %v623, 1.442695
        %v654 = vpow.pop %v653
        %v655 = vmul.f32 %v624, 1.442695
        %v656 = vpow.pop %v655
        %v657 = vsel %vm560, %v626, 0.0
        %658 = vadd.xlane.f32.xlu0 %v657
        %v659 = vpop.xlane.xlu0 %658
        %v660 = vsel %vm560, %v628, 0.0
        %661 = vadd.xlane.f32.xlu0 %v660
        %v662 = vpop.xlane.xlu0 %661
        %v663 = vsel %vm560, %v630, 0.0
        %664 = vadd.xlane.f32.xlu0 %v663
        %v665 = vpop.xlane.xlu0 %664
        %v666 = vsel %vm560, %v632, 0.0
        %667 = vadd.xlane.f32.xlu0 %v666
        %v668 = vpop.xlane.xlu0 %667
        %v669 = vsel %vm560, %v634, 0.0
        %670 = vadd.xlane.f32.xlu0 %v669
        %v671 = vpop.xlane.xlu0 %670
        %v672 = vsel %vm560, %v636, 0.0
        %673 = vadd.xlane.f32.xlu0 %v672
        %v674 = vpop.xlane.xlu0 %673
        %v675 = vsel %vm560, %v638, 0.0
        %676 = vadd.xlane.f32.xlu0 %v675
        %v677 = vpop.xlane.xlu0 %676
        %v678 = vsel %vm560, %v640, 0.0
        %679 = vadd.xlane.f32.xlu0 %v678
        %v680 = vpop.xlane.xlu0 %679
        %v681 = vsel %vm560, %v642, 0.0
        %682 = vadd.xlane.f32.xlu0 %v681
        %v683 = vpop.xlane.xlu0 %682
        %v684 = vsel %vm560, %v644, 0.0
        %685 = vadd.xlane.f32.xlu0 %v684
        %v686 = vpop.xlane.xlu0 %685
        %v687 = vsel %vm560, %v646, 0.0
        %688 = vadd.xlane.f32.xlu0 %v687
        %v689 = vpop.xlane.xlu0 %688
        %v690 = vsel %vm560, %v648, 0.0
        %691 = vadd.xlane.f32.xlu0 %v690
        %v692 = vpop.xlane.xlu0 %691
        %v693 = vsel %vm560, %v650, 0.0
        %694 = vadd.xlane.f32.xlu0 %v693
        %v695 = vpop.xlane.xlu0 %694
        %v696 = vsel %vm560, %v652, 0.0
        %697 = vadd.xlane.f32.xlu0 %v696
        %v698 = vpop.xlane.xlu0 %697
        %v699 = vsel %vm560, %v654, 0.0
        %700 = vadd.xlane.f32.xlu0 %v699
        %v701 = vpop.xlane.xlu0 %700
        %v702 = vsel %vm560, %v656, 0.0
        %703 = vadd.xlane.f32.xlu0 %v702
        %v704 = vpop.xlane.xlu0 %703
        %v705 = vpack.c.bf16 %v628, %v626
        %v706 = vpack.c.bf16 %v632, %v630
        %v707 = vpack.c.bf16 %v636, %v634
        %v708 = vpack.c.bf16 %v640, %v638
        %v709 = vpack.c.bf16 %v644, %v642
        %v710 = vpack.c.bf16 %v648, %v646
        %v711 = vpack.c.bf16 %v652, %v650
        %v712 = vpack.c.bf16 %v656, %v654
        %v714 = vsel %vm560, %v705, 0
        %v717 = vsel %vm560, %v706, 0
        %v720 = vsel %vm560, %v707, 0
        %v723 = vsel %vm560, %v708, 0
        %v726 = vsel %vm560, %v709, 0
        %v729 = vsel %vm560, %v710, 0
        %v732 = vsel %vm560, %v711, 0
        %v735 = vsel %vm560, %v712, 0
        %737 = vmatprep.subr.bf16.mxu0 0
        %738 = vmatpush1.bf16.msra.mxu0 %v422
        %739 = vmatprep.subr.bf16.mxu0 0
        %740 = vmatpush1.bf16.msra.mxu0 %v423
        %741 = vmatprep.subr.bf16.mxu0 0
        %742 = vmatpush1.bf16.msra.mxu0 %v424
        %743 = vmatprep.subr.bf16.mxu0 0
        %744 = vmatpush1.bf16.msra.mxu0 %v425
        %745 = vmatprep.subr.bf16.mxu0 0
        %746 = vmatpush1.bf16.msra.mxu0 0
        %747 = vmatprep.subr.bf16.mxu0 0
        %748 = vmatpush1.bf16.msra.mxu0 0
        %749 = vmatprep.subr.bf16.mxu0 0
        %750 = vmatpush1.bf16.msra.mxu0 0
        %751 = vmatprep.subr.bf16.mxu0 0
        %752 = vmatpush1.bf16.msra.mxu0 0
        %753 = vmatprep.subr.bf16.mxu0 0
        %754 = vmatpush1.bf16.msra.mxu0 0
        %755 = vmatprep.subr.bf16.mxu0 0
        %756 = vmatpush1.bf16.msra.mxu0 0
        %757 = vmatprep.subr.bf16.mxu0 0
        %758 = vmatpush1.bf16.msra.mxu0 0
        %759 = vmatprep.subr.bf16.mxu0 0
        %760 = vmatpush1.bf16.msra.mxu0 0
        %761 = vmatprep.subr.bf16.mxu0 0
        %762 = vmatpush1.bf16.msra.mxu0 0
        %763 = vmatprep.subr.bf16.mxu0 0
        %764 = vmatpush1.bf16.msra.mxu0 0
        %765 = vmatprep.subr.bf16.mxu0 0
        %766 = vmatpush1.bf16.msra.mxu0 0
        %767 = vmatprep.subr.bf16.mxu0 0
        %768 = vmatpush1.bf16.msra.mxu0 0
        %769 = vmatprep.mubr.bf16.mxu0 0
        %770 = vmatmul.mubr.bf16.gmra.mrb[0].mxu0 %v714
        %v771 = vpop.f32.mrb[0].mxu0
        %v772 = vadd.f32 0.0, %v771
        %v773 = vpop.f32.mrb[0].mxu0
        %v774 = vpop.f32.mrb[0].mxu0
        %v775 = vadd.f32 0.0, %v774
        %v776 = vpop.f32.mrb[0].mxu0
        %777 = vmatprep.mubr.bf16.mxu0 0
        %778 = vmatmul.mubr.bf16.gmra.mrb[0].mxu0 %v717
        %v779 = vpop.f32.mrb[0].mxu0
        %v780 = vadd.f32 0.0, %v779
        %v781 = vpop.f32.mrb[0].mxu0
        %v782 = vpop.f32.mrb[0].mxu0
        %v783 = vadd.f32 0.0, %v782
        %v784 = vpop.f32.mrb[0].mxu0
        %785 = vmatprep.mubr.bf16.mxu0 0
        %786 = vmatmul.mubr.bf16.gmra.mrb[0].mxu0 %v720
        %v787 = vpop.f32.mrb[0].mxu0
        %v788 = vadd.f32 0.0, %v787
        %v789 = vpop.f32.mrb[0].mxu0
        %v790 = vpop.f32.mrb[0].mxu0
        %v791 = vadd.f32 0.0, %v790
        %v792 = vpop.f32.mrb[0].mxu0
        %793 = vmatprep.mubr.bf16.mxu0 0
        %794 = vmatmul.mubr.bf16.gmra.mrb[0].mxu0 %v723
        %v795 = vpop.f32.mrb[0].mxu0
        %v796 = vadd.f32 0.0, %v795
        %v797 = vpop.f32.mrb[0].mxu0
        %v798 = vpop.f32.mrb[0].mxu0
        %v799 = vadd.f32 0.0, %v798
        %v800 = vpop.f32.mrb[0].mxu0
        %801 = vmatprep.mubr.bf16.mxu0 0
        %802 = vmatmul.mubr.bf16.gmra.mrb[0].mxu0 %v726
        %v803 = vpop.f32.mrb[0].mxu0
        %v804 = vadd.f32 0.0, %v803
        %v805 = vpop.f32.mrb[0].mxu0
        %v806 = vpop.f32.mrb[0].mxu0
        %v807 = vadd.f32 0.0, %v806
        %v808 = vpop.f32.mrb[0].mxu0
        %809 = vmatprep.mubr.bf16.mxu0 0
        %810 = vmatmul.mubr.bf16.gmra.mrb[0].mxu0 %v729
        %v811 = vpop.f32.mrb[0].mxu0
        %v812 = vadd.f32 0.0, %v811
        %v813 = vpop.f32.mrb[0].mxu0
        %v814 = vpop.f32.mrb[0].mxu0
        %v815 = vadd.f32 0.0, %v814
        %v816 = vpop.f32.mrb[0].mxu0
        %817 = vmatprep.mubr.bf16.mxu0 0
        %818 = vmatmul.mubr.bf16.gmra.mrb[0].mxu0 %v732
        %v819 = vpop.f32.mrb[0].mxu0
        %v820 = vadd.f32 0.0, %v819
        %v821 = vpop.f32.mrb[0].mxu0
        %v822 = vpop.f32.mrb[0].mxu0
        %v823 = vadd.f32 0.0, %v822
        %v824 = vpop.f32.mrb[0].mxu0
        %825 = vmatprep.mubr.bf16.mxu0 0
        %826 = vmatmul.mubr.bf16.gmra.mrb[0].mxu0 %v735
        %v827 = vpop.f32.mrb[0].mxu0
        %v828 = vadd.f32 0.0, %v827
        %v829 = vpop.f32.mrb[0].mxu0
        %v830 = vpop.f32.mrb[0].mxu0
        %v831 = vadd.f32 0.0, %v830
        %v832 = vpop.f32.mrb[0].mxu0
        %833 = vdwg.mxu0
        %v834 = vrcp.pop %v659
        %v835 = vrcp.pop %v662
        %v836 = vrcp.pop %v665
        %v837 = vrcp.pop %v668
        %v838 = vrcp.pop %v671
        %v839 = vrcp.pop %v674
        %v840 = vrcp.pop %v677
        %v841 = vrcp.pop %v680
        %v842 = vrcp.pop %v683
        %v843 = vrcp.pop %v686
        %v844 = vrcp.pop %v689
        %v845 = vrcp.pop %v692
        %v846 = vrcp.pop %v695
        %v847 = vrcp.pop %v698
        %v848 = vrcp.pop %v701
        %v849 = vrcp.pop %v704
        %v850 = vmul.f32 %v772, %v834
        %v851 = vmul.f32 %v775, %v835
        %v852 = vmul.f32 %v780, %v836
        %v853 = vmul.f32 %v783, %v837
        %v854 = vmul.f32 %v788, %v838
        %v855 = vmul.f32 %v791, %v839
        %v856 = vmul.f32 %v796, %v840
        %v857 = vmul.f32 %v799, %v841
        %v858 = vmul.f32 %v804, %v842
        %v859 = vmul.f32 %v807, %v843
        %v860 = vmul.f32 %v812, %v844
        %v861 = vmul.f32 %v815, %v845
        %v862 = vmul.f32 %v820, %v846
        %v863 = vmul.f32 %v823, %v847
        %v864 = vmul.f32 %v828, %v848
        %v865 = vmul.f32 %v831, %v849
        %874 = vrot.lane.b32.xlu0 %v394, 96
        %v875 = vpop.permute.xlu0 %874
        %876 = vrot.lane.b32.xlu0 %v395, 96
        %v877 = vpop.permute.xlu0 %876
        %878 = vrot.lane.b32.xlu0 %v396, 96
        %v879 = vpop.permute.xlu0 %878
        %880 = vrot.lane.b32.xlu0 %v397, 96
        %v881 = vpop.permute.xlu0 %880
        %882 = vrot.lane.b32.xlu0 %v398, 96
        %v883 = vpop.permute.xlu0 %882
        %884 = vrot.lane.b32.xlu0 %v399, 96
        %v885 = vpop.permute.xlu0 %884
        %886 = vrot.lane.b32.xlu0 %v400, 96
        %v887 = vpop.permute.xlu0 %886
        %888 = vrot.lane.b32.xlu0 %v401, 96
        %v889 = vpop.permute.xlu0 %888
        %894 = vrot.lane.b32.xlu0 %v410, 96
        %v895 = vpop.permute.xlu0 %894
        %896 = vrot.lane.b32.xlu0 %v411, 96
        %v897 = vpop.permute.xlu0 %896
        %898 = vrot.lane.b32.xlu0 %v412, 96
        %v899 = vpop.permute.xlu0 %898
        %900 = vrot.lane.b32.xlu0 %v413, 96
        %v901 = vpop.permute.xlu0 %900
        %v903 = vsel %vm426, %v875, 0
        %v906 = vsel %vm426, %v877, 0
        %v909 = vsel %vm426, %v879, 0
        %v912 = vsel %vm426, %v881, 0
        %v915 = vsel %vm426, %v883, 0
        %v918 = vsel %vm426, %v885, 0
        %v921 = vsel %vm426, %v887, 0
        %v924 = vsel %vm426, %v889, 0
        %v927 = vsel %vm426, %v895, 0
        %v930 = vsel %vm426, %v897, 0
        %v933 = vsel %vm426, %v899, 0
        %v936 = vsel %vm426, %v901, 0
        %938 = vmatprep.subr.bf16.mxu0 0
        %939 = vmatpush1.bf16.xpose.msra.mxu0 %v927
        %940 = vmatprep.subr.bf16.mxu0 0
        %941 = vmatpush1.bf16.xpose.msra.mxu0 %v930
        %942 = vmatprep.subr.bf16.mxu0 0
        %943 = vmatpush1.bf16.xpose.msra.mxu0 %v933
        %944 = vmatprep.subr.bf16.mxu0 0
        %945 = vmatpush1.bf16.xpose.msra.mxu0 %v936
        %946 = vmatprep.subr.bf16.mxu0 0
        %947 = vmatpush1.bf16.xpose.msra.mxu0 0
        %948 = vmatprep.subr.bf16.mxu0 0
        %949 = vmatpush1.bf16.xpose.msra.mxu0 0
        %950 = vmatprep.subr.bf16.mxu0 0
        %951 = vmatpush1.bf16.xpose.msra.mxu0 0
        %952 = vmatprep.subr.bf16.mxu0 0
        %953 = vmatpush1.bf16.xpose.msra.mxu0 0
        %954 = vmatprep.subr.bf16.mxu0 0
        %955 = vmatpush1.bf16.xpose.msra.mxu0 0
        %956 = vmatprep.subr.bf16.mxu0 0
        %957 = vmatpush1.bf16.xpose.msra.mxu0 0
        %958 = vmatprep.subr.bf16.mxu0 0
        %959 = vmatpush1.bf16.xpose.msra.mxu0 0
        %960 = vmatprep.subr.bf16.mxu0 0
        %961 = vmatpush1.bf16.xpose.msra.mxu0 0
        %962 = vmatprep.subr.bf16.mxu0 0
        %963 = vmatpush1.bf16.xpose.msra.mxu0 0
        %964 = vmatprep.subr.bf16.mxu0 0
        %965 = vmatpush1.bf16.xpose.msra.mxu0 0
        %966 = vmatprep.subr.bf16.mxu0 0
        %967 = vmatpush1.bf16.xpose.msra.mxu0 0
        %968 = vmatprep.subr.bf16.mxu0 0
        %969 = vmatpush1.bf16.xpose.msra.mxu0 0
        %970 = vmatprep.mubr.bf16.mxu0 0
        %971 = vmatmul.mubr.bf16.gmra.mrb[0].mxu0 %v903
        %v972 = vpop.f32.mrb[0].mxu0
        %v973 = vadd.f32 0.0, %v972
        %v974 = vpop.f32.mrb[0].mxu0
        %v975 = vpop.f32.mrb[0].mxu0
        %v976 = vadd.f32 0.0, %v975
        %v977 = vpop.f32.mrb[0].mxu0
        %978 = vmatprep.mubr.bf16.mxu0 0
        %979 = vmatmul.mubr.bf16.gmra.mrb[0].mxu0 %v906
        %v980 = vpop.f32.mrb[0].mxu0
        %v981 = vadd.f32 0.0, %v980
        %v982 = vpop.f32.mrb[0].mxu0
        %v983 = vpop.f32.mrb[0].mxu0
        %v984 = vadd.f32 0.0, %v983
        %v985 = vpop.f32.mrb[0].mxu0
        %986 = vmatprep.mubr.bf16.mxu0 0
        %987 = vmatmul.mubr.bf16.gmra.mrb[0].mxu0 %v909
        %v988 = vpop.f32.mrb[0].mxu0
        %v989 = vadd.f32 0.0, %v988
        %v990 = vpop.f32.mrb[0].mxu0
        %v991 = vpop.f32.mrb[0].mxu0
        %v992 = vadd.f32 0.0, %v991
        %v993 = vpop.f32.mrb[0].mxu0
        %994 = vmatprep.mubr.bf16.mxu0 0
        %995 = vmatmul.mubr.bf16.gmra.mrb[0].mxu0 %v912
        %v996 = vpop.f32.mrb[0].mxu0
        %v997 = vadd.f32 0.0, %v996
        %v998 = vpop.f32.mrb[0].mxu0
        %v999 = vpop.f32.mrb[0].mxu0
        %v1000 = vadd.f32 0.0, %v999
        %v1001 = vpop.f32.mrb[0].mxu0
        %1002 = vmatprep.mubr.bf16.mxu0 0
        %1003 = vmatmul.mubr.bf16.gmra.mrb[0].mxu0 %v915
        %v1004 = vpop.f32.mrb[0].mxu0
        %v1005 = vadd.f32 0.0, %v1004
        %v1006 = vpop.f32.mrb[0].mxu0
        %v1007 = vpop.f32.mrb[0].mxu0
        %v1008 = vadd.f32 0.0, %v1007
        %v1009 = vpop.f32.mrb[0].mxu0
        %1010 = vmatprep.mubr.bf16.mxu0 0
        %1011 = vmatmul.mubr.bf16.gmra.mrb[0].mxu0 %v918
        %v1012 = vpop.f32.mrb[0].mxu0
        %v1013 = vadd.f32 0.0, %v1012
        %v1014 = vpop.f32.mrb[0].mxu0
        %v1015 = vpop.f32.mrb[0].mxu0
        %v1016 = vadd.f32 0.0, %v1015
        %v1017 = vpop.f32.mrb[0].mxu0
        %1018 = vmatprep.mubr.bf16.mxu0 0
        %1019 = vmatmul.mubr.bf16.gmra.mrb[0].mxu0 %v921
        %v1020 = vpop.f32.mrb[0].mxu0
        %v1021 = vadd.f32 0.0, %v1020
        %v1022 = vpop.f32.mrb[0].mxu0
        %v1023 = vpop.f32.mrb[0].mxu0
        %v1024 = vadd.f32 0.0, %v1023
        %v1025 = vpop.f32.mrb[0].mxu0
        %1026 = vmatprep.mubr.bf16.mxu0 0
        %1027 = vmatmul.mubr.bf16.gmra.mrb[0].mxu0 %v924
        %v1028 = vpop.f32.mrb[0].mxu0
        %v1029 = vadd.f32 0.0, %v1028
        %v1030 = vpop.f32.mrb[0].mxu0
        %v1031 = vpop.f32.mrb[0].mxu0
        %v1032 = vadd.f32 0.0, %v1031
        %v1033 = vpop.f32.mrb[0].mxu0
        %1034 = vdwg.mxu0
        %v1035 = vsel %vm560, %v973, -inf
        %1036 = vmax.xlane.f32.xlu0 %v1035
        %v1037 = vpop.xlane.xlu0 %1036
        %v1038 = vsel %vm560, %v976, -inf
        %1039 = vmax.xlane.f32.xlu0 %v1038
        %v1040 = vpop.xlane.xlu0 %1039
        %v1041 = vsel %vm560, %v981, -inf
        %1042 = vmax.xlane.f32.xlu0 %v1041
        %v1043 = vpop.xlane.xlu0 %1042
        %v1044 = vsel %vm560, %v984, -inf
        %1045 = vmax.xlane.f32.xlu0 %v1044
        %v1046 = vpop.xlane.xlu0 %1045
        %v1047 = vsel %vm560, %v989, -inf
        %1048 = vmax.xlane.f32.xlu0 %v1047
        %v1049 = vpop.xlane.xlu0 %1048
        %v1050 = vsel %vm560, %v992, -inf
        %1051 = vmax.xlane.f32.xlu0 %v1050
        %v1052 = vpop.xlane.xlu0 %1051
        %v1053 = vsel %vm560, %v997, -inf
        %1054 = vmax.xlane.f32.xlu0 %v1053
        %v1055 = vpop.xlane.xlu0 %1054
        %v1056 = vsel %vm560, %v1000, -inf
        %1057 = vmax.xlane.f32.xlu0 %v1056
        %v1058 = vpop.xlane.xlu0 %1057
        %v1059 = vsel %vm560, %v1005, -inf
        %1060 = vmax.xlane.f32.xlu0 %v1059
        %v1061 = vpop.xlane.xlu0 %1060
        %v1062 = vsel %vm560, %v1008, -inf
        %1063 = vmax.xlane.f32.xlu0 %v1062
        %v1064 = vpop.xlane.xlu0 %1063
        %v1065 = vsel %vm560, %v1013, -inf
        %1066 = vmax.xlane.f32.xlu0 %v1065
        %v1067 = vpop.xlane.xlu0 %1066
        %v1068 = vsel %vm560, %v1016, -inf
        %1069 = vmax.xlane.f32.xlu0 %v1068
        %v1070 = vpop.xlane.xlu0 %1069
        %v1071 = vsel %vm560, %v1021, -inf
        %1072 = vmax.xlane.f32.xlu0 %v1071
        %v1073 = vpop.xlane.xlu0 %1072
        %v1074 = vsel %vm560, %v1024, -inf
        %1075 = vmax.xlane.f32.xlu0 %v1074
        %v1076 = vpop.xlane.xlu0 %1075
        %v1077 = vsel %vm560, %v1029, -inf
        %1078 = vmax.xlane.f32.xlu0 %v1077
        %v1079 = vpop.xlane.xlu0 %1078
        %v1080 = vsel %vm560, %v1032, -inf
        %1081 = vmax.xlane.f32.xlu0 %v1080
        %v1082 = vpop.xlane.xlu0 %1081
        %v1083 = vsub.f32 %v973, %v1037
        %v1084 = vsub.f32 %v976, %v1040
        %v1085 = vsub.f32 %v981, %v1043
        %v1086 = vsub.f32 %v984, %v1046
        %v1087 = vsub.f32 %v989, %v1049
        %v1088 = vsub.f32 %v992, %v1052
        %v1089 = vsub.f32 %v997, %v1055
        %v1090 = vsub.f32 %v1000, %v1058
        %v1091 = vsub.f32 %v1005, %v1061
        %v1092 = vsub.f32 %v1008, %v1064
        %v1093 = vsub.f32 %v1013, %v1067
        %v1094 = vsub.f32 %v1016, %v1070
        %v1095 = vsub.f32 %v1021, %v1073
        %v1096 = vsub.f32 %v1024, %v1076
        %v1097 = vsub.f32 %v1029, %v1079
        %v1098 = vsub.f32 %v1032, %v1082
        %v1099 = vmul.f32 %v1083, 1.442695
        %v1100 = vpow.pop %v1099
        %v1101 = vmul.f32 %v1084, 1.442695
        %v1102 = vpow.pop %v1101
        %v1103 = vmul.f32 %v1085, 1.442695
        %v1104 = vpow.pop %v1103
        %v1105 = vmul.f32 %v1086, 1.442695
        %v1106 = vpow.pop %v1105
        %v1107 = vmul.f32 %v1087, 1.442695
        %v1108 = vpow.pop %v1107
        %v1109 = vmul.f32 %v1088, 1.442695
        %v1110 = vpow.pop %v1109
        %v1111 = vmul.f32 %v1089, 1.442695
        %v1112 = vpow.pop %v1111
        %v1113 = vmul.f32 %v1090, 1.442695
        %v1114 = vpow.pop %v1113
        %v1115 = vmul.f32 %v1091, 1.442695
        %v1116 = vpow.pop %v1115
        %v1117 = vmul.f32 %v1092, 1.442695
        %v1118 = vpow.pop %v1117
        %v1119 = vmul.f32 %v1093, 1.442695
        %v1120 = vpow.pop %v1119
        %v1121 = vmul.f32 %v1094, 1.442695
        %v1122 = vpow.pop %v1121
        %v1123 = vmul.f32 %v1095, 1.442695
        %v1124 = vpow.pop %v1123
        %v1125 = vmul.f32 %v1096, 1.442695
        %v1126 = vpow.pop %v1125
        %v1127 = vmul.f32 %v1097, 1.442695
        %v1128 = vpow.pop %v1127
        %v1129 = vmul.f32 %v1098, 1.442695
        %v1130 = vpow.pop %v1129
        %v1131 = vsel %vm560, %v1100, 0.0
        %1132 = vadd.xlane.f32.xlu0 %v1131
        %v1133 = vpop.xlane.xlu0 %1132
        %v1134 = vsel %vm560, %v1102, 0.0
        %1135 = vadd.xlane.f32.xlu0 %v1134
        %v1136 = vpop.xlane.xlu0 %1135
        %v1137 = vsel %vm560, %v1104, 0.0
        %1138 = vadd.xlane.f32.xlu0 %v1137
        %v1139 = vpop.xlane.xlu0 %1138
        %v1140 = vsel %vm560, %v1106, 0.0
        %1141 = vadd.xlane.f32.xlu0 %v1140
        %v1142 = vpop.xlane.xlu0 %1141
        %v1143 = vsel %vm560, %v1108, 0.0
        %1144 = vadd.xlane.f32.xlu0 %v1143
        %v1145 = vpop.xlane.xlu0 %1144
        %v1146 = vsel %vm560, %v1110, 0.0
        %1147 = vadd.xlane.f32.xlu0 %v1146
        %v1148 = vpop.xlane.xlu0 %1147
        %v1149 = vsel %vm560, %v1112, 0.0
        %1150 = vadd.xlane.f32.xlu0 %v1149
        %v1151 = vpop.xlane.xlu0 %1150
        %v1152 = vsel %vm560, %v1114, 0.0
        %1153 = vadd.xlane.f32.xlu0 %v1152
        %v1154 = vpop.xlane.xlu0 %1153
        %v1155 = vsel %vm560, %v1116, 0.0
        %1156 = vadd.xlane.f32.xlu0 %v1155
        %v1157 = vpop.xlane.xlu0 %1156
        %v1158 = vsel %vm560, %v1118, 0.0
        %1159 = vadd.xlane.f32.xlu0 %v1158
        %v1160 = vpop.xlane.xlu0 %1159
        %v1161 = vsel %vm560, %v1120, 0.0
        %1162 = vadd.xlane.f32.xlu0 %v1161
        %v1163 = vpop.xlane.xlu0 %1162
        %v1164 = vsel %vm560, %v1122, 0.0
        %1165 = vadd.xlane.f32.xlu0 %v1164
        %v1166 = vpop.xlane.xlu0 %1165
        %v1167 = vsel %vm560, %v1124, 0.0
        %1168 = vadd.xlane.f32.xlu0 %v1167
        %v1169 = vpop.xlane.xlu0 %1168
        %v1170 = vsel %vm560, %v1126, 0.0
        %1171 = vadd.xlane.f32.xlu0 %v1170
        %v1172 = vpop.xlane.xlu0 %1171
        %v1173 = vsel %vm560, %v1128, 0.0
        %1174 = vadd.xlane.f32.xlu0 %v1173
        %v1175 = vpop.xlane.xlu0 %1174
        %v1176 = vsel %vm560, %v1130, 0.0
        %1177 = vadd.xlane.f32.xlu0 %v1176
        %v1178 = vpop.xlane.xlu0 %1177
        %v1179 = vpack.c.bf16 %v1102, %v1100
        %v1180 = vpack.c.bf16 %v1106, %v1104
        %v1181 = vpack.c.bf16 %v1110, %v1108
        %v1182 = vpack.c.bf16 %v1114, %v1112
        %v1183 = vpack.c.bf16 %v1118, %v1116
        %v1184 = vpack.c.bf16 %v1122, %v1120
        %v1185 = vpack.c.bf16 %v1126, %v1124
        %v1186 = vpack.c.bf16 %v1130, %v1128
        %1191 = vrot.lane.b32.xlu0 %v422, 96
        %v1192 = vpop.permute.xlu0 %1191
        %1193 = vrot.lane.b32.xlu0 %v423, 96
        %v1194 = vpop.permute.xlu0 %1193
        %1195 = vrot.lane.b32.xlu0 %v424, 96
        %v1196 = vpop.permute.xlu0 %1195
        %1197 = vrot.lane.b32.xlu0 %v425, 96
        %v1198 = vpop.permute.xlu0 %1197
        %v1204 = vsel %vm560, %v1179, 0
        %v1207 = vsel %vm560, %v1180, 0
        %v1210 = vsel %vm560, %v1181, 0
        %v1213 = vsel %vm560, %v1182, 0
        %v1216 = vsel %vm560, %v1183, 0
        %v1219 = vsel %vm560, %v1184, 0
        %v1222 = vsel %vm560, %v1185, 0
        %v1225 = vsel %vm560, %v1186, 0
        %1227 = vmatprep.subr.bf16.mxu0 0
        %1228 = vmatpush1.bf16.msra.mxu0 %v1192
        %1229 = vmatprep.subr.bf16.mxu0 0
        %1230 = vmatpush1.bf16.msra.mxu0 %v1194
        %1231 = vmatprep.subr.bf16.mxu0 0
        %1232 = vmatpush1.bf16.msra.mxu0 %v1196
        %1233 = vmatprep.subr.bf16.mxu0 0
        %1234 = vmatpush1.bf16.msra.mxu0 %v1198
        %1235 = vmatprep.subr.bf16.mxu0 0
        %1236 = vmatpush1.bf16.msra.mxu0 0
        %1237 = vmatprep.subr.bf16.mxu0 0
        %1238 = vmatpush1.bf16.msra.mxu0 0
        %1239 = vmatprep.subr.bf16.mxu0 0
        %1240 = vmatpush1.bf16.msra.mxu0 0
        %1241 = vmatprep.subr.bf16.mxu0 0
        %1242 = vmatpush1.bf16.msra.mxu0 0
        %1243 = vmatprep.subr.bf16.mxu0 0
        %1244 = vmatpush1.bf16.msra.mxu0 0
        %1245 = vmatprep.subr.bf16.mxu0 0
        %1246 = vmatpush1.bf16.msra.mxu0 0
        %1247 = vmatprep.subr.bf16.mxu0 0
        %1248 = vmatpush1.bf16.msra.mxu0 0
        %1249 = vmatprep.subr.bf16.mxu0 0
        %1250 = vmatpush1.bf16.msra.mxu0 0
        %1251 = vmatprep.subr.bf16.mxu0 0
        %1252 = vmatpush1.bf16.msra.mxu0 0
        %1253 = vmatprep.subr.bf16.mxu0 0
        %1254 = vmatpush1.bf16.msra.mxu0 0
        %1255 = vmatprep.subr.bf16.mxu0 0
        %1256 = vmatpush1.bf16.msra.mxu0 0
        %1257 = vmatprep.subr.bf16.mxu0 0
        %1258 = vmatpush1.bf16.msra.mxu0 0
        %1259 = vmatprep.mubr.bf16.mxu0 0
        %1260 = vmatmul.mubr.bf16.gmra.mrb[0].mxu0 %v1204
        %v1261 = vpop.f32.mrb[0].mxu0
        %v1262 = vadd.f32 0.0, %v1261
        %v1263 = vpop.f32.mrb[0].mxu0
        %v1264 = vpop.f32.mrb[0].mxu0
        %v1265 = vadd.f32 0.0, %v1264
        %v1266 = vpop.f32.mrb[0].mxu0
        %1267 = vmatprep.mubr.bf16.mxu0 0
        %1268 = vmatmul.mubr.bf16.gmra.mrb[0].mxu0 %v1207
        %v1269 = vpop.f32.mrb[0].mxu0
        %v1270 = vadd.f32 0.0, %v1269
        %v1271 = vpop.f32.mrb[0].mxu0
        %v1272 = vpop.f32.mrb[0].mxu0
        %v1273 = vadd.f32 0.0, %v1272
        %v1274 = vpop.f32.mrb[0].mxu0
        %1275 = vmatprep.mubr.bf16.mxu0 0
        %1276 = vmatmul.mubr.bf16.gmra.mrb[0].mxu0 %v1210
        %v1277 = vpop.f32.mrb[0].mxu0
        %v1278 = vadd.f32 0.0, %v1277
        %v1279 = vpop.f32.mrb[0].mxu0
        %v1280 = vpop.f32.mrb[0].mxu0
        %v1281 = vadd.f32 0.0, %v1280
        %v1282 = vpop.f32.mrb[0].mxu0
        %1283 = vmatprep.mubr.bf16.mxu0 0
        %1284 = vmatmul.mubr.bf16.gmra.mrb[0].mxu0 %v1213
        %v1285 = vpop.f32.mrb[0].mxu0
        %v1286 = vadd.f32 0.0, %v1285
        %v1287 = vpop.f32.mrb[0].mxu0
        %v1288 = vpop.f32.mrb[0].mxu0
        %v1289 = vadd.f32 0.0, %v1288
        %v1290 = vpop.f32.mrb[0].mxu0
        %1291 = vmatprep.mubr.bf16.mxu0 0
        %1292 = vmatmul.mubr.bf16.gmra.mrb[0].mxu0 %v1216
        %v1293 = vpop.f32.mrb[0].mxu0
        %v1294 = vadd.f32 0.0, %v1293
        %v1295 = vpop.f32.mrb[0].mxu0
        %v1296 = vpop.f32.mrb[0].mxu0
        %v1297 = vadd.f32 0.0, %v1296
        %v1298 = vpop.f32.mrb[0].mxu0
        %1299 = vmatprep.mubr.bf16.mxu0 0
        %1300 = vmatmul.mubr.bf16.gmra.mrb[0].mxu0 %v1219
        %v1301 = vpop.f32.mrb[0].mxu0
        %v1302 = vadd.f32 0.0, %v1301
        %v1303 = vpop.f32.mrb[0].mxu0
        %v1304 = vpop.f32.mrb[0].mxu0
        %v1305 = vadd.f32 0.0, %v1304
        %v1306 = vpop.f32.mrb[0].mxu0
        %1307 = vmatprep.mubr.bf16.mxu0 0
        %1308 = vmatmul.mubr.bf16.gmra.mrb[0].mxu0 %v1222
        %v1309 = vpop.f32.mrb[0].mxu0
        %v1310 = vadd.f32 0.0, %v1309
        %v1311 = vpop.f32.mrb[0].mxu0
        %v1312 = vpop.f32.mrb[0].mxu0
        %v1313 = vadd.f32 0.0, %v1312
        %v1314 = vpop.f32.mrb[0].mxu0
        %1315 = vmatprep.mubr.bf16.mxu0 0
        %1316 = vmatmul.mubr.bf16.gmra.mrb[0].mxu0 %v1225
        %v1317 = vpop.f32.mrb[0].mxu0
        %v1318 = vadd.f32 0.0, %v1317
        %v1319 = vpop.f32.mrb[0].mxu0
        %v1320 = vpop.f32.mrb[0].mxu0
        %v1321 = vadd.f32 0.0, %v1320
        %v1322 = vpop.f32.mrb[0].mxu0
        %1323 = vdwg.mxu0
        %v1324 = vrcp.pop %v1133
        %v1325 = vrcp.pop %v1136
        %v1326 = vrcp.pop %v1139
        %v1327 = vrcp.pop %v1142
        %v1328 = vrcp.pop %v1145
        %v1329 = vrcp.pop %v1148
        %v1330 = vrcp.pop %v1151
        %v1331 = vrcp.pop %v1154
        %v1332 = vrcp.pop %v1157
        %v1333 = vrcp.pop %v1160
        %v1334 = vrcp.pop %v1163
        %v1335 = vrcp.pop %v1166
        %v1336 = vrcp.pop %v1169
        %v1337 = vrcp.pop %v1172
        %v1338 = vrcp.pop %v1175
        %v1339 = vrcp.pop %v1178
        %v1340 = vmul.f32 %v1262, %v1324
        %v1341 = vmul.f32 %v1265, %v1325
        %v1342 = vmul.f32 %v1270, %v1326
        %v1343 = vmul.f32 %v1273, %v1327
        %v1344 = vmul.f32 %v1278, %v1328
        %v1345 = vmul.f32 %v1281, %v1329
        %v1346 = vmul.f32 %v1286, %v1330
        %v1347 = vmul.f32 %v1289, %v1331
        %v1348 = vmul.f32 %v1294, %v1332
        %v1349 = vmul.f32 %v1297, %v1333
        %v1350 = vmul.f32 %v1302, %v1334
        %v1351 = vmul.f32 %v1305, %v1335
        %v1352 = vmul.f32 %v1310, %v1336
        %v1353 = vmul.f32 %v1313, %v1337
        %v1354 = vmul.f32 %v1318, %v1338
        %v1355 = vmul.f32 %v1321, %v1339
        %1356 = vrot.lane.b32.xlu0 %v394, 64
        %v1357 = vpop.permute.xlu0 %1356
        %1358 = vrot.lane.b32.xlu0 %v395, 64
        %v1359 = vpop.permute.xlu0 %1358
        %1360 = vrot.lane.b32.xlu0 %v396, 64
        %v1361 = vpop.permute.xlu0 %1360
        %1362 = vrot.lane.b32.xlu0 %v397, 64
        %v1363 = vpop.permute.xlu0 %1362
        %1364 = vrot.lane.b32.xlu0 %v398, 64
        %v1365 = vpop.permute.xlu0 %1364
        %1366 = vrot.lane.b32.xlu0 %v399, 64
        %v1367 = vpop.permute.xlu0 %1366
        %1368 = vrot.lane.b32.xlu0 %v400, 64
        %v1369 = vpop.permute.xlu0 %1368
        %1370 = vrot.lane.b32.xlu0 %v401, 64
        %v1371 = vpop.permute.xlu0 %1370
        %1372 = vrot.lane.b32.xlu0 %v410, 64
        %v1373 = vpop.permute.xlu0 %1372
        %1374 = vrot.lane.b32.xlu0 %v411, 64
        %v1375 = vpop.permute.xlu0 %1374
        %1376 = vrot.lane.b32.xlu0 %v412, 64
        %v1377 = vpop.permute.xlu0 %1376
        %1378 = vrot.lane.b32.xlu0 %v413, 64
        %v1379 = vpop.permute.xlu0 %1378
        %v1381 = vsel %vm426, %v1357, 0
        %v1384 = vsel %vm426, %v1359, 0
        %v1387 = vsel %vm426, %v1361, 0
        %v1390 = vsel %vm426, %v1363, 0
        %v1393 = vsel %vm426, %v1365, 0
        %v1396 = vsel %vm426, %v1367, 0
        %v1399 = vsel %vm426, %v1369, 0
        %v1402 = vsel %vm426, %v1371, 0
        %v1405 = vsel %vm426, %v1373, 0
        %v1408 = vsel %vm426, %v1375, 0
        %v1411 = vsel %vm426, %v1377, 0
        %v1414 = vsel %vm426, %v1379, 0
        %1416 = vmatprep.subr.bf16.mxu0 0
        %1417 = vmatpush1.bf16.xpose.msra.mxu0 %v1405
        %1418 = vmatprep.subr.bf16.mxu0 0
        %1419 = vmatpush1.bf16.xpose.msra.mxu0 %v1408
        %1420 = vmatprep.subr.bf16.mxu0 0
        %1421 = vmatpush1.bf16.xpose.msra.mxu0 %v1411
        %1422 = vmatprep.subr.bf16.mxu0 0
        %1423 = vmatpush1.bf16.xpose.msra.mxu0 %v1414
        %1424 = vmatprep.subr.bf16.mxu0 0
        %1425 = vmatpush1.bf16.xpose.msra.mxu0 0
        %1426 = vmatprep.subr.bf16.mxu0 0
        %1427 = vmatpush1.bf16.xpose.msra.mxu0 0
        %1428 = vmatprep.subr.bf16.mxu0 0
        %1429 = vmatpush1.bf16.xpose.msra.mxu0 0
        %1430 = vmatprep.subr.bf16.mxu0 0
        %1431 = vmatpush1.bf16.xpose.msra.mxu0 0
        %1432 = vmatprep.subr.bf16.mxu0 0
        %1433 = vmatpush1.bf16.xpose.msra.mxu0 0
        %1434 = vmatprep.subr.bf16.mxu0 0
        %1435 = vmatpush1.bf16.xpose.msra.mxu0 0
        %1436 = vmatprep.subr.bf16.mxu0 0
        %1437 = vmatpush1.bf16.xpose.msra.mxu0 0
        %1438 = vmatprep.subr.bf16.mxu0 0
        %1439 = vmatpush1.bf16.xpose.msra.mxu0 0
        %1440 = vmatprep.subr.bf16.mxu0 0
        %1441 = vmatpush1.bf16.xpose.msra.mxu0 0
        %1442 = vmatprep.subr.bf16.mxu0 0
        %1443 = vmatpush1.bf16.xpose.msra.mxu0 0
        %1444 = vmatprep.subr.bf16.mxu0 0
        %1445 = vmatpush1.bf16.xpose.msra.mxu0 0
        %1446 = vmatprep.subr.bf16.mxu0 0
        %1447 = vmatpush1.bf16.xpose.msra.mxu0 0
        %1448 = vmatprep.mubr.bf16.mxu0 0
        %1449 = vmatmul.mubr.bf16.gmra.mrb[0].mxu0 %v1381
        %v1450 = vpop.f32.mrb[0].mxu0
        %v1451 = vadd.f32 0.0, %v1450
        %v1452 = vpop.f32.mrb[0].mxu0
        %v1453 = vpop.f32.mrb[0].mxu0
        %v1454 = vadd.f32 0.0, %v1453
        %v1455 = vpop.f32.mrb[0].mxu0
        %1456 = vmatprep.mubr.bf16.mxu0 0
        %1457 = vmatmul.mubr.bf16.gmra.mrb[0].mxu0 %v1384
        %v1458 = vpop.f32.mrb[0].mxu0
        %v1459 = vadd.f32 0.0, %v1458
        %v1460 = vpop.f32.mrb[0].mxu0
        %v1461 = vpop.f32.mrb[0].mxu0
        %v1462 = vadd.f32 0.0, %v1461
        %v1463 = vpop.f32.mrb[0].mxu0
        %1464 = vmatprep.mubr.bf16.mxu0 0
        %1465 = vmatmul.mubr.bf16.gmra.mrb[0].mxu0 %v1387
        %v1466 = vpop.f32.mrb[0].mxu0
        %v1467 = vadd.f32 0.0, %v1466
        %v1468 = vpop.f32.mrb[0].mxu0
        %v1469 = vpop.f32.mrb[0].mxu0
        %v1470 = vadd.f32 0.0, %v1469
        %v1471 = vpop.f32.mrb[0].mxu0
        %1472 = vmatprep.mubr.bf16.mxu0 0
        %1473 = vmatmul.mubr.bf16.gmra.mrb[0].mxu0 %v1390
        %v1474 = vpop.f32.mrb[0].mxu0
        %v1475 = vadd.f32 0.0, %v1474
        %v1476 = vpop.f32.mrb[0].mxu0
        %v1477 = vpop.f32.mrb[0].mxu0
        %v1478 = vadd.f32 0.0, %v1477
        %v1479 = vpop.f32.mrb[0].mxu0
        %1480 = vmatprep.mubr.bf16.mxu0 0
        %1481 = vmatmul.mubr.bf16.gmra.mrb[0].mxu0 %v1393
        %v1482 = vpop.f32.mrb[0].mxu0
        %v1483 = vadd.f32 0.0, %v1482
        %v1484 = vpop.f32.mrb[0].mxu0
        %v1485 = vpop.f32.mrb[0].mxu0
        %v1486 = vadd.f32 0.0, %v1485
        %v1487 = vpop.f32.mrb[0].mxu0
        %1488 = vmatprep.mubr.bf16.mxu0 0
        %1489 = vmatmul.mubr.bf16.gmra.mrb[0].mxu0 %v1396
        %v1490 = vpop.f32.mrb[0].mxu0
        %v1491 = vadd.f32 0.0, %v1490
        %v1492 = vpop.f32.mrb[0].mxu0
        %v1493 = vpop.f32.mrb[0].mxu0
        %v1494 = vadd.f32 0.0, %v1493
        %v1495 = vpop.f32.mrb[0].mxu0
        %1496 = vmatprep.mubr.bf16.mxu0 0
        %1497 = vmatmul.mubr.bf16.gmra.mrb[0].mxu0 %v1399
        %v1498 = vpop.f32.mrb[0].mxu0
        %v1499 = vadd.f32 0.0, %v1498
        %v1500 = vpop.f32.mrb[0].mxu0
        %v1501 = vpop.f32.mrb[0].mxu0
        %v1502 = vadd.f32 0.0, %v1501
        %v1503 = vpop.f32.mrb[0].mxu0
        %1504 = vmatprep.mubr.bf16.mxu0 0
        %1505 = vmatmul.mubr.bf16.gmra.mrb[0].mxu0 %v1402
        %v1506 = vpop.f32.mrb[0].mxu0
        %v1507 = vadd.f32 0.0, %v1506
        %v1508 = vpop.f32.mrb[0].mxu0
        %v1509 = vpop.f32.mrb[0].mxu0
        %v1510 = vadd.f32 0.0, %v1509
        %v1511 = vpop.f32.mrb[0].mxu0
        %1512 = vdwg.mxu0
        %v1513 = vsel %vm560, %v1451, -inf
        %1514 = vmax.xlane.f32.xlu0 %v1513
        %v1515 = vpop.xlane.xlu0 %1514
        %v1516 = vsel %vm560, %v1454, -inf
        %1517 = vmax.xlane.f32.xlu0 %v1516
        %v1518 = vpop.xlane.xlu0 %1517
        %v1519 = vsel %vm560, %v1459, -inf
        %1520 = vmax.xlane.f32.xlu0 %v1519
        %v1521 = vpop.xlane.xlu0 %1520
        %v1522 = vsel %vm560, %v1462, -inf
        %1523 = vmax.xlane.f32.xlu0 %v1522
        %v1524 = vpop.xlane.xlu0 %1523
        %v1525 = vsel %vm560, %v1467, -inf
        %1526 = vmax.xlane.f32.xlu0 %v1525
        %v1527 = vpop.xlane.xlu0 %1526
        %v1528 = vsel %vm560, %v1470, -inf
        %1529 = vmax.xlane.f32.xlu0 %v1528
        %v1530 = vpop.xlane.xlu0 %1529
        %v1531 = vsel %vm560, %v1475, -inf
        %1532 = vmax.xlane.f32.xlu0 %v1531
        %v1533 = vpop.xlane.xlu0 %1532
        %v1534 = vsel %vm560, %v1478, -inf
        %1535 = vmax.xlane.f32.xlu0 %v1534
        %v1536 = vpop.xlane.xlu0 %1535
        %v1537 = vsel %vm560, %v1483, -inf
        %1538 = vmax.xlane.f32.xlu0 %v1537
        %v1539 = vpop.xlane.xlu0 %1538
        %v1540 = vsel %vm560, %v1486, -inf
        %1541 = vmax.xlane.f32.xlu0 %v1540
        %v1542 = vpop.xlane.xlu0 %1541
        %v1543 = vsel %vm560, %v1491, -inf
        %1544 = vmax.xlane.f32.xlu0 %v1543
        %v1545 = vpop.xlane.xlu0 %1544
        %v1546 = vsel %vm560, %v1494, -inf
        %1547 = vmax.xlane.f32.xlu0 %v1546
        %v1548 = vpop.xlane.xlu0 %1547
        %v1549 = vsel %vm560, %v1499, -inf
        %1550 = vmax.xlane.f32.xlu0 %v1549
        %v1551 = vpop.xlane.xlu0 %1550
        %v1552 = vsel %vm560, %v1502, -inf
        %1553 = vmax.xlane.f32.xlu0 %v1552
        %v1554 = vpop.xlane.xlu0 %1553
        %v1555 = vsel %vm560, %v1507, -inf
        %1556 = vmax.xlane.f32.xlu0 %v1555
        %v1557 = vpop.xlane.xlu0 %1556
        %v1558 = vsel %vm560, %v1510, -inf
        %1559 = vmax.xlane.f32.xlu0 %v1558
        %v1560 = vpop.xlane.xlu0 %1559
        %v1561 = vsub.f32 %v1451, %v1515
        %v1562 = vsub.f32 %v1454, %v1518
        %v1563 = vsub.f32 %v1459, %v1521
        %v1564 = vsub.f32 %v1462, %v1524
        %v1565 = vsub.f32 %v1467, %v1527
        %v1566 = vsub.f32 %v1470, %v1530
        %v1567 = vsub.f32 %v1475, %v1533
        %v1568 = vsub.f32 %v1478, %v1536
        %v1569 = vsub.f32 %v1483, %v1539
        %v1570 = vsub.f32 %v1486, %v1542
        %v1571 = vsub.f32 %v1491, %v1545
        %v1572 = vsub.f32 %v1494, %v1548
        %v1573 = vsub.f32 %v1499, %v1551
        %v1574 = vsub.f32 %v1502, %v1554
        %v1575 = vsub.f32 %v1507, %v1557
        %v1576 = vsub.f32 %v1510, %v1560
        %v1577 = vmul.f32 %v1561, 1.442695
        %v1578 = vpow.pop %v1577
        %v1579 = vmul.f32 %v1562, 1.442695
        %v1580 = vpow.pop %v1579
        %v1581 = vmul.f32 %v1563, 1.442695
        %v1582 = vpow.pop %v1581
        %v1583 = vmul.f32 %v1564, 1.442695
        %v1584 = vpow.pop %v1583
        %v1585 = vmul.f32 %v1565, 1.442695
        %v1586 = vpow.pop %v1585
        %v1587 = vmul.f32 %v1566, 1.442695
        %v1588 = vpow.pop %v1587
        %v1589 = vmul.f32 %v1567, 1.442695
        %v1590 = vpow.pop %v1589
        %v1591 = vmul.f32 %v1568, 1.442695
        %v1592 = vpow.pop %v1591
        %v1593 = vmul.f32 %v1569, 1.442695
        %v1594 = vpow.pop %v1593
        %v1595 = vmul.f32 %v1570, 1.442695
        %v1596 = vpow.pop %v1595
        %v1597 = vmul.f32 %v1571, 1.442695
        %v1598 = vpow.pop %v1597
        %v1599 = vmul.f32 %v1572, 1.442695
        %v1600 = vpow.pop %v1599
        %v1601 = vmul.f32 %v1573, 1.442695
        %v1602 = vpow.pop %v1601
        %v1603 = vmul.f32 %v1574, 1.442695
        %v1604 = vpow.pop %v1603
        %v1605 = vmul.f32 %v1575, 1.442695
        %v1606 = vpow.pop %v1605
        %v1607 = vmul.f32 %v1576, 1.442695
        %v1608 = vpow.pop %v1607
        %v1609 = vsel %vm560, %v1578, 0.0
        %1610 = vadd.xlane.f32.xlu0 %v1609
        %v1611 = vpop.xlane.xlu0 %1610
        %v1612 = vsel %vm560, %v1580, 0.0
        %1613 = vadd.xlane.f32.xlu0 %v1612
        %v1614 = vpop.xlane.xlu0 %1613
        %v1615 = vsel %vm560, %v1582, 0.0
        %1616 = vadd.xlane.f32.xlu0 %v1615
        %v1617 = vpop.xlane.xlu0 %1616
        %v1618 = vsel %vm560, %v1584, 0.0
        %1619 = vadd.xlane.f32.xlu0 %v1618
        %v1620 = vpop.xlane.xlu0 %1619
        %v1621 = vsel %vm560, %v1586, 0.0
        %1622 = vadd.xlane.f32.xlu0 %v1621
        %v1623 = vpop.xlane.xlu0 %1622
        %v1624 = vsel %vm560, %v1588, 0.0
        %1625 = vadd.xlane.f32.xlu0 %v1624
        %v1626 = vpop.xlane.xlu0 %1625
        %v1627 = vsel %vm560, %v1590, 0.0
        %1628 = vadd.xlane.f32.xlu0 %v1627
        %v1629 = vpop.xlane.xlu0 %1628
        %v1630 = vsel %vm560, %v1592, 0.0
        %1631 = vadd.xlane.f32.xlu0 %v1630
        %v1632 = vpop.xlane.xlu0 %1631
        %v1633 = vsel %vm560, %v1594, 0.0
        %1634 = vadd.xlane.f32.xlu0 %v1633
        %v1635 = vpop.xlane.xlu0 %1634
        %v1636 = vsel %vm560, %v1596, 0.0
        %1637 = vadd.xlane.f32.xlu0 %v1636
        %v1638 = vpop.xlane.xlu0 %1637
        %v1639 = vsel %vm560, %v1598, 0.0
        %1640 = vadd.xlane.f32.xlu0 %v1639
        %v1641 = vpop.xlane.xlu0 %1640
        %v1642 = vsel %vm560, %v1600, 0.0
        %1643 = vadd.xlane.f32.xlu0 %v1642
        %v1644 = vpop.xlane.xlu0 %1643
        %v1645 = vsel %vm560, %v1602, 0.0
        %1646 = vadd.xlane.f32.xlu0 %v1645
        %v1647 = vpop.xlane.xlu0 %1646
        %v1648 = vsel %vm560, %v1604, 0.0
        %1649 = vadd.xlane.f32.xlu0 %v1648
        %v1650 = vpop.xlane.xlu0 %1649
        %v1651 = vsel %vm560, %v1606, 0.0
        %1652 = vadd.xlane.f32.xlu0 %v1651
        %v1653 = vpop.xlane.xlu0 %1652
        %v1654 = vsel %vm560, %v1608, 0.0
        %1655 = vadd.xlane.f32.xlu0 %v1654
        %v1656 = vpop.xlane.xlu0 %1655
        %v1657 = vpack.c.bf16 %v1580, %v1578
        %v1658 = vpack.c.bf16 %v1584, %v1582
        %v1659 = vpack.c.bf16 %v1588, %v1586
        %v1660 = vpack.c.bf16 %v1592, %v1590
        %v1661 = vpack.c.bf16 %v1596, %v1594
        %v1662 = vpack.c.bf16 %v1600, %v1598
        %v1663 = vpack.c.bf16 %v1604, %v1602
        %v1664 = vpack.c.bf16 %v1608, %v1606
        %1665 = vrot.lane.b32.xlu0 %v422, 64
        %v1666 = vpop.permute.xlu0 %1665
        %1667 = vrot.lane.b32.xlu0 %v423, 64
        %v1668 = vpop.permute.xlu0 %1667
        %1669 = vrot.lane.b32.xlu0 %v424, 64
        %v1670 = vpop.permute.xlu0 %1669
        %1671 = vrot.lane.b32.xlu0 %v425, 64
        %v1672 = vpop.permute.xlu0 %1671
        %v1678 = vsel %vm560, %v1657, 0
        %v1681 = vsel %vm560, %v1658, 0
        %v1684 = vsel %vm560, %v1659, 0
        %v1687 = vsel %vm560, %v1660, 0
        %v1690 = vsel %vm560, %v1661, 0
        %v1693 = vsel %vm560, %v1662, 0
        %v1696 = vsel %vm560, %v1663, 0
        %v1699 = vsel %vm560, %v1664, 0
        %1701 = vmatprep.subr.bf16.mxu0 0
        %1702 = vmatpush1.bf16.msra.mxu0 %v1666
        %1703 = vmatprep.subr.bf16.mxu0 0
        %1704 = vmatpush1.bf16.msra.mxu0 %v1668
        %1705 = vmatprep.subr.bf16.mxu0 0
        %1706 = vmatpush1.bf16.msra.mxu0 %v1670
        %1707 = vmatprep.subr.bf16.mxu0 0
        %1708 = vmatpush1.bf16.msra.mxu0 %v1672
        %1709 = vmatprep.subr.bf16.mxu0 0
        %1710 = vmatpush1.bf16.msra.mxu0 0
        %1711 = vmatprep.subr.bf16.mxu0 0
        %1712 = vmatpush1.bf16.msra.mxu0 0
        %1713 = vmatprep.subr.bf16.mxu0 0
        %1714 = vmatpush1.bf16.msra.mxu0 0
        %1715 = vmatprep.subr.bf16.mxu0 0
        %1716 = vmatpush1.bf16.msra.mxu0 0
        %1717 = vmatprep.subr.bf16.mxu0 0
        %1718 = vmatpush1.bf16.msra.mxu0 0
        %1719 = vmatprep.subr.bf16.mxu0 0
        %1720 = vmatpush1.bf16.msra.mxu0 0
        %1721 = vmatprep.subr.bf16.mxu0 0
        %1722 = vmatpush1.bf16.msra.mxu0 0
        %1723 = vmatprep.subr.bf16.mxu0 0
        %1724 = vmatpush1.bf16.msra.mxu0 0
        %1725 = vmatprep.subr.bf16.mxu0 0
        %1726 = vmatpush1.bf16.msra.mxu0 0
        %1727 = vmatprep.subr.bf16.mxu0 0
        %1728 = vmatpush1.bf16.msra.mxu0 0
        %1729 = vmatprep.subr.bf16.mxu0 0
        %1730 = vmatpush1.bf16.msra.mxu0 0
        %1731 = vmatprep.subr.bf16.mxu0 0
        %1732 = vmatpush1.bf16.msra.mxu0 0
        %1733 = vmatprep.mubr.bf16.mxu0 0
        %1734 = vmatmul.mubr.bf16.gmra.mrb[0].mxu0 %v1678
        %v1735 = vpop.f32.mrb[0].mxu0
        %v1736 = vadd.f32 0.0, %v1735
        %v1737 = vpop.f32.mrb[0].mxu0
        %v1738 = vpop.f32.mrb[0].mxu0
        %v1739 = vadd.f32 0.0, %v1738
        %v1740 = vpop.f32.mrb[0].mxu0
        %1741 = vmatprep.mubr.bf16.mxu0 0
        %1742 = vmatmul.mubr.bf16.gmra.mrb[0].mxu0 %v1681
        %v1743 = vpop.f32.mrb[0].mxu0
        %v1744 = vadd.f32 0.0, %v1743
        %v1745 = vpop.f32.mrb[0].mxu0
        %v1746 = vpop.f32.mrb[0].mxu0
        %v1747 = vadd.f32 0.0, %v1746
        %v1748 = vpop.f32.mrb[0].mxu0
        %1749 = vmatprep.mubr.bf16.mxu0 0
        %1750 = vmatmul.mubr.bf16.gmra.mrb[0].mxu0 %v1684
        %v1751 = vpop.f32.mrb[0].mxu0
        %v1752 = vadd.f32 0.0, %v1751
        %v1753 = vpop.f32.mrb[0].mxu0
        %v1754 = vpop.f32.mrb[0].mxu0
        %v1755 = vadd.f32 0.0, %v1754
        %v1756 = vpop.f32.mrb[0].mxu0
        %1757 = vmatprep.mubr.bf16.mxu0 0
        %1758 = vmatmul.mubr.bf16.gmra.mrb[0].mxu0 %v1687
        %v1759 = vpop.f32.mrb[0].mxu0
        %v1760 = vadd.f32 0.0, %v1759
        %v1761 = vpop.f32.mrb[0].mxu0
        %v1762 = vpop.f32.mrb[0].mxu0
        %v1763 = vadd.f32 0.0, %v1762
        %v1764 = vpop.f32.mrb[0].mxu0
        %1765 = vmatprep.mubr.bf16.mxu0 0
        %1766 = vmatmul.mubr.bf16.gmra.mrb[0].mxu0 %v1690
        %v1767 = vpop.f32.mrb[0].mxu0
        %v1768 = vadd.f32 0.0, %v1767
        %v1769 = vpop.f32.mrb[0].mxu0
        %v1770 = vpop.f32.mrb[0].mxu0
        %v1771 = vadd.f32 0.0, %v1770
        %v1772 = vpop.f32.mrb[0].mxu0
        %1773 = vmatprep.mubr.bf16.mxu0 0
        %1774 = vmatmul.mubr.bf16.gmra.mrb[0].mxu0 %v1693
        %v1775 = vpop.f32.mrb[0].mxu0
        %v1776 = vadd.f32 0.0, %v1775
        %v1777 = vpop.f32.mrb[0].mxu0
        %v1778 = vpop.f32.mrb[0].mxu0
        %v1779 = vadd.f32 0.0, %v1778
        %v1780 = vpop.f32.mrb[0].mxu0
        %1781 = vmatprep.mubr.bf16.mxu0 0
        %1782 = vmatmul.mubr.bf16.gmra.mrb[0].mxu0 %v1696
        %v1783 = vpop.f32.mrb[0].mxu0
        %v1784 = vadd.f32 0.0, %v1783
        %v1785 = vpop.f32.mrb[0].mxu0
        %v1786 = vpop.f32.mrb[0].mxu0
        %v1787 = vadd.f32 0.0, %v1786
        %v1788 = vpop.f32.mrb[0].mxu0
        %1789 = vmatprep.mubr.bf16.mxu0 0
        %1790 = vmatmul.mubr.bf16.gmra.mrb[0].mxu0 %v1699
        %v1791 = vpop.f32.mrb[0].mxu0
        %v1792 = vadd.f32 0.0, %v1791
        %v1793 = vpop.f32.mrb[0].mxu0
        %v1794 = vpop.f32.mrb[0].mxu0
        %v1795 = vadd.f32 0.0, %v1794
        %v1796 = vpop.f32.mrb[0].mxu0
        %1797 = vdwg.mxu0
        %v1798 = vrcp.pop %v1611
        %v1799 = vrcp.pop %v1614
        %v1800 = vrcp.pop %v1617
        %v1801 = vrcp.pop %v1620
        %v1802 = vrcp.pop %v1623
        %v1803 = vrcp.pop %v1626
        %v1804 = vrcp.pop %v1629
        %v1805 = vrcp.pop %v1632
        %v1806 = vrcp.pop %v1635
        %v1807 = vrcp.pop %v1638
        %v1808 = vrcp.pop %v1641
        %v1809 = vrcp.pop %v1644
        %v1810 = vrcp.pop %v1647
        %v1811 = vrcp.pop %v1650
        %v1812 = vrcp.pop %v1653
        %v1813 = vrcp.pop %v1656
        %v1814 = vmul.f32 %v1736, %v1798
        %v1815 = vmul.f32 %v1739, %v1799
        %v1816 = vmul.f32 %v1744, %v1800
        %v1817 = vmul.f32 %v1747, %v1801
        %v1818 = vmul.f32 %v1752, %v1802
        %v1819 = vmul.f32 %v1755, %v1803
        %v1820 = vmul.f32 %v1760, %v1804
        %v1821 = vmul.f32 %v1763, %v1805
        %v1822 = vmul.f32 %v1768, %v1806
        %v1823 = vmul.f32 %v1771, %v1807
        %v1824 = vmul.f32 %v1776, %v1808
        %v1825 = vmul.f32 %v1779, %v1809
        %v1826 = vmul.f32 %v1784, %v1810
        %v1827 = vmul.f32 %v1787, %v1811
        %v1828 = vmul.f32 %v1792, %v1812
        %v1829 = vmul.f32 %v1795, %v1813
        %1830 = vrot.lane.b32.xlu0 %v394, 32
        %v1831 = vpop.permute.xlu0 %1830
        %1832 = vrot.lane.b32.xlu0 %v395, 32
        %v1833 = vpop.permute.xlu0 %1832
        %1834 = vrot.lane.b32.xlu0 %v396, 32
        %v1835 = vpop.permute.xlu0 %1834
        %1836 = vrot.lane.b32.xlu0 %v397, 32
        %v1837 = vpop.permute.xlu0 %1836
        %1838 = vrot.lane.b32.xlu0 %v398, 32
        %v1839 = vpop.permute.xlu0 %1838
        %1840 = vrot.lane.b32.xlu0 %v399, 32
        %v1841 = vpop.permute.xlu0 %1840
        %1842 = vrot.lane.b32.xlu0 %v400, 32
        %v1843 = vpop.permute.xlu0 %1842
        %1844 = vrot.lane.b32.xlu0 %v401, 32
        %v1845 = vpop.permute.xlu0 %1844
        %1846 = vrot.lane.b32.xlu0 %v410, 32
        %v1847 = vpop.permute.xlu0 %1846
        %1848 = vrot.lane.b32.xlu0 %v411, 32
        %v1849 = vpop.permute.xlu0 %1848
        %1850 = vrot.lane.b32.xlu0 %v412, 32
        %v1851 = vpop.permute.xlu0 %1850
        %1852 = vrot.lane.b32.xlu0 %v413, 32
        %v1853 = vpop.permute.xlu0 %1852
        %v1855 = vsel %vm426, %v1831, 0
        %v1858 = vsel %vm426, %v1833, 0
        %v1861 = vsel %vm426, %v1835, 0
        %v1864 = vsel %vm426, %v1837, 0
        %v1867 = vsel %vm426, %v1839, 0
        %v1870 = vsel %vm426, %v1841, 0
        %v1873 = vsel %vm426, %v1843, 0
        %v1876 = vsel %vm426, %v1845, 0
        %v1879 = vsel %vm426, %v1847, 0
        %v1882 = vsel %vm426, %v1849, 0
        %v1885 = vsel %vm426, %v1851, 0
        %v1888 = vsel %vm426, %v1853, 0
        %1890 = vmatprep.subr.bf16.mxu0 0
        %1891 = vmatpush1.bf16.xpose.msra.mxu0 %v1879
        %1892 = vmatprep.subr.bf16.mxu0 0
        %1893 = vmatpush1.bf16.xpose.msra.mxu0 %v1882
        %1894 = vmatprep.subr.bf16.mxu0 0
        %1895 = vmatpush1.bf16.xpose.msra.mxu0 %v1885
        %1896 = vmatprep.subr.bf16.mxu0 0
        %1897 = vmatpush1.bf16.xpose.msra.mxu0 %v1888
        %1898 = vmatprep.subr.bf16.mxu0 0
        %1899 = vmatpush1.bf16.xpose.msra.mxu0 0
        %1900 = vmatprep.subr.bf16.mxu0 0
        %1901 = vmatpush1.bf16.xpose.msra.mxu0 0
        %1902 = vmatprep.subr.bf16.mxu0 0
        %1903 = vmatpush1.bf16.xpose.msra.mxu0 0
        %1904 = vmatprep.subr.bf16.mxu0 0
        %1905 = vmatpush1.bf16.xpose.msra.mxu0 0
        %1906 = vmatprep.subr.bf16.mxu0 0
        %1907 = vmatpush1.bf16.xpose.msra.mxu0 0
        %1908 = vmatprep.subr.bf16.mxu0 0
        %1909 = vmatpush1.bf16.xpose.msra.mxu0 0
        %1910 = vmatprep.subr.bf16.mxu0 0
        %1911 = vmatpush1.bf16.xpose.msra.mxu0 0
        %1912 = vmatprep.subr.bf16.mxu0 0
        %1913 = vmatpush1.bf16.xpose.msra.mxu0 0
        %1914 = vmatprep.subr.bf16.mxu0 0
        %1915 = vmatpush1.bf16.xpose.msra.mxu0 0
        %1916 = vmatprep.subr.bf16.mxu0 0
        %1917 = vmatpush1.bf16.xpose.msra.mxu0 0
        %1918 = vmatprep.subr.bf16.mxu0 0
        %1919 = vmatpush1.bf16.xpose.msra.mxu0 0
        %1920 = vmatprep.subr.bf16.mxu0 0
        %1921 = vmatpush1.bf16.xpose.msra.mxu0 0
        %1922 = vmatprep.mubr.bf16.mxu0 0
        %1923 = vmatmul.mubr.bf16.gmra.mrb[0].mxu0 %v1855
        %v1924 = vpop.f32.mrb[0].mxu0
        %v1925 = vadd.f32 0.0, %v1924
        %v1926 = vpop.f32.mrb[0].mxu0
        %v1927 = vpop.f32.mrb[0].mxu0
        %v1928 = vadd.f32 0.0, %v1927
        %v1929 = vpop.f32.mrb[0].mxu0
        %1930 = vmatprep.mubr.bf16.mxu0 0
        %1931 = vmatmul.mubr.bf16.gmra.mrb[0].mxu0 %v1858
        %v1932 = vpop.f32.mrb[0].mxu0
        %v1933 = vadd.f32 0.0, %v1932
        %v1934 = vpop.f32.mrb[0].mxu0
        %v1935 = vpop.f32.mrb[0].mxu0
        %v1936 = vadd.f32 0.0, %v1935
        %v1937 = vpop.f32.mrb[0].mxu0
        %1938 = vmatprep.mubr.bf16.mxu0 0
        %1939 = vmatmul.mubr.bf16.gmra.mrb[0].mxu0 %v1861
        %v1940 = vpop.f32.mrb[0].mxu0
        %v1941 = vadd.f32 0.0, %v1940
        %v1942 = vpop.f32.mrb[0].mxu0
        %v1943 = vpop.f32.mrb[0].mxu0
        %v1944 = vadd.f32 0.0, %v1943
        %v1945 = vpop.f32.mrb[0].mxu0
        %1946 = vmatprep.mubr.bf16.mxu0 0
        %1947 = vmatmul.mubr.bf16.gmra.mrb[0].mxu0 %v1864
        %v1948 = vpop.f32.mrb[0].mxu0
        %v1949 = vadd.f32 0.0, %v1948
        %v1950 = vpop.f32.mrb[0].mxu0
        %v1951 = vpop.f32.mrb[0].mxu0
        %v1952 = vadd.f32 0.0, %v1951
        %v1953 = vpop.f32.mrb[0].mxu0
        %1954 = vmatprep.mubr.bf16.mxu0 0
        %1955 = vmatmul.mubr.bf16.gmra.mrb[0].mxu0 %v1867
        %v1956 = vpop.f32.mrb[0].mxu0
        %v1957 = vadd.f32 0.0, %v1956
        %v1958 = vpop.f32.mrb[0].mxu0
        %v1959 = vpop.f32.mrb[0].mxu0
        %v1960 = vadd.f32 0.0, %v1959
        %v1961 = vpop.f32.mrb[0].mxu0
        %1962 = vmatprep.mubr.bf16.mxu0 0
        %1963 = vmatmul.mubr.bf16.gmra.mrb[0].mxu0 %v1870
        %v1964 = vpop.f32.mrb[0].mxu0
        %v1965 = vadd.f32 0.0, %v1964
        %v1966 = vpop.f32.mrb[0].mxu0
        %v1967 = vpop.f32.mrb[0].mxu0
        %v1968 = vadd.f32 0.0, %v1967
        %v1969 = vpop.f32.mrb[0].mxu0
        %1970 = vmatprep.mubr.bf16.mxu0 0
        %1971 = vmatmul.mubr.bf16.gmra.mrb[0].mxu0 %v1873
        %v1972 = vpop.f32.mrb[0].mxu0
        %v1973 = vadd.f32 0.0, %v1972
        %v1974 = vpop.f32.mrb[0].mxu0
        %v1975 = vpop.f32.mrb[0].mxu0
        %v1976 = vadd.f32 0.0, %v1975
        %v1977 = vpop.f32.mrb[0].mxu0
        %1978 = vmatprep.mubr.bf16.mxu0 0
        %1979 = vmatmul.mubr.bf16.gmra.mrb[0].mxu0 %v1876
        %v1980 = vpop.f32.mrb[0].mxu0
        %v1981 = vadd.f32 0.0, %v1980
        %v1982 = vpop.f32.mrb[0].mxu0
        %v1983 = vpop.f32.mrb[0].mxu0
        %v1984 = vadd.f32 0.0, %v1983
        %v1985 = vpop.f32.mrb[0].mxu0
        %1986 = vdwg.mxu0
        %v1987 = vsel %vm560, %v1925, -inf
        %1988 = vmax.xlane.f32.xlu0 %v1987
        %v1989 = vpop.xlane.xlu0 %1988
        %v1990 = vsel %vm560, %v1928, -inf
        %1991 = vmax.xlane.f32.xlu0 %v1990
        %v1992 = vpop.xlane.xlu0 %1991
        %v1993 = vsel %vm560, %v1933, -inf
        %1994 = vmax.xlane.f32.xlu0 %v1993
        %v1995 = vpop.xlane.xlu0 %1994
        %v1996 = vsel %vm560, %v1936, -inf
        %1997 = vmax.xlane.f32.xlu0 %v1996
        %v1998 = vpop.xlane.xlu0 %1997
        %v1999 = vsel %vm560, %v1941, -inf
        %2000 = vmax.xlane.f32.xlu0 %v1999
        %v2001 = vpop.xlane.xlu0 %2000
        %v2002 = vsel %vm560, %v1944, -inf
        %2003 = vmax.xlane.f32.xlu0 %v2002
        %v2004 = vpop.xlane.xlu0 %2003
        %v2005 = vsel %vm560, %v1949, -inf
        %2006 = vmax.xlane.f32.xlu0 %v2005
        %v2007 = vpop.xlane.xlu0 %2006
        %v2008 = vsel %vm560, %v1952, -inf
        %2009 = vmax.xlane.f32.xlu0 %v2008
        %v2010 = vpop.xlane.xlu0 %2009
        %v2011 = vsel %vm560, %v1957, -inf
        %2012 = vmax.xlane.f32.xlu0 %v2011
        %v2013 = vpop.xlane.xlu0 %2012
        %v2014 = vsel %vm560, %v1960, -inf
        %2015 = vmax.xlane.f32.xlu0 %v2014
        %v2016 = vpop.xlane.xlu0 %2015
        %v2017 = vsel %vm560, %v1965, -inf
        %2018 = vmax.xlane.f32.xlu0 %v2017
        %v2019 = vpop.xlane.xlu0 %2018
        %v2020 = vsel %vm560, %v1968, -inf
        %2021 = vmax.xlane.f32.xlu0 %v2020
        %v2022 = vpop.xlane.xlu0 %2021
        %v2023 = vsel %vm560, %v1973, -inf
        %2024 = vmax.xlane.f32.xlu0 %v2023
        %v2025 = vpop.xlane.xlu0 %2024
        %v2026 = vsel %vm560, %v1976, -inf
        %2027 = vmax.xlane.f32.xlu0 %v2026
        %v2028 = vpop.xlane.xlu0 %2027
        %v2029 = vsel %vm560, %v1981, -inf
        %2030 = vmax.xlane.f32.xlu0 %v2029
        %v2031 = vpop.xlane.xlu0 %2030
        %v2032 = vsel %vm560, %v1984, -inf
        %2033 = vmax.xlane.f32.xlu0 %v2032
        %v2034 = vpop.xlane.xlu0 %2033
        %v2035 = vsub.f32 %v1925, %v1989
        %v2036 = vsub.f32 %v1928, %v1992
        %v2037 = vsub.f32 %v1933, %v1995
        %v2038 = vsub.f32 %v1936, %v1998
        %v2039 = vsub.f32 %v1941, %v2001
        %v2040 = vsub.f32 %v1944, %v2004
        %v2041 = vsub.f32 %v1949, %v2007
        %v2042 = vsub.f32 %v1952, %v2010
        %v2043 = vsub.f32 %v1957, %v2013
        %v2044 = vsub.f32 %v1960, %v2016
        %v2045 = vsub.f32 %v1965, %v2019
        %v2046 = vsub.f32 %v1968, %v2022
        %v2047 = vsub.f32 %v1973, %v2025
        %v2048 = vsub.f32 %v1976, %v2028
        %v2049 = vsub.f32 %v1981, %v2031
        %v2050 = vsub.f32 %v1984, %v2034
        %v2051 = vmul.f32 %v2035, 1.442695
        %v2052 = vpow.pop %v2051
        %v2053 = vmul.f32 %v2036, 1.442695
        %v2054 = vpow.pop %v2053
        %v2055 = vmul.f32 %v2037, 1.442695
        %v2056 = vpow.pop %v2055
        %v2057 = vmul.f32 %v2038, 1.442695
        %v2058 = vpow.pop %v2057
        %v2059 = vmul.f32 %v2039, 1.442695
        %v2060 = vpow.pop %v2059
        %v2061 = vmul.f32 %v2040, 1.442695
        %v2062 = vpow.pop %v2061
        %v2063 = vmul.f32 %v2041, 1.442695
        %v2064 = vpow.pop %v2063
        %v2065 = vmul.f32 %v2042, 1.442695
        %v2066 = vpow.pop %v2065
        %v2067 = vmul.f32 %v2043, 1.442695
        %v2068 = vpow.pop %v2067
        %v2069 = vmul.f32 %v2044, 1.442695
        %v2070 = vpow.pop %v2069
        %v2071 = vmul.f32 %v2045, 1.442695
        %v2072 = vpow.pop %v2071
        %v2073 = vmul.f32 %v2046, 1.442695
        %v2074 = vpow.pop %v2073
        %v2075 = vmul.f32 %v2047, 1.442695
        %v2076 = vpow.pop %v2075
        %v2077 = vmul.f32 %v2048, 1.442695
        %v2078 = vpow.pop %v2077
        %v2079 = vmul.f32 %v2049, 1.442695
        %v2080 = vpow.pop %v2079
        %v2081 = vmul.f32 %v2050, 1.442695
        %v2082 = vpow.pop %v2081
        %v2083 = vsel %vm560, %v2052, 0.0
        %2084 = vadd.xlane.f32.xlu0 %v2083
        %v2085 = vpop.xlane.xlu0 %2084
        %v2086 = vsel %vm560, %v2054, 0.0
        %2087 = vadd.xlane.f32.xlu0 %v2086
        %v2088 = vpop.xlane.xlu0 %2087
        %v2089 = vsel %vm560, %v2056, 0.0
        %2090 = vadd.xlane.f32.xlu0 %v2089
        %v2091 = vpop.xlane.xlu0 %2090
        %v2092 = vsel %vm560, %v2058, 0.0
        %2093 = vadd.xlane.f32.xlu0 %v2092
        %v2094 = vpop.xlane.xlu0 %2093
        %v2095 = vsel %vm560, %v2060, 0.0
        %2096 = vadd.xlane.f32.xlu0 %v2095
        %v2097 = vpop.xlane.xlu0 %2096
        %v2098 = vsel %vm560, %v2062, 0.0
        %2099 = vadd.xlane.f32.xlu0 %v2098
        %v2100 = vpop.xlane.xlu0 %2099
        %v2101 = vsel %vm560, %v2064, 0.0
        %2102 = vadd.xlane.f32.xlu0 %v2101
        %v2103 = vpop.xlane.xlu0 %2102
        %v2104 = vsel %vm560, %v2066, 0.0
        %2105 = vadd.xlane.f32.xlu0 %v2104
        %v2106 = vpop.xlane.xlu0 %2105
        %v2107 = vsel %vm560, %v2068, 0.0
        %2108 = vadd.xlane.f32.xlu0 %v2107
        %v2109 = vpop.xlane.xlu0 %2108
        %v2110 = vsel %vm560, %v2070, 0.0
        %2111 = vadd.xlane.f32.xlu0 %v2110
        %v2112 = vpop.xlane.xlu0 %2111
        %v2113 = vsel %vm560, %v2072, 0.0
        %2114 = vadd.xlane.f32.xlu0 %v2113
        %v2115 = vpop.xlane.xlu0 %2114
        %v2116 = vsel %vm560, %v2074, 0.0
        %2117 = vadd.xlane.f32.xlu0 %v2116
        %v2118 = vpop.xlane.xlu0 %2117
        %v2119 = vsel %vm560, %v2076, 0.0
        %2120 = vadd.xlane.f32.xlu0 %v2119
        %v2121 = vpop.xlane.xlu0 %2120
        %v2122 = vsel %vm560, %v2078, 0.0
        %2123 = vadd.xlane.f32.xlu0 %v2122
        %v2124 = vpop.xlane.xlu0 %2123
        %v2125 = vsel %vm560, %v2080, 0.0
        %2126 = vadd.xlane.f32.xlu0 %v2125
        %v2127 = vpop.xlane.xlu0 %2126
        %v2128 = vsel %vm560, %v2082, 0.0
        %2129 = vadd.xlane.f32.xlu0 %v2128
        %v2130 = vpop.xlane.xlu0 %2129
        %v2131 = vpack.c.bf16 %v2054, %v2052
        %v2132 = vpack.c.bf16 %v2058, %v2056
        %v2133 = vpack.c.bf16 %v2062, %v2060
        %v2134 = vpack.c.bf16 %v2066, %v2064
        %v2135 = vpack.c.bf16 %v2070, %v2068
        %v2136 = vpack.c.bf16 %v2074, %v2072
        %v2137 = vpack.c.bf16 %v2078, %v2076
        %v2138 = vpack.c.bf16 %v2082, %v2080
        %2139 = vrot.lane.b32.xlu0 %v422, 32
        %v2140 = vpop.permute.xlu0 %2139
        %2141 = vrot.lane.b32.xlu0 %v423, 32
        %v2142 = vpop.permute.xlu0 %2141
        %2143 = vrot.lane.b32.xlu0 %v424, 32
        %v2144 = vpop.permute.xlu0 %2143
        %2145 = vrot.lane.b32.xlu0 %v425, 32
        %v2146 = vpop.permute.xlu0 %2145
        %v2152 = vsel %vm560, %v2131, 0
        %v2155 = vsel %vm560, %v2132, 0
        %v2158 = vsel %vm560, %v2133, 0
        %v2161 = vsel %vm560, %v2134, 0
        %v2164 = vsel %vm560, %v2135, 0
        %v2167 = vsel %vm560, %v2136, 0
        %v2170 = vsel %vm560, %v2137, 0
        %v2173 = vsel %vm560, %v2138, 0
        %2175 = vmatprep.subr.bf16.mxu0 0
        %2176 = vmatpush1.bf16.msra.mxu0 %v2140
        %2177 = vmatprep.subr.bf16.mxu0 0
        %2178 = vmatpush1.bf16.msra.mxu0 %v2142
        %2179 = vmatprep.subr.bf16.mxu0 0
        %2180 = vmatpush1.bf16.msra.mxu0 %v2144
        %2181 = vmatprep.subr.bf16.mxu0 0
        %2182 = vmatpush1.bf16.msra.mxu0 %v2146
        %2183 = vmatprep.subr.bf16.mxu0 0
        %2184 = vmatpush1.bf16.msra.mxu0 0
        %2185 = vmatprep.subr.bf16.mxu0 0
        %2186 = vmatpush1.bf16.msra.mxu0 0
        %2187 = vmatprep.subr.bf16.mxu0 0
        %2188 = vmatpush1.bf16.msra.mxu0 0
        %2189 = vmatprep.subr.bf16.mxu0 0
        %2190 = vmatpush1.bf16.msra.mxu0 0
        %2191 = vmatprep.subr.bf16.mxu0 0
        %2192 = vmatpush1.bf16.msra.mxu0 0
        %2193 = vmatprep.subr.bf16.mxu0 0
        %2194 = vmatpush1.bf16.msra.mxu0 0
        %2195 = vmatprep.subr.bf16.mxu0 0
        %2196 = vmatpush1.bf16.msra.mxu0 0
        %2197 = vmatprep.subr.bf16.mxu0 0
        %2198 = vmatpush1.bf16.msra.mxu0 0
        %2199 = vmatprep.subr.bf16.mxu0 0
        %2200 = vmatpush1.bf16.msra.mxu0 0
        %2201 = vmatprep.subr.bf16.mxu0 0
        %2202 = vmatpush1.bf16.msra.mxu0 0
        %2203 = vmatprep.subr.bf16.mxu0 0
        %2204 = vmatpush1.bf16.msra.mxu0 0
        %2205 = vmatprep.subr.bf16.mxu0 0
        %2206 = vmatpush1.bf16.msra.mxu0 0
        %2207 = vmatprep.mubr.bf16.mxu0 0
        %2208 = vmatmul.mubr.bf16.gmra.mrb[0].mxu0 %v2152
        %v2209 = vpop.f32.mrb[0].mxu0
        %v2210 = vadd.f32 0.0, %v2209
        %v2211 = vpop.f32.mrb[0].mxu0
        %v2212 = vpop.f32.mrb[0].mxu0
        %v2213 = vadd.f32 0.0, %v2212
        %v2214 = vpop.f32.mrb[0].mxu0
        %2215 = vmatprep.mubr.bf16.mxu0 0
        %2216 = vmatmul.mubr.bf16.gmra.mrb[0].mxu0 %v2155
        %v2217 = vpop.f32.mrb[0].mxu0
        %v2218 = vadd.f32 0.0, %v2217
        %v2219 = vpop.f32.mrb[0].mxu0
        %v2220 = vpop.f32.mrb[0].mxu0
        %v2221 = vadd.f32 0.0, %v2220
        %v2222 = vpop.f32.mrb[0].mxu0
        %2223 = vmatprep.mubr.bf16.mxu0 0
        %2224 = vmatmul.mubr.bf16.gmra.mrb[0].mxu0 %v2158
        %v2225 = vpop.f32.mrb[0].mxu0
        %v2226 = vadd.f32 0.0, %v2225
        %v2227 = vpop.f32.mrb[0].mxu0
        %v2228 = vpop.f32.mrb[0].mxu0
        %v2229 = vadd.f32 0.0, %v2228
        %v2230 = vpop.f32.mrb[0].mxu0
        %2231 = vmatprep.mubr.bf16.mxu0 0
        %2232 = vmatmul.mubr.bf16.gmra.mrb[0].mxu0 %v2161
        %v2233 = vpop.f32.mrb[0].mxu0
        %v2234 = vadd.f32 0.0, %v2233
        %v2235 = vpop.f32.mrb[0].mxu0
        %v2236 = vpop.f32.mrb[0].mxu0
        %v2237 = vadd.f32 0.0, %v2236
        %v2238 = vpop.f32.mrb[0].mxu0
        %2239 = vmatprep.mubr.bf16.mxu0 0
        %2240 = vmatmul.mubr.bf16.gmra.mrb[0].mxu0 %v2164
        %v2241 = vpop.f32.mrb[0].mxu0
        %v2242 = vadd.f32 0.0, %v2241
        %v2243 = vpop.f32.mrb[0].mxu0
        %v2244 = vpop.f32.mrb[0].mxu0
        %v2245 = vadd.f32 0.0, %v2244
        %v2246 = vpop.f32.mrb[0].mxu0
        %2247 = vmatprep.mubr.bf16.mxu0 0
        %2248 = vmatmul.mubr.bf16.gmra.mrb[0].mxu0 %v2167
        %v2249 = vpop.f32.mrb[0].mxu0
        %v2250 = vadd.f32 0.0, %v2249
        %v2251 = vpop.f32.mrb[0].mxu0
        %v2252 = vpop.f32.mrb[0].mxu0
        %v2253 = vadd.f32 0.0, %v2252
        %v2254 = vpop.f32.mrb[0].mxu0
        %2255 = vmatprep.mubr.bf16.mxu0 0
        %2256 = vmatmul.mubr.bf16.gmra.mrb[0].mxu0 %v2170
        %v2257 = vpop.f32.mrb[0].mxu0
        %v2258 = vadd.f32 0.0, %v2257
        %v2259 = vpop.f32.mrb[0].mxu0
        %v2260 = vpop.f32.mrb[0].mxu0
        %v2261 = vadd.f32 0.0, %v2260
        %v2262 = vpop.f32.mrb[0].mxu0
        %2263 = vmatprep.mubr.bf16.mxu0 0
        %2264 = vmatmul.mubr.bf16.gmra.mrb[0].mxu0 %v2173
        %v2265 = vpop.f32.mrb[0].mxu0
        %v2266 = vadd.f32 0.0, %v2265
        %v2267 = vpop.f32.mrb[0].mxu0
        %v2268 = vpop.f32.mrb[0].mxu0
        %v2269 = vadd.f32 0.0, %v2268
        %v2270 = vpop.f32.mrb[0].mxu0
        %2271 = vdwg.mxu0
        %v2272 = vrcp.pop %v2085
        %v2273 = vrcp.pop %v2088
        %v2274 = vrcp.pop %v2091
        %v2275 = vrcp.pop %v2094
        %v2276 = vrcp.pop %v2097
        %v2277 = vrcp.pop %v2100
        %v2278 = vrcp.pop %v2103
        %v2279 = vrcp.pop %v2106
        %v2280 = vrcp.pop %v2109
        %v2281 = vrcp.pop %v2112
        %v2282 = vrcp.pop %v2115
        %v2283 = vrcp.pop %v2118
        %v2284 = vrcp.pop %v2121
        %v2285 = vrcp.pop %v2124
        %v2286 = vrcp.pop %v2127
        %v2287 = vrcp.pop %v2130
        %v2288 = vmul.f32 %v2210, %v2272
        %v2289 = vmul.f32 %v2213, %v2273
        %v2290 = vmul.f32 %v2218, %v2274
        %v2291 = vmul.f32 %v2221, %v2275
        %v2292 = vmul.f32 %v2226, %v2276
        %v2293 = vmul.f32 %v2229, %v2277
        %v2294 = vmul.f32 %v2234, %v2278
        %v2295 = vmul.f32 %v2237, %v2279
        %v2296 = vmul.f32 %v2242, %v2280
        %v2297 = vmul.f32 %v2245, %v2281
        %v2298 = vmul.f32 %v2250, %v2282
        %v2299 = vmul.f32 %v2253, %v2283
        %v2300 = vmul.f32 %v2258, %v2284
        %v2301 = vmul.f32 %v2261, %v2285
        %v2302 = vmul.f32 %v2266, %v2286
        %v2303 = vmul.f32 %v2269, %v2287
        %2320 = vrot.lane.b32.xlu0 %v1340, 32
        %v2321 = vpop.permute.xlu0 %2320
        %2322 = vrot.lane.b32.xlu0 %v1341, 32
        %v2323 = vpop.permute.xlu0 %2322
        %2324 = vrot.lane.b32.xlu0 %v1342, 32
        %v2325 = vpop.permute.xlu0 %2324
        %2326 = vrot.lane.b32.xlu0 %v1343, 32
        %v2327 = vpop.permute.xlu0 %2326
        %2328 = vrot.lane.b32.xlu0 %v1344, 32
        %v2329 = vpop.permute.xlu0 %2328
        %2330 = vrot.lane.b32.xlu0 %v1345, 32
        %v2331 = vpop.permute.xlu0 %2330
        %2332 = vrot.lane.b32.xlu0 %v1346, 32
        %v2333 = vpop.permute.xlu0 %2332
        %2334 = vrot.lane.b32.xlu0 %v1347, 32
        %v2335 = vpop.permute.xlu0 %2334
        %2336 = vrot.lane.b32.xlu0 %v1348, 32
        %v2337 = vpop.permute.xlu0 %2336
        %2338 = vrot.lane.b32.xlu0 %v1349, 32
        %v2339 = vpop.permute.xlu0 %2338
        %2340 = vrot.lane.b32.xlu0 %v1350, 32
        %v2341 = vpop.permute.xlu0 %2340
        %2342 = vrot.lane.b32.xlu0 %v1351, 32
        %v2343 = vpop.permute.xlu0 %2342
        %2344 = vrot.lane.b32.xlu0 %v1352, 32
        %v2345 = vpop.permute.xlu0 %2344
        %2346 = vrot.lane.b32.xlu0 %v1353, 32
        %v2347 = vpop.permute.xlu0 %2346
        %2348 = vrot.lane.b32.xlu0 %v1354, 32
        %v2349 = vpop.permute.xlu0 %2348
        %2350 = vrot.lane.b32.xlu0 %v1355, 32
        %v2351 = vpop.permute.xlu0 %2350
        %2384 = vrot.lane.b32.xlu0 %v1814, 64
        %v2385 = vpop.permute.xlu0 %2384
        %2386 = vrot.lane.b32.xlu0 %v1815, 64
        %v2387 = vpop.permute.xlu0 %2386
        %2388 = vrot.lane.b32.xlu0 %v1816, 64
        %v2389 = vpop.permute.xlu0 %2388
        %2390 = vrot.lane.b32.xlu0 %v1817, 64
        %v2391 = vpop.permute.xlu0 %2390
        %2392 = vrot.lane.b32.xlu0 %v1818, 64
        %v2393 = vpop.permute.xlu0 %2392
        %2394 = vrot.lane.b32.xlu0 %v1819, 64
        %v2395 = vpop.permute.xlu0 %2394
        %2396 = vrot.lane.b32.xlu0 %v1820, 64
        %v2397 = vpop.permute.xlu0 %2396
        %2398 = vrot.lane.b32.xlu0 %v1821, 64
        %v2399 = vpop.permute.xlu0 %2398
        %2400 = vrot.lane.b32.xlu0 %v1822, 64
        %v2401 = vpop.permute.xlu0 %2400
        %2402 = vrot.lane.b32.xlu0 %v1823, 64
        %v2403 = vpop.permute.xlu0 %2402
        %2404 = vrot.lane.b32.xlu0 %v1824, 64
        %v2405 = vpop.permute.xlu0 %2404
        %2406 = vrot.lane.b32.xlu0 %v1825, 64
        %v2407 = vpop.permute.xlu0 %2406
        %2408 = vrot.lane.b32.xlu0 %v1826, 64
        %v2409 = vpop.permute.xlu0 %2408
        %2410 = vrot.lane.b32.xlu0 %v1827, 64
        %v2411 = vpop.permute.xlu0 %2410
        %2412 = vrot.lane.b32.xlu0 %v1828, 64
        %v2413 = vpop.permute.xlu0 %2412
        %2414 = vrot.lane.b32.xlu0 %v1829, 64
        %v2415 = vpop.permute.xlu0 %2414
        %2448 = vrot.lane.b32.xlu0 %v2288, 96
        %v2449 = vpop.permute.xlu0 %2448
        %2450 = vrot.lane.b32.xlu0 %v2289, 96
        %v2451 = vpop.permute.xlu0 %2450
        %2452 = vrot.lane.b32.xlu0 %v2290, 96
        %v2453 = vpop.permute.xlu0 %2452
        %2454 = vrot.lane.b32.xlu0 %v2291, 96
        %v2455 = vpop.permute.xlu0 %2454
        %2456 = vrot.lane.b32.xlu0 %v2292, 96
        %v2457 = vpop.permute.xlu0 %2456
        %2458 = vrot.lane.b32.xlu0 %v2293, 96
        %v2459 = vpop.permute.xlu0 %2458
        %2460 = vrot.lane.b32.xlu0 %v2294, 96
        %v2461 = vpop.permute.xlu0 %2460
        %2462 = vrot.lane.b32.xlu0 %v2295, 96
        %v2463 = vpop.permute.xlu0 %2462
        %2464 = vrot.lane.b32.xlu0 %v2296, 96
        %v2465 = vpop.permute.xlu0 %2464
        %2466 = vrot.lane.b32.xlu0 %v2297, 96
        %v2467 = vpop.permute.xlu0 %2466
        %2468 = vrot.lane.b32.xlu0 %v2298, 96
        %v2469 = vpop.permute.xlu0 %2468
        %2470 = vrot.lane.b32.xlu0 %v2299, 96
        %v2471 = vpop.permute.xlu0 %2470
        %2472 = vrot.lane.b32.xlu0 %v2300, 96
        %v2473 = vpop.permute.xlu0 %2472
        %2474 = vrot.lane.b32.xlu0 %v2301, 96
        %v2475 = vpop.permute.xlu0 %2474
        %2476 = vrot.lane.b32.xlu0 %v2302, 96
        %v2477 = vpop.permute.xlu0 %2476
        %2478 = vrot.lane.b32.xlu0 %v2303, 96
        %v2479 = vpop.permute.xlu0 %2478
        %v2496 = vsel %vm426, %v850, %v2321
        %v2497 = vsel %vm426, %v851, %v2323
        %v2498 = vsel %vm426, %v852, %v2325
        %v2499 = vsel %vm426, %v853, %v2327
        %v2500 = vsel %vm426, %v854, %v2329
        %v2501 = vsel %vm426, %v855, %v2331
        %v2502 = vsel %vm426, %v856, %v2333
        %v2503 = vsel %vm426, %v857, %v2335
        %v2504 = vsel %vm426, %v858, %v2337
        %v2505 = vsel %vm426, %v859, %v2339
        %v2506 = vsel %vm426, %v860, %v2341
        %v2507 = vsel %vm426, %v861, %v2343
        %v2508 = vsel %vm426, %v862, %v2345
        %v2509 = vsel %vm426, %v863, %v2347
        %v2510 = vsel %vm426, %v864, %v2349
        %v2511 = vsel %vm426, %v865, %v2351
        %v2512 = vsel %vm560, %v2496, %v2385
        %v2513 = vsel %vm560, %v2497, %v2387
        %v2514 = vsel %vm560, %v2498, %v2389
        %v2515 = vsel %vm560, %v2499, %v2391
        %v2516 = vsel %vm560, %v2500, %v2393
        %v2517 = vsel %vm560, %v2501, %v2395
        %v2518 = vsel %vm560, %v2502, %v2397
        %v2519 = vsel %vm560, %v2503, %v2399
        %v2520 = vsel %vm560, %v2504, %v2401
        %v2521 = vsel %vm560, %v2505, %v2403
        %v2522 = vsel %vm560, %v2506, %v2405
        %v2523 = vsel %vm560, %v2507, %v2407
        %v2524 = vsel %vm560, %v2508, %v2409
        %v2525 = vsel %vm560, %v2509, %v2411
        %v2526 = vsel %vm560, %v2510, %v2413
        %v2527 = vsel %vm560, %v2511, %v2415
        %vm2528 = vcmask 785408
        %v2529 = vsel %vm2528, %v2512, %v2449
        %v2530 = vsel %vm2528, %v2513, %v2451
        %v2531 = vsel %vm2528, %v2514, %v2453
        %v2532 = vsel %vm2528, %v2515, %v2455
        %v2533 = vsel %vm2528, %v2516, %v2457
        %v2534 = vsel %vm2528, %v2517, %v2459
        %v2535 = vsel %vm2528, %v2518, %v2461
        %v2536 = vsel %vm2528, %v2519, %v2463
        %v2537 = vsel %vm2528, %v2520, %v2465
        %v2538 = vsel %vm2528, %v2521, %v2467
        %v2539 = vsel %vm2528, %v2522, %v2469
        %v2540 = vsel %vm2528, %v2523, %v2471
        %v2541 = vsel %vm2528, %v2524, %v2473
        %v2542 = vsel %vm2528, %v2525, %v2475
        %v2543 = vsel %vm2528, %v2526, %v2477
        %v2544 = vsel %vm2528, %v2527, %v2479
        %2545 = vst [vmem:[%s375] sm:$0xff] %v2529
        %2546 = vst [vmem:[%s375 + $0x8] sm:$0xff] %v2530
        %2547 = vst [vmem:[%s375 + $0x10] sm:$0xff] %v2531
        %2548 = vst [vmem:[%s375 + $0x18] sm:$0xff] %v2532
        %2549 = vst [vmem:[%s375 + $0x20] sm:$0xff] %v2533
        %2550 = vst [vmem:[%s375 + $0x28] sm:$0xff] %v2534
        %2551 = vst [vmem:[%s375 + $0x30] sm:$0xff] %v2535
        %2552 = vst [vmem:[%s375 + $0x38] sm:$0xff] %v2536
        %2553 = vst [vmem:[%s375 + $0x40] sm:$0xff] %v2537
        %2554 = vst [vmem:[%s375 + $0x48] sm:$0xff] %v2538
        %2555 = vst [vmem:[%s375 + $0x50] sm:$0xff] %v2539
        %2556 = vst [vmem:[%s375 + $0x58] sm:$0xff] %v2540
        %2557 = vst [vmem:[%s375 + $0x60] sm:$0xff] %v2541
        %2558 = vst [vmem:[%s375 + $0x68] sm:$0xff] %v2542
        %2559 = vst [vmem:[%s375 + $0x70] sm:$0xff] %v2543
        %2560 = vst [vmem:[%s375 + $0x78] sm:$0xff] %v2544
        %s2561 = smul.u32 16, %s19
        %p2562 = scmp.lt.s32.totalorder %s18, 1
        %s2563 = scalar_select %p2562, %s18, 1
        %p2564 = scmp.lt.s32.totalorder %s2561, 31
        %s2565 = scalar_select %p2564, %s2561, 31
        %s2566 = smul.addr %s2563, 32
        %s2567 = sadd.s32 %s2565, %s2566
        %s2568 = smul.addr %s2567, 8
        %s2569 = scalar_lea.vmem %s3, %s2568
        // Predicated region
        $region109: #{attention_forward.6} parent=99 // pred_check
          %p2570 = pneg %p126
        $region110: #{attention_forward.6} parent=99 // pred_check_branch
          %2572 = sbr.rel (%p2570) target = $region112
        $region111: #{attention_forward.6} parent=99 // pred_region
          %s2573 = smul.u32 16, %s19
        $region112: #{attention_forward.6} parent=99 // pred_fallthru
          _
      $region100: #{attention_forward.6} parent=5 // pred_fallthru
        _
      %p2574 = scmp.le.s32.totalorder 2, %s9
      // Predicated region
      $region113: #{attention_forward.6} parent=5 // pred_check
        %p2575 = pneg %p2574
      $region114: #{attention_forward.6} parent=5 // pred_check_branch
        %2577 = sbr.rel (%p2575) target = $region116
      $region115: #{attention_forward.6} parent=5 // pred_region
        %s2578 = ssub.s32 %s9, 2
        // Predicated region
        $region117: #{attention_forward.6} parent=115 // pred_check
          %p2579 = pneg %p132
        $region118: #{attention_forward.6} parent=115 // pred_check_branch
          %2581 = sbr.rel (%p2579) target = $region120
        $region119: #{attention_forward.6} parent=115 // pred_region
          %s2582 = smul.u32 16, %s21
          %p2583 = scmp.lt.s32.totalorder %s20, 1
          %s2584 = scalar_select %p2583, %s20, 1
          %p2585 = scmp.lt.s32.totalorder %s2582, 31
          %s2586 = scalar_select %p2585, %s2582, 31
          %s2587 = smul.addr %s2584, 32
          %s2588 = sadd.s32 %s2586, %s2587
          %s2589 = smul.addr %s2588, 8
          %s2590 = scalar_lea.vmem %s3, %s2589
        $region120: #{attention_forward.6} parent=115 // pred_fallthru
          _
      $region116: #{attention_forward.6} parent=5 // pred_fallthru
        _
    $region6: #{attention_forward.6} parent=1 // loop_footer
      %s13 = sadd.s32 1, %s9
    $region7: #{attention_forward.6} parent=1 // loop_footer_branch
      %8 = sbr.rel target = $region3
    $region8: #{attention_forward.6} parent=1 // loop_exit
      _

// kernel: attention_forward.7
$region0: #{attention_forward.7}
  #allocation0 [shape = 'u32[]', space=smem, size = 0x4, offset = 0x4, fixed_abs, tag = 'smem constant byte address 0x4 - core index']
  #allocation1 [shape = 'u32[144,128]{1,0:T(1,128)}', space=vmem, size = 0x12000, scoped, tag = 'internal scratch']
  %s0 = inlined_call_operand.vmem [shape: f32[512,128], index: 0, kind: input, shape index: {}]
  %s1 = inlined_call_operand.vmem [shape: bf16[128,128], index: 1, kind: input, shape index: {}]
  %s2 = inlined_call_operand.vmem [shape: f32[1,128], index: 2, kind: input, shape index: {}]
  %s3 = inlined_call_operand.hbm [shape: f32[512,128], index: 3, kind: output, shape index: {}]
  %s4 = sld [smem:[#allocation0]]
  $region22: #{attention_forward.7} parent=0
    _
  %s6 = ssub.s32 1, %s4
  %s7 = scalar_select 0, %s6, %s4
  $region1: #{attention_forward.7} parent=0
    #allocation2 [shape = 'u8[262144]{0}', space=vmem, size = 0x40000, scoped, tag = 'output window, operand 0, single buffered']
    #allocation3 [shape = 's32[1]{0}', space=sflag, size = 0x4, scoped, tag = 'scoped memory for attention_forward.7']
    %8 = vsyncpa [#allocation3], 0
    // Predicated region
    $region2: #{attention_forward.7} parent=1 // pred_check
      _
    $region3: #{attention_forward.7} parent=1 // pred_check_branch
      %10 = sbr.rel (0) target = $region5
    $region4: #{attention_forward.7} parent=1 // pred_region
      _
    $region5: #{attention_forward.7} parent=1 // pred_fallthru
      _
    // Predicated region
    $region6: #{attention_forward.7} parent=1 // pred_check
      _
    $region7: #{attention_forward.7} parent=1 // pred_check_branch
      %12 = sbr.rel (0) target = $region9
    $region8: #{attention_forward.7} parent=1 // pred_region
      _
    $region9: #{attention_forward.7} parent=1 // pred_fallthru
      _
    // Predicated region
    $region10: #{attention_forward.7} parent=1 // pred_check
      _
    $region11: #{attention_forward.7} parent=1 // pred_check_branch
      %14 = sbr.rel (0) target = $region13
    $region12: #{attention_forward.7} parent=1 // pred_region
      _
    $region13: #{attention_forward.7} parent=1 // pred_fallthru
      _
    %v16 = vld [vmem:[%s0] sm:$0xff]
    %v17 = vld [vmem:[%s0 + $0x8] sm:$0xff]
    %v18 = vld [vmem:[%s0 + $0x10] sm:$0xff]
    %v19 = vld [vmem:[%s0 + $0x18] sm:$0xff]
    %v20 = vld [vmem:[%s0 + $0x20] sm:$0xff]
    %v21 = vld [vmem:[%s0 + $0x28] sm:$0xff]
    %v22 = vld [vmem:[%s0 + $0x30] sm:$0xff]
    %v23 = vld [vmem:[%s0 + $0x38] sm:$0xff]
    %v24 = vld [vmem:[%s0 + $0x40] sm:$0xff]
    %v25 = vld [vmem:[%s0 + $0x48] sm:$0xff]
    %v26 = vld [vmem:[%s0 + $0x50] sm:$0xff]
    %v27 = vld [vmem:[%s0 + $0x58] sm:$0xff]
    %v28 = vld [vmem:[%s0 + $0x60] sm:$0xff]
    %v29 = vld [vmem:[%s0 + $0x68] sm:$0xff]
    %v30 = vld [vmem:[%s0 + $0x70] sm:$0xff]
    %v31 = vld [vmem:[%s0 + $0x78] sm:$0xff]
    %v32 = vld [vmem:[%s0 + $0x80] sm:$0xff]
    %v33 = vld [vmem:[%s0 + $0x88] sm:$0xff]
    %v34 = vld [vmem:[%s0 + $0x90] sm:$0xff]
    %v35 = vld [vmem:[%s0 + $0x98] sm:$0xff]
    %v36 = vld [vmem:[%s0 + $0xa0] sm:$0xff]
    %v37 = vld [vmem:[%s0 + $0xa8] sm:$0xff]
    %v38 = vld [vmem:[%s0 + $0xb0] sm:$0xff]
    %v39 = vld [vmem:[%s0 + $0xb8] sm:$0xff]
    %v40 = vld [vmem:[%s0 + $0xc0] sm:$0xff]
    %v41 = vld [vmem:[%s0 + $0xc8] sm:$0xff]
    %v42 = vld [vmem:[%s0 + $0xd0] sm:$0xff]
    %v43 = vld [vmem:[%s0 + $0xd8] sm:$0xff]
    %v44 = vld [vmem:[%s0 + $0xe0] sm:$0xff]
    %v45 = vld [vmem:[%s0 + $0xe8] sm:$0xff]
    %v46 = vld [vmem:[%s0 + $0xf0] sm:$0xff]
    %v47 = vld [vmem:[%s0 + $0xf8] sm:$0xff]
    %v48 = vld [vmem:[%s0 + $0x100] sm:$0xff]
    %v49 = vld [vmem:[%s0 + $0x108] sm:$0xff]
    %v50 = vld [vmem:[%s0 + $0x110] sm:$0xff]
    %v51 = vld [vmem:[%s0 + $0x118] sm:$0xff]
    %v52 = vld [vmem:[%s0 + $0x120] sm:$0xff]
    %v53 = vld [vmem:[%s0 + $0x128] sm:$0xff]
    %v54 = vld [vmem:[%s0 + $0x130] sm:$0xff]
    %v55 = vld [vmem:[%s0 + $0x138] sm:$0xff]
    %v56 = vld [vmem:[%s0 + $0x140] sm:$0xff]
    %v57 = vld [vmem:[%s0 + $0x148] sm:$0xff]
    %v58 = vld [vmem:[%s0 + $0x150] sm:$0xff]
    %v59 = vld [vmem:[%s0 + $0x158] sm:$0xff]
    %v60 = vld [vmem:[%s0 + $0x160] sm:$0xff]
    %v61 = vld [vmem:[%s0 + $0x168] sm:$0xff]
    %v62 = vld [vmem:[%s0 + $0x170] sm:$0xff]
    %v63 = vld [vmem:[%s0 + $0x178] sm:$0xff]
    %v64 = vld [vmem:[%s0 + $0x180] sm:$0xff]
    %v65 = vld [vmem:[%s0 + $0x188] sm:$0xff]
    %v66 = vld [vmem:[%s0 + $0x190] sm:$0xff]
    %v67 = vld [vmem:[%s0 + $0x198] sm:$0xff]
    %v68 = vld [vmem:[%s0 + $0x1a0] sm:$0xff]
    %v69 = vld [vmem:[%s0 + $0x1a8] sm:$0xff]
    %v70 = vld [vmem:[%s0 + $0x1b0] sm:$0xff]
    %v71 = vld [vmem:[%s0 + $0x1b8] sm:$0xff]
    %v72 = vld [vmem:[%s0 + $0x1c0] sm:$0xff]
    %v73 = vld [vmem:[%s0 + $0x1c8] sm:$0xff]
    %v74 = vld [vmem:[%s0 + $0x1d0] sm:$0xff]
    %v75 = vld [vmem:[%s0 + $0x1d8] sm:$0xff]
    %v76 = vld [vmem:[%s0 + $0x1e0] sm:$0xff]
    %v77 = vld [vmem:[%s0 + $0x1e8] sm:$0xff]
    %v78 = vld [vmem:[%s0 + $0x1f0] sm:$0xff]
    %v79 = vld [vmem:[%s0 + $0x1f8] sm:$0xff]
    %v80 = vpack.c.bf16 %v17, %v16
    %v81 = vpack.c.bf16 %v19, %v18
    %v82 = vpack.c.bf16 %v21, %v20
    %v83 = vpack.c.bf16 %v23, %v22
    %v84 = vpack.c.bf16 %v25, %v24
    %v85 = vpack.c.bf16 %v27, %v26
    %v86 = vpack.c.bf16 %v29, %v28
    %v87 = vpack.c.bf16 %v31, %v30
    %v88 = vpack.c.bf16 %v33, %v32
    %v89 = vpack.c.bf16 %v35, %v34
    %v90 = vpack.c.bf16 %v37, %v36
    %v91 = vpack.c.bf16 %v39, %v38
    %v92 = vpack.c.bf16 %v41, %v40
    %v93 = vpack.c.bf16 %v43, %v42
    %v94 = vpack.c.bf16 %v45, %v44
    %v95 = vpack.c.bf16 %v47, %v46
    %v96 = vpack.c.bf16 %v49, %v48
    %v97 = vpack.c.bf16 %v51, %v50
    %v98 = vpack.c.bf16 %v53, %v52
    %v99 = vpack.c.bf16 %v55, %v54
    %v100 = vpack.c.bf16 %v57, %v56
    %v101 = vpack.c.bf16 %v59, %v58
    %v102 = vpack.c.bf16 %v61, %v60
    %v103 = vpack.c.bf16 %v63, %v62
    %v104 = vpack.c.bf16 %v65, %v64
    %v105 = vpack.c.bf16 %v67, %v66
    %v106 = vpack.c.bf16 %v69, %v68
    %v107 = vpack.c.bf16 %v71, %v70
    %v108 = vpack.c.bf16 %v73, %v72
    %v109 = vpack.c.bf16 %v75, %v74
    %v110 = vpack.c.bf16 %v77, %v76
    %v111 = vpack.c.bf16 %v79, %v78
    %v112 = vld [vmem:[%s1] sm:$0xf]
    %v113 = vld [vmem:[%s1 + $0x4] sm:$0xf]
    %v114 = vld [vmem:[%s1 + $0x8] sm:$0xf]
    %v115 = vld [vmem:[%s1 + $0xc] sm:$0xf]
    %v116 = vld [vmem:[%s1 + $0x10] sm:$0xf]
    %v117 = vld [vmem:[%s1 + $0x14] sm:$0xf]
    %v118 = vld [vmem:[%s1 + $0x18] sm:$0xf]
    %v119 = vld [vmem:[%s1 + $0x1c] sm:$0xf]
    %v120 = vld [vmem:[%s1 + $0x20] sm:$0xf]
    %v121 = vld [vmem:[%s1 + $0x24] sm:$0xf]
    %v122 = vld [vmem:[%s1 + $0x28] sm:$0xf]
    %v123 = vld [vmem:[%s1 + $0x2c] sm:$0xf]
    %v124 = vld [vmem:[%s1 + $0x30] sm:$0xf]
    %v125 = vld [vmem:[%s1 + $0x34] sm:$0xf]
    %v126 = vld [vmem:[%s1 + $0x38] sm:$0xf]
    %v127 = vld [vmem:[%s1 + $0x3c] sm:$0xf]
    %v128 = vld [vmem:[%s2] sm:$0x1]
    %v130 = vlaneseq
    %v131 = vshrl.u32 %v130, 7
    %v132 = vsub.s32 0, %v131
    %v133 = vrot.slane %v128, %v132
    %v151 = vunpack.c.l.b16 %v112
    %v152 = vunpack.c.l.b16 %v113
    %v153 = vunpack.c.l.b16 %v114
    %v154 = vunpack.c.l.b16 %v115
    %v155 = vunpack.c.l.b16 %v116
    %v156 = vunpack.c.l.b16 %v117
    %v157 = vunpack.c.l.b16 %v118
    %v158 = vunpack.c.l.b16 %v119
    %v159 = vunpack.c.l.b16 %v120
    %v160 = vunpack.c.l.b16 %v121
    %v161 = vunpack.c.l.b16 %v122
    %v162 = vunpack.c.l.b16 %v123
    %v163 = vunpack.c.l.b16 %v124
    %v164 = vunpack.c.l.b16 %v125
    %v165 = vunpack.c.l.b16 %v126
    %v166 = vunpack.c.l.b16 %v127
    %v167 = vpack.c.b16 %v152, %v151
    %v168 = vpack.c.b16 %v154, %v153
    %v169 = vpack.c.b16 %v156, %v155
    %v170 = vpack.c.b16 %v158, %v157
    %v171 = vpack.c.b16 %v160, %v159
    %v172 = vpack.c.b16 %v162, %v161
    %v173 = vpack.c.b16 %v164, %v163
    %v174 = vpack.c.b16 %v166, %v165
    %183 = vmatprep.subr.bf16.mxu0 0
    %184 = vmatpush1.bf16.msra.mxu0 %v167
    %185 = vmatprep.subr.bf16.mxu0 0
    %186 = vmatpush1.bf16.msra.mxu0 %v168
    %187 = vmatprep.subr.bf16.mxu0 0
    %188 = vmatpush1.bf16.msra.mxu0 %v169
    %189 = vmatprep.subr.bf16.mxu0 0
    %190 = vmatpush1.bf16.msra.mxu0 %v170
    %191 = vmatprep.subr.bf16.mxu0 0
    %192 = vmatpush1.bf16.msra.mxu0 %v171
    %193 = vmatprep.subr.bf16.mxu0 0
    %194 = vmatpush1.bf16.msra.mxu0 %v172
    %195 = vmatprep.subr.bf16.mxu0 0
    %196 = vmatpush1.bf16.msra.mxu0 %v173
    %197 = vmatprep.subr.bf16.mxu0 0
    %198 = vmatpush1.bf16.msra.mxu0 %v174
    %199 = vmatprep.subr.bf16.mxu0 0
    %200 = vmatpush1.bf16.msra.mxu0 0
    %201 = vmatprep.subr.bf16.mxu0 0
    %202 = vmatpush1.bf16.msra.mxu0 0
    %203 = vmatprep.subr.bf16.mxu0 0
    %204 = vmatpush1.bf16.msra.mxu0 0
    %205 = vmatprep.subr.bf16.mxu0 0
    %206 = vmatpush1.bf16.msra.mxu0 0
    %207 = vmatprep.subr.bf16.mxu0 0
    %208 = vmatpush1.bf16.msra.mxu0 0
    %209 = vmatprep.subr.bf16.mxu0 0
    %210 = vmatpush1.bf16.msra.mxu0 0
    %211 = vmatprep.subr.bf16.mxu0 0
    %212 = vmatpush1.bf16.msra.mxu0 0
    %213 = vmatprep.subr.bf16.mxu0 0
    %214 = vmatpush1.bf16.msra.mxu0 0
    %215 = vmatprep.mubr.bf16.mxu0 0
    %216 = vmatmul.mubr.bf16.gmra.mrb[0].mxu0 %v80
    %v217 = vpop.f32.mrb[0].mxu0
    %v218 = vadd.f32 %v133, %v217
    %v219 = vpop.f32.mrb[0].mxu0
    %v220 = vpop.f32.mrb[0].mxu0
    %v221 = vadd.f32 %v133, %v220
    %v222 = vpop.f32.mrb[0].mxu0
    %223 = vmatprep.mubr.bf16.mxu0 0
    %224 = vmatmul.mubr.bf16.gmra.mrb[0].mxu0 %v81
    %v225 = vpop.f32.mrb[0].mxu0
    %v226 = vadd.f32 %v133, %v225
    %v227 = vpop.f32.mrb[0].mxu0
    %v228 = vpop.f32.mrb[0].mxu0
    %v229 = vadd.f32 %v133, %v228
    %v230 = vpop.f32.mrb[0].mxu0
    %231 = vmatprep.mubr.bf16.mxu0 0
    %232 = vmatmul.mubr.bf16.gmra.mrb[0].mxu0 %v82
    %v233 = vpop.f32.mrb[0].mxu0
    %v234 = vadd.f32 %v133, %v233
    %v235 = vpop.f32.mrb[0].mxu0
    %v236 = vpop.f32.mrb[0].mxu0
    %v237 = vadd.f32 %v133, %v236
    %v238 = vpop.f32.mrb[0].mxu0
    %239 = vmatprep.mubr.bf16.mxu0 0
    %240 = vmatmul.mubr.bf16.gmra.mrb[0].mxu0 %v83
    %v241 = vpop.f32.mrb[0].mxu0
    %v242 = vadd.f32 %v133, %v241
    %v243 = vpop.f32.mrb[0].mxu0
    %v244 = vpop.f32.mrb[0].mxu0
    %v245 = vadd.f32 %v133, %v244
    %v246 = vpop.f32.mrb[0].mxu0
    %247 = vmatprep.mubr.bf16.mxu0 0
    %248 = vmatmul.mubr.bf16.gmra.mrb[0].mxu0 %v84
    %v249 = vpop.f32.mrb[0].mxu0
    %v250 = vadd.f32 %v133, %v249
    %v251 = vpop.f32.mrb[0].mxu0
    %v252 = vpop.f32.mrb[0].mxu0
    %v253 = vadd.f32 %v133, %v252
    %v254 = vpop.f32.mrb[0].mxu0
    %255 = vmatprep.mubr.bf16.mxu0 0
    %256 = vmatmul.mubr.bf16.gmra.mrb[0].mxu0 %v85
    %v257 = vpop.f32.mrb[0].mxu0
    %v258 = vadd.f32 %v133, %v257
    %v259 = vpop.f32.mrb[0].mxu0
    %v260 = vpop.f32.mrb[0].mxu0
    %v261 = vadd.f32 %v133, %v260
    %v262 = vpop.f32.mrb[0].mxu0
    %263 = vmatprep.mubr.bf16.mxu0 0
    %264 = vmatmul.mubr.bf16.gmra.mrb[0].mxu0 %v86
    %v265 = vpop.f32.mrb[0].mxu0
    %v266 = vadd.f32 %v133, %v265
    %v267 = vpop.f32.mrb[0].mxu0
    %v268 = vpop.f32.mrb[0].mxu0
    %v269 = vadd.f32 %v133, %v268
    %v270 = vpop.f32.mrb[0].mxu0
    %271 = vmatprep.mubr.bf16.mxu0 0
    %272 = vmatmul.mubr.bf16.gmra.mrb[0].mxu0 %v87
    %v273 = vpop.f32.mrb[0].mxu0
    %v274 = vadd.f32 %v133, %v273
    %v275 = vpop.f32.mrb[0].mxu0
    %v276 = vpop.f32.mrb[0].mxu0
    %v277 = vadd.f32 %v133, %v276
    %v278 = vpop.f32.mrb[0].mxu0
    %279 = vmatprep.mubr.bf16.mxu0 0
    %280 = vmatmul.mubr.bf16.gmra.mrb[0].mxu0 %v88
    %v281 = vpop.f32.mrb[0].mxu0
    %v282 = vadd.f32 %v133, %v281
    %v283 = vpop.f32.mrb[0].mxu0
    %v284 = vpop.f32.mrb[0].mxu0
    %v285 = vadd.f32 %v133, %v284
    %v286 = vpop.f32.mrb[0].mxu0
    %287 = vmatprep.mubr.bf16.mxu0 0
    %288 = vmatmul.mubr.bf16.gmra.mrb[0].mxu0 %v89
    %v289 = vpop.f32.mrb[0].mxu0
    %v290 = vadd.f32 %v133, %v289
    %v291 = vpop.f32.mrb[0].mxu0
    %v292 = vpop.f32.mrb[0].mxu0
    %v293 = vadd.f32 %v133, %v292
    %v294 = vpop.f32.mrb[0].mxu0
    %295 = vmatprep.mubr.bf16.mxu0 0
    %296 = vmatmul.mubr.bf16.gmra.mrb[0].mxu0 %v90
    %v297 = vpop.f32.mrb[0].mxu0
    %v298 = vadd.f32 %v133, %v297
    %v299 = vpop.f32.mrb[0].mxu0
    %v300 = vpop.f32.mrb[0].mxu0
    %v301 = vadd.f32 %v133, %v300
    %v302 = vpop.f32.mrb[0].mxu0
    %303 = vmatprep.mubr.bf16.mxu0 0
    %304 = vmatmul.mubr.bf16.gmra.mrb[0].mxu0 %v91
    %v305 = vpop.f32.mrb[0].mxu0
    %v306 = vadd.f32 %v133, %v305
    %v307 = vpop.f32.mrb[0].mxu0
    %v308 = vpop.f32.mrb[0].mxu0
    %v309 = vadd.f32 %v133, %v308
    %v310 = vpop.f32.mrb[0].mxu0
    %311 = vmatprep.mubr.bf16.mxu0 0
    %312 = vmatmul.mubr.bf16.gmra.mrb[0].mxu0 %v92
    %v313 = vpop.f32.mrb[0].mxu0
    %v314 = vadd.f32 %v133, %v313
    %v315 = vpop.f32.mrb[0].mxu0
    %v316 = vpop.f32.mrb[0].mxu0
    %v317 = vadd.f32 %v133, %v316
    %v318 = vpop.f32.mrb[0].mxu0
    %319 = vmatprep.mubr.bf16.mxu0 0
    %320 = vmatmul.mubr.bf16.gmra.mrb[0].mxu0 %v93
    %v321 = vpop.f32.mrb[0].mxu0
    %v322 = vadd.f32 %v133, %v321
    %v323 = vpop.f32.mrb[0].mxu0
    %v324 = vpop.f32.mrb[0].mxu0
    %v325 = vadd.f32 %v133, %v324
    %v326 = vpop.f32.mrb[0].mxu0
    %327 = vmatprep.mubr.bf16.mxu0 0
    %328 = vmatmul.mubr.bf16.gmra.mrb[0].mxu0 %v94
    %v329 = vpop.f32.mrb[0].mxu0
    %v330 = vadd.f32 %v133, %v329
    %v331 = vpop.f32.mrb[0].mxu0
    %v332 = vpop.f32.mrb[0].mxu0
    %v333 = vadd.f32 %v133, %v332
    %v334 = vpop.f32.mrb[0].mxu0
    %335 = vmatprep.mubr.bf16.mxu0 0
    %336 = vmatmul.mubr.bf16.gmra.mrb[0].mxu0 %v95
    %v337 = vpop.f32.mrb[0].mxu0
    %v338 = vadd.f32 %v133, %v337
    %v339 = vpop.f32.mrb[0].mxu0
    %v340 = vpop.f32.mrb[0].mxu0
    %v341 = vadd.f32 %v133, %v340
    %v342 = vpop.f32.mrb[0].mxu0
    %343 = vmatprep.mubr.bf16.mxu0 0
    %344 = vmatmul.mubr.bf16.gmra.mrb[0].mxu0 %v96
    %v345 = vpop.f32.mrb[0].mxu0
    %v346 = vadd.f32 %v133, %v345
    %v347 = vpop.f32.mrb[0].mxu0
    %v348 = vpop.f32.mrb[0].mxu0
    %v349 = vadd.f32 %v133, %v348
    %v350 = vpop.f32.mrb[0].mxu0
    %351 = vmatprep.mubr.bf16.mxu0 0
    %352 = vmatmul.mubr.bf16.gmra.mrb[0].mxu0 %v97
    %v353 = vpop.f32.mrb[0].mxu0
    %v354 = vadd.f32 %v133, %v353
    %v355 = vpop.f32.mrb[0].mxu0
    %v356 = vpop.f32.mrb[0].mxu0
    %v357 = vadd.f32 %v133, %v356
    %v358 = vpop.f32.mrb[0].mxu0
    %359 = vmatprep.mubr.bf16.mxu0 0
    %360 = vmatmul.mubr.bf16.gmra.mrb[0].mxu0 %v98
    %v361 = vpop.f32.mrb[0].mxu0
    %v362 = vadd.f32 %v133, %v361
    %v363 = vpop.f32.mrb[0].mxu0
    %v364 = vpop.f32.mrb[0].mxu0
    %v365 = vadd.f32 %v133, %v364
    %v366 = vpop.f32.mrb[0].mxu0
    %367 = vmatprep.mubr.bf16.mxu0 0
    %368 = vmatmul.mubr.bf16.gmra.mrb[0].mxu0 %v99
    %v369 = vpop.f32.mrb[0].mxu0
    %v370 = vadd.f32 %v133, %v369
    %v371 = vpop.f32.mrb[0].mxu0
    %v372 = vpop.f32.mrb[0].mxu0
    %v373 = vadd.f32 %v133, %v372
    %v374 = vpop.f32.mrb[0].mxu0
    %375 = vmatprep.mubr.bf16.mxu0 0
    %376 = vmatmul.mubr.bf16.gmra.mrb[0].mxu0 %v100
    %v377 = vpop.f32.mrb[0].mxu0
    %v378 = vadd.f32 %v133, %v377
    %v379 = vpop.f32.mrb[0].mxu0
    %v380 = vpop.f32.mrb[0].mxu0
    %v381 = vadd.f32 %v133, %v380
    %v382 = vpop.f32.mrb[0].mxu0
    %383 = vmatprep.mubr.bf16.mxu0 0
    %384 = vmatmul.mubr.bf16.gmra.mrb[0].mxu0 %v101
    %v385 = vpop.f32.mrb[0].mxu0
    %v386 = vadd.f32 %v133, %v385
    %v387 = vpop.f32.mrb[0].mxu0
    %v388 = vpop.f32.mrb[0].mxu0
    %v389 = vadd.f32 %v133, %v388
    %v390 = vpop.f32.mrb[0].mxu0
    %391 = vmatprep.mubr.bf16.mxu0 0
    %392 = vmatmul.mubr.bf16.gmra.mrb[0].mxu0 %v102
    %v393 = vpop.f32.mrb[0].mxu0
    %v394 = vadd.f32 %v133, %v393
    %v395 = vpop.f32.mrb[0].mxu0
    %v396 = vpop.f32.mrb[0].mxu0
    %v397 = vadd.f32 %v133, %v396
    %v398 = vpop.f32.mrb[0].mxu0
    %399 = vmatprep.mubr.bf16.mxu0 0
    %400 = vmatmul.mubr.bf16.gmra.mrb[0].mxu0 %v103
    %v401 = vpop.f32.mrb[0].mxu0
    %v402 = vadd.f32 %v133, %v401
    %v403 = vpop.f32.mrb[0].mxu0
    %v404 = vpop.f32.mrb[0].mxu0
    %v405 = vadd.f32 %v133, %v404
    %v406 = vpop.f32.mrb[0].mxu0
    %407 = vmatprep.mubr.bf16.mxu0 0
    %408 = vmatmul.mubr.bf16.gmra.mrb[0].mxu0 %v104
    %v409 = vpop.f32.mrb[0].mxu0
    %v410 = vadd.f32 %v133, %v409
    %v411 = vpop.f32.mrb[0].mxu0
    %v412 = vpop.f32.mrb[0].mxu0
    %v413 = vadd.f32 %v133, %v412
    %v414 = vpop.f32.mrb[0].mxu0
    %415 = vmatprep.mubr.bf16.mxu0 0
    %416 = vmatmul.mubr.bf16.gmra.mrb[0].mxu0 %v105
    %v417 = vpop.f32.mrb[0].mxu0
    %v418 = vadd.f32 %v133, %v417
    %v419 = vpop.f32.mrb[0].mxu0
    %v420 = vpop.f32.mrb[0].mxu0
    %v421 = vadd.f32 %v133, %v420
    %v422 = vpop.f32.mrb[0].mxu0
    %423 = vmatprep.mubr.bf16.mxu0 0
    %424 = vmatmul.mubr.bf16.gmra.mrb[0].mxu0 %v106
    %v425 = vpop.f32.mrb[0].mxu0
    %v426 = vadd.f32 %v133, %v425
    %v427 = vpop.f32.mrb[0].mxu0
    %v428 = vpop.f32.mrb[0].mxu0
    %v429 = vadd.f32 %v133, %v428
    %v430 = vpop.f32.mrb[0].mxu0
    %431 = vmatprep.mubr.bf16.mxu0 0
    %432 = vmatmul.mubr.bf16.gmra.mrb[0].mxu0 %v107
    %v433 = vpop.f32.mrb[0].mxu0
    %v434 = vadd.f32 %v133, %v433
    %v435 = vpop.f32.mrb[0].mxu0
    %v436 = vpop.f32.mrb[0].mxu0
    %v437 = vadd.f32 %v133, %v436
    %v438 = vpop.f32.mrb[0].mxu0
    %439 = vmatprep.mubr.bf16.mxu0 0
    %440 = vmatmul.mubr.bf16.gmra.mrb[0].mxu0 %v108
    %v441 = vpop.f32.mrb[0].mxu0
    %v442 = vadd.f32 %v133, %v441
    %v443 = vpop.f32.mrb[0].mxu0
    %v444 = vpop.f32.mrb[0].mxu0
    %v445 = vadd.f32 %v133, %v444
    %v446 = vpop.f32.mrb[0].mxu0
    %447 = vmatprep.mubr.bf16.mxu0 0
    %448 = vmatmul.mubr.bf16.gmra.mrb[0].mxu0 %v109
    %v449 = vpop.f32.mrb[0].mxu0
    %v450 = vadd.f32 %v133, %v449
    %v451 = vpop.f32.mrb[0].mxu0
    %v452 = vpop.f32.mrb[0].mxu0
    %v453 = vadd.f32 %v133, %v452
    %v454 = vpop.f32.mrb[0].mxu0
    %455 = vmatprep.mubr.bf16.mxu0 0
    %456 = vmatmul.mubr.bf16.gmra.mrb[0].mxu0 %v110
    %v457 = vpop.f32.mrb[0].mxu0
    %v458 = vadd.f32 %v133, %v457
    %v459 = vpop.f32.mrb[0].mxu0
    %v460 = vpop.f32.mrb[0].mxu0
    %v461 = vadd.f32 %v133, %v460
    %v462 = vpop.f32.mrb[0].mxu0
    %463 = vmatprep.mubr.bf16.mxu0 0
    %464 = vmatmul.mubr.bf16.gmra.mrb[0].mxu0 %v111
    %v465 = vpop.f32.mrb[0].mxu0
    %v466 = vadd.f32 %v133, %v465
    %v467 = vpop.f32.mrb[0].mxu0
    %v468 = vpop.f32.mrb[0].mxu0
    %v469 = vadd.f32 %v133, %v468
    %v470 = vpop.f32.mrb[0].mxu0
    %471 = vdwg.mxu0
    %472 = vst [vmem:[#allocation2] sm:$0xff] %v218
    %473 = vst [vmem:[#allocation2 + $0x8] sm:$0xff] %v221
    %474 = vst [vmem:[#allocation2 + $0x10] sm:$0xff] %v226
    %475 = vst [vmem:[#allocation2 + $0x18] sm:$0xff] %v229
    %476 = vst [vmem:[#allocation2 + $0x20] sm:$0xff] %v234
    %477 = vst [vmem:[#allocation2 + $0x28] sm:$0xff] %v237
    %478 = vst [vmem:[#allocation2 + $0x30] sm:$0xff] %v242
    %479 = vst [vmem:[#allocation2 + $0x38] sm:$0xff] %v245
    %480 = vst [vmem:[#allocation2 + $0x40] sm:$0xff] %v250
    %481 = vst [vmem:[#allocation2 + $0x48] sm:$0xff] %v253
    %482 = vst [vmem:[#allocation2 + $0x50] sm:$0xff] %v258
    %483 = vst [vmem:[#allocation2 + $0x58] sm:$0xff] %v261
    %484 = vst [vmem:[#allocation2 + $0x60] sm:$0xff] %v266
    %485 = vst [vmem:[#allocation2 + $0x68] sm:$0xff] %v269
    %486 = vst [vmem:[#allocation2 + $0x70] sm:$0xff] %v274
    %487 = vst [vmem:[#allocation2 + $0x78] sm:$0xff] %v277
    %488 = vst [vmem:[#allocation2 + $0x80] sm:$0xff] %v282
    %489 = vst [vmem:[#allocation2 + $0x88] sm:$0xff] %v285
    %490 = vst [vmem:[#allocation2 + $0x90] sm:$0xff] %v290
    %491 = vst [vmem:[#allocation2 + $0x98] sm:$0xff] %v293
    %492 = vst [vmem:[#allocation2 + $0xa0] sm:$0xff] %v298
    %493 = vst [vmem:[#allocation2 + $0xa8] sm:$0xff] %v301
    %494 = vst [vmem:[#allocation2 + $0xb0] sm:$0xff] %v306
    %495 = vst [vmem:[#allocation2 + $0xb8] sm:$0xff] %v309
    %496 = vst [vmem:[#allocation2 + $0xc0] sm:$0xff] %v314
    %497 = vst [vmem:[#allocation2 + $0xc8] sm:$0xff] %v317
    %498 = vst [vmem:[#allocation2 + $0xd0] sm:$0xff] %v322
    %499 = vst [vmem:[#allocation2 + $0xd8] sm:$0xff] %v325
    %500 = vst [vmem:[#allocation2 + $0xe0] sm:$0xff] %v330
    %501 = vst [vmem:[#allocation2 + $0xe8] sm:$0xff] %v333
    %502 = vst [vmem:[#allocation2 + $0xf0] sm:$0xff] %v338
    %503 = vst [vmem:[#allocation2 + $0xf8] sm:$0xff] %v341
    %504 = vst [vmem:[#allocation2 + $0x100] sm:$0xff] %v346
    %505 = vst [vmem:[#allocation2 + $0x108] sm:$0xff] %v349
    %506 = vst [vmem:[#allocation2 + $0x110] sm:$0xff] %v354
    %507 = vst [vmem:[#allocation2 + $0x118] sm:$0xff] %v357
    %508 = vst [vmem:[#allocation2 + $0x120] sm:$0xff] %v362
    %509 = vst [vmem:[#allocation2 + $0x128] sm:$0xff] %v365
    %510 = vst [vmem:[#allocation2 + $0x130] sm:$0xff] %v370
    %511 = vst [vmem:[#allocation2 + $0x138] sm:$0xff] %v373
    %512 = vst [vmem:[#allocation2 + $0x140] sm:$0xff] %v378
    %513 = vst [vmem:[#allocation2 + $0x148] sm:$0xff] %v381
    %514 = vst [vmem:[#allocation2 + $0x150] sm:$0xff] %v386
    %515 = vst [vmem:[#allocation2 + $0x158] sm:$0xff] %v389
    %516 = vst [vmem:[#allocation2 + $0x160] sm:$0xff] %v394
    %517 = vst [vmem:[#allocation2 + $0x168] sm:$0xff] %v397
    %518 = vst [vmem:[#allocation2 + $0x170] sm:$0xff] %v402
    %519 = vst [vmem:[#allocation2 + $0x178] sm:$0xff] %v405
    %520 = vst [vmem:[#allocation2 + $0x180] sm:$0xff] %v410
    %521 = vst [vmem:[#allocation2 + $0x188] sm:$0xff] %v413
    %522 = vst [vmem:[#allocation2 + $0x190] sm:$0xff] %v418
    %523 = vst [vmem:[#allocation2 + $0x198] sm:$0xff] %v421
    %524 = vst [vmem:[#allocation2 + $0x1a0] sm:$0xff] %v426
    %525 = vst [vmem:[#allocation2 + $0x1a8] sm:$0xff] %v429
    %526 = vst [vmem:[#allocation2 + $0x1b0] sm:$0xff] %v434
    %527 = vst [vmem:[#allocation2 + $0x1b8] sm:$0xff] %v437
    %528 = vst [vmem:[#allocation2 + $0x1c0] sm:$0xff] %v442
    %529 = vst [vmem:[#allocation2 + $0x1c8] sm:$0xff] %v445
    %530 = vst [vmem:[#allocation2 + $0x1d0] sm:$0xff] %v450
    %531 = vst [vmem:[#allocation2 + $0x1d8] sm:$0xff] %v453
    %532 = vst [vmem:[#allocation2 + $0x1e0] sm:$0xff] %v458
    %533 = vst [vmem:[#allocation2 + $0x1e8] sm:$0xff] %v461
    %534 = vst [vmem:[#allocation2 + $0x1f0] sm:$0xff] %v466
    %535 = vst [vmem:[#allocation2 + $0x1f8] sm:$0xff] %v469
    // Predicated region
    $region14: #{attention_forward.7} parent=1 // pred_check
      _
    $region15: #{attention_forward.7} parent=1 // pred_check_branch
      %537 = sbr.rel (0) target = $region17
    $region16: #{attention_forward.7} parent=1 // pred_region
      %s539 = ssub.s32 8192, 8192
      %540 = vsyncadd [#allocation3], %s539
      %s541 = sshll.u32 [#allocation2], 4
      %s542 = int_to_ptr.vmem [resolvable:$true] %s541
      %547 = dma.vmem_to_hbm [thread:$0]  %s542, 8192, %s3, [#allocation3], 128, 128, 8
    $region17: #{attention_forward.7} parent=1 // pred_fallthru
      _
    // Predicated region
    $region18: #{attention_forward.7} parent=1 // pred_check
      _
    $region19: #{attention_forward.7} parent=1 // pred_check_branch
      %549 = sbr.rel (0) target = $region21
    $region20: #{attention_forward.7} parent=1 // pred_region
      %550 = dma.done [#allocation3], 8192
    $region21: #{attention_forward.7} parent=1 // pred_fallthru
      _
    %551 = vsyncpa [#allocation3], 1

</llo_original>
